<compile_context>
chip_gen: v7x
topology: tpu7x:2x2x1
jax: 0.10.0
libtpu: 0.0.40
codegen_flags: <defaults>
</compile_context>

<pallas_src>
import numpy as np
import jax
import jax.numpy as jnp
from jax.experimental import pallas as pl
from jax.experimental.pallas import tpu as pltpu

_LN_EPS = 1e-6
_SQRT1_2 = 0.7071067811865476


def _default_vmem_limit():
    """Generation-aware scoped-VMEM budget: ~3/4 of physical VMEM, capped at 100 MiB
    (≈96 MiB on v5e/v6e's 128 MiB, 48 MiB on v7x's 64 MiB)."""
    try:
        phys = pltpu.get_tpu_info().vmem_capacity_bytes
    except Exception:
        phys = 64 * 1024 * 1024
    return int(min(phys * 3 // 4, 100 * 1024 * 1024))


# --------------------------------------------------------------------------
# In-kernel math helpers (VPU/EUP/XLU ops with guaranteed Mosaic lowering)
# --------------------------------------------------------------------------
def _erf(x):
    # Abramowitz & Stegun 7.1.26 (|err| <= 1.5e-7).  The divide is pushed to
    # the EUP (approx reciprocal) with one Newton step so the VALU only sees
    # cheap fused mul/adds.
    a1, a2, a3, a4, a5 = (0.254829592, -0.284496736, 1.421413741,
                          -1.453152027, 1.061405429)
    p = 0.3275911
    sgn = jnp.where(x < 0.0, -1.0, 1.0)
    ax = jnp.abs(x)
    den = 1.0 + p * ax
    r = pl.reciprocal(den, approx=True)
    t = r * (2.0 - den * r)                       # one NR step -> ~f32 accurate
    poly = ((((a5 * t + a4) * t + a3) * t + a2) * t + a1) * t
    return sgn * (1.0 - poly * jnp.exp(-ax * ax))


def _gelu(x):
    # Exact (erf-based) GELU, matching torch.nn.GELU() default.
    return 0.5 * x * (1.0 + _erf(x * _SQRT1_2))


def _layernorm_lastdim(v, gamma, beta):
    # LayerNorm2d == per-pixel layernorm over channels (channels last here).
    mu = jnp.mean(v, axis=-1, keepdims=True)
    d = v - mu
    var = jnp.mean(d * d, axis=-1, keepdims=True)
    return d * jax.lax.rsqrt(var + _LN_EPS) * gamma + beta


def _dwconv3x3(twin, w_ref):
    """3x3 depthwise conv (cross-correlation), zero padded.
    twin: (TM+2, W, C2) f32 values -- vertical halo rows already included.
    w_ref: (9, C2) ref, row index kh*3+kw.  Horizontal zero padding is a zero
    column + value shifts (no padded scratch, no full-buffer zeroing)."""
    tm2, ww, c2 = twin.shape
    tm = tm2 - 2
    zcol = jnp.zeros((tm, 1, c2), jnp.float32)
    acc = jnp.zeros((tm, ww, c2), jnp.float32)
    for kh in range(3):
        rows = twin[kh:kh + tm]                                   # (TM, W, C2)
        wk = w_ref[3 * kh:3 * kh + 3, :].astype(jnp.float32)      # (3, C2)
        left = jnp.concatenate([zcol, rows[:, :ww - 1, :]], axis=1)
        right = jnp.concatenate([rows[:, 1:, :], zcol], axis=1)
        acc = acc + left * wk[0:1] + rows * wk[1:2] + right * wk[2:3]
    return acc


# --------------------------------------------------------------------------
# Fused kernel
# --------------------------------------------------------------------------
def _nafblock_kernel(x_ref, emb_ref,
                     gn_ref, bn_ref, wex_ref, ge_ref, be_ref,
                     wdw_ref, gd_ref, bd_ref,
                     wp_ref, gp_ref, bp_ref,
                     gf_ref, bf_ref,
                     w1a_ref, b1a_ref, w1b_ref, b1b_ref,
                     w2_ref, b2_ref,
                     y_ref,
                     t_prev, h_prev):
    """Fully fused NAFBlock.  Grid = (B, nH+1); the row axis runs one tile
    ahead of the output: step i computes emb-add/LN/expand for row-tile i and
    finishes (dwconv + project + FFN) row-tile i-1 using the VMEM-carried
    t / h of the previous step.  Only x is read from and y written to HBM."""
    i = pl.program_id(1)
    n_last = pl.num_programs(1) - 1                 # == number of real row tiles
    _, tm, w, c = x_ref.shape
    c2 = wex_ref.shape[1]
    p = tm * w
    f32 = jnp.float32
    wdt = wex_ref.dtype                             # native MXU operand dtype

    # ---- stage 1: emb-add + LN + expand (1x1 matmul) + LN + GELU ------------
    # (at i == n_last the x block is a clamped re-read of the last tile; its
    #  result is only used as a bottom halo which gets masked to zero below)
    xv = x_ref[0].astype(f32).reshape(p, c)
    hv = xv + emb_ref[0].astype(f32)                                 # (P, C)
    nv = _layernorm_lastdim(hv, gn_ref[...].astype(f32), bn_ref[...].astype(f32))
    tv = jnp.dot(nv.astype(wdt), wex_ref[...], preferred_element_type=f32)
    tv = _gelu(_layernorm_lastdim(tv, ge_ref[...].astype(f32),
                                  be_ref[...].astype(f32)))          # (P, 2C)
    h_cur = hv.reshape(tm, w, c)
    t_cur = tv.reshape(tm, w, c2)

    # Bottom halo row for the PREVIOUS tile: first row of this tile's t, or
    # zeros at the bottom image edge (i == n_last is the flush step).
    bot = t_cur[0:1].astype(t_prev.dtype)
    t_prev[tm + 1:tm + 2] = jnp.where(i == n_last, jnp.zeros_like(bot), bot)

    # ---- stages 2+3 for the previous row tile (carried entirely in VMEM) -----
    @pl.when(i > 0)
    def _():
        twin = t_prev[...].astype(f32)              # (TM+2, W, C2): halo + tile + halo
        d = _dwconv3x3(twin, wdw_ref).reshape(p, c2)
        d = _gelu(_layernorm_lastdim(d, gd_ref[...].astype(f32),
                                     bd_ref[...].astype(f32)))
        proj = jnp.dot(d.astype(wdt), wp_ref[...], preferred_element_type=f32)
        proj = _layernorm_lastdim(proj, gp_ref[...].astype(f32),
                                  bp_ref[...].astype(f32))
        h2 = proj + h_prev[...].astype(f32).reshape(p, c)            # MBConv residual

        fv = _layernorm_lastdim(h2, gf_ref[...].astype(f32),
                                bf_ref[...].astype(f32))
        fd = fv.astype(wdt)
        # SimpleGate: ffn_conv1 pre-split into the two halves so the gate needs
        # no unaligned lane slice (merge into one N=2C matmul when C % 128 == 0).
        g1 = jnp.dot(fd, w1a_ref[...], preferred_element_type=f32) \
            + b1a_ref[...].astype(f32)
        g2 = jnp.dot(fd, w1b_ref[...], preferred_element_type=f32) \
            + b1b_ref[...].astype(f32)
        gate = g1 * g2
        yv = jnp.dot(gate.astype(wdt), w2_ref[...], preferred_element_type=f32) \
            + b2_ref[...].astype(f32)
        yv = yv + h2                                                 # FFN residual
        y_ref[0] = yv.reshape(tm, w, c).astype(y_ref.dtype)

    # ---- carry update: this tile's t / h become "previous" next step ---------
    old_last = t_prev[tm:tm + 1]                    # last row of tile i-1 (pre-update)
    t_prev[0:1] = jnp.where(i == 0, jnp.zeros_like(old_last), old_last)
    t_prev[1:tm + 1] = t_cur.astype(t_prev.dtype)
    h_prev[...] = h_cur.astype(h_prev.dtype)


# --------------------------------------------------------------------------
# Wrappers
# --------------------------------------------------------------------------
def _choose_row_tile(h, w, c, vmem_limit_bytes):
    # Per-row f32 accounting: pipelined x in + y out, carried t/h scratch and
    # the fused body's live f32 temporaries (~a dozen C / 2C wide values).
    bytes_per_row = max(1, w * c * 4 * 24)
    cap = max(1, int(vmem_limit_bytes * 0.5) // bytes_per_row)
    cap = min(cap, h)
    tm = 1
    for d in range(1, cap + 1):        # largest divisor of H that fits the budget
        if h % d == 0:
            tm = d
    return tm


def naf_block_forward_nhwc(x_nhwc, emb, params, *, row_tile=None,
                           vmem_limit_bytes=None):
    """Fused NAFBlock forward on NHWC activations.  Preferred entry point: keep
    the whole UNet NHWC and call this directly (no per-block transposes)."""
    b, h, w, c = x_nhwc.shape
    c2 = 2 * c
    dtype = x_nhwc.dtype
    if vmem_limit_bytes is None:
        vmem_limit_bytes = _default_vmem_limit()

    # emb projection hoisted out of the kernel (trivial (B,E)x(E,C) XLA matmul).
    emb_out = (jax.nn.silu(emb.astype(jnp.float32))
               @ params["w_emb"].astype(jnp.float32)
               + params["b_emb"].astype(jnp.float32))
    emb_out = emb_out.astype(dtype).reshape(b, 1, c)

    tm = int(row_tile or _choose_row_tile(h, w, c, vmem_limit_bytes))
    assert h % tm == 0, "row_tile must divide H (carried-halo pipeline)"
    nh = h // tm

    x_spec = pl.BlockSpec((1, tm, w, c),
                          lambda bi, i: (bi, jnp.minimum(i, nh - 1), 0, 0))
    y_spec = pl.BlockSpec((1, tm, w, c),
                          lambda bi, i: (bi, jnp.maximum(i - 1, 0), 0, 0))
    emb_spec = pl.BlockSpec((1, 1, c), lambda bi, i: (bi, 0, 0))

    def const_spec(arr):
        nd = arr.ndim
        return pl.BlockSpec(arr.shape, lambda *_: (0,) * nd)

    weight_names = ["g_norm", "b_norm", "w_expand", "g_exp", "b_exp",
                    "w_dw", "g_dw", "b_dw", "w_proj", "g_proj", "b_proj",
                    "g_ffn", "b_ffn", "w1a", "b1a", "w1b", "b1b", "w2", "b2"]
    weights = [params[k] for k in weight_names]

    return pl.pallas_call(
        _nafblock_kernel,
        out_shape=jax.ShapeDtypeStruct((b, h, w, c), dtype),
        grid=(b, nh + 1),
        in_specs=[x_spec, emb_spec] + [const_spec(a) for a in weights],
        out_specs=y_spec,
        scratch_shapes=[pltpu.VMEM((tm + 2, w, c2), dtype),   # carried t + halo rows
                        pltpu.VMEM((tm, w, c), dtype)],       # carried h residual
        compiler_params=pltpu.CompilerParams(
            dimension_semantics=("parallel", "arbitrary"),
            vmem_limit_bytes=int(vmem_limit_bytes)),
    )(x_nhwc, emb_out, *weights)


def naf_block_forward(x_nchw, emb, params, **kw):
    """NCHW wrapper matching the PyTorch module I/O.  The two transposes are
    whole-tensor HBM passes; in a real UNet keep activations NHWC and use
    naf_block_forward_nhwc instead."""
    x = jnp.transpose(x_nchw, (0, 2, 3, 1))
    y = naf_block_forward_nhwc(x, emb, params, **kw)
    return jnp.transpose(y, (0, 3, 1, 2))


# --------------------------------------------------------------------------
# Parameters (deterministic synthetic init, PyTorch-like fan-in bounds)
# --------------------------------------------------------------------------
def init_nafblock_params(key, channels, emb_channels, dtype=jnp.float32):
    c, e = channels, emb_channels
    c2 = 2 * c
    ks = jax.random.split(key, 16)

    def unif(k, shape, fan_in):
        bound = 1.0 / np.sqrt(fan_in)
        return jax.random.uniform(k, shape, dtype, minval=-bound, maxval=bound)

    def ln(k, n):
        kg, kb = jax.random.split(k)
        g = (1.0 + 0.05 * jax.random.normal(kg, (1, n))).astype(dtype)
        bta = (0.05 * jax.random.normal(kb, (1, n))).astype(dtype)
        return g, bta

    p = {}
    p["w_emb"] = unif(ks[0], (e, c), e)            # Linear(E, C) weight^T
    p["b_emb"] = unif(ks[1], (1, c), e)
    p["g_norm"], p["b_norm"] = ln(ks[2], c)        # norm = LayerNorm2d(C)
    p["w_expand"] = unif(ks[3], (c, c2), c)        # 1x1 conv C->2C (no bias)
    p["g_exp"], p["b_exp"] = ln(ks[4], c2)
    p["w_dw"] = unif(ks[5], (9, c2), 9)            # depthwise 3x3 taps, (kh*3+kw, ch)
    p["g_dw"], p["b_dw"] = ln(ks[6], c2)
    p["w_proj"] = unif(ks[7], (c2, c), c2)         # 1x1 conv 2C->C (no bias)
    p["g_proj"], p["b_proj"] = ln(ks[8], c)
    p["g_ffn"], p["b_ffn"] = ln(ks[9], c)          # ffn_norm
    p["w1a"] = unif(ks[10], (c, c), c)             # ffn_conv1 (C->2C), pre-split
    p["b1a"] = unif(ks[11], (1, c), c)             #   into the two SimpleGate halves
    p["w1b"] = unif(ks[12], (c, c), c)
    p["b1b"] = unif(ks[13], (1, c), c)
    p["w2"] = unif(ks[14], (c, c), c)              # ffn_conv2 (C->C)
    p["b2"] = unif(ks[15], (1, c), c)
    return p


# --------------------------------------------------------------------------
# Pure-JAX NCHW reference mirroring the PyTorch NAFBlock._forward
# --------------------------------------------------------------------------
def nafblock_reference(x, emb, params):
    _, c, _, _ = x.shape
    c2 = 2 * c

    def ln2d(v, g, b):
        mu = jnp.mean(v, axis=1, keepdims=True)
        var = jnp.mean((v - mu) ** 2, axis=1, keepdims=True)
        return ((v - mu) / jnp.sqrt(var + _LN_EPS)
                * g.reshape(1, -1, 1, 1) + b.reshape(1, -1, 1, 1))

    def conv1x1(v, w_io, bias=None):               # w_io: (Cin, Cout)
        y = jnp.einsum("bchw,co->bohw", v, w_io)
        if bias is not None:
            y = y + bias.reshape(1, -1, 1, 1)
        return y

    gelu = lambda v: jax.nn.gelu(v, approximate=False)   # torch.nn.GELU() default

    emb_out = ((emb * jax.nn.sigmoid(emb)) @ params["w_emb"]
               + params["b_emb"].reshape(1, -1))
    hh = x + emb_out[:, :, None, None]

    # MBConv(norm(h)) + h
    n = ln2d(hh, params["g_norm"], params["b_norm"])
    t = gelu(ln2d(conv1x1(n, params["w_expand"]), params["g_exp"], params["b_exp"]))
    w_dw = jnp.transpose(params["w_dw"], (1, 0)).reshape(c2, 1, 3, 3)
    d = jax.lax.conv_general_dilated(
        t, w_dw, window_strides=(1, 1), padding=((1, 1), (1, 1)),
        dimension_numbers=("NCHW", "OIHW", "NCHW"), feature_group_count=c2)
    d = gelu(ln2d(d, params["g_dw"], params["b_dw"]))
    proj = ln2d(conv1x1(d, params["w_proj"]), params["g_proj"], params["b_proj"])
    hh = proj + hh

    # FFN with SimpleGate (chunk along channels)
    f = ln2d(hh, params["g_ffn"], params["b_ffn"])
    w1 = jnp.concatenate([params["w1a"], params["w1b"]], axis=1)
    b1 = jnp.concatenate([params["b1a"], params["b1b"]], axis=1)
    g = conv1x1(f, w1, b1.reshape(-1))
    x1, x2 = g[:, :c], g[:, c:]
    hh = conv1x1(x1 * x2, params["w2"], params["b2"].reshape(-1)) + hh
    return hh


# --------------------------------------------------------------------------
# Main
# --------------------------------------------------------------------------
if __name__ == "__main__":
    key = jax.random.PRNGKey(0)
    kx, ke, kp = jax.random.split(key, 3)

    B, C, H, W = 2, 4, 16, 16
    EMB = 32
    x = jax.random.normal(kx, (B, C, H, W), jnp.float32)
    emb = jax.random.normal(ke, (B, EMB), jnp.float32)
    params = init_nafblock_params(kp, C, EMB)

    ref = nafblock_reference(x, emb, params)

    # row_tile=8 -> 2 real row tiles + 1 flush step: exercises the carried-halo
    # (lag-by-one-tile) pipeline.  row_tile=None lets the chooser take the whole
    # image as one tile (single-tile path).
    for rt in (8, None):
        y = jax.block_until_ready(naf_block_forward(x, emb, params, row_tile=rt))
        assert y.shape == (B, C, H, W)
        err = float(jnp.max(jnp.abs(y - ref)))
        assert jnp.allclose(y, ref, atol=1e-4, rtol=1e-4), \
            f"mismatch (row_tile={rt}), max abs err={err}"

    print("KERNEL_OK")
</pallas_src>

<mosaic_0001>
module attributes {stable_mosaic.version = 11 : i64} {
  func.func @_nafblock_kernel(%arg0: i32, %arg1: i32, %arg2: memref<1x8x16x4xf32, #tpu.memory_space<vmem>>, %arg3: memref<1x1x4xf32, #tpu.memory_space<vmem>>, %arg4: memref<1x4xf32, #tpu.memory_space<vmem>>, %arg5: memref<1x4xf32, #tpu.memory_space<vmem>>, %arg6: memref<4x8xf32, #tpu.memory_space<vmem>>, %arg7: memref<1x8xf32, #tpu.memory_space<vmem>>, %arg8: memref<1x8xf32, #tpu.memory_space<vmem>>, %arg9: memref<9x8xf32, #tpu.memory_space<vmem>>, %arg10: memref<1x8xf32, #tpu.memory_space<vmem>>, %arg11: memref<1x8xf32, #tpu.memory_space<vmem>>, %arg12: memref<8x4xf32, #tpu.memory_space<vmem>>, %arg13: memref<1x4xf32, #tpu.memory_space<vmem>>, %arg14: memref<1x4xf32, #tpu.memory_space<vmem>>, %arg15: memref<1x4xf32, #tpu.memory_space<vmem>>, %arg16: memref<1x4xf32, #tpu.memory_space<vmem>>, %arg17: memref<4x4xf32, #tpu.memory_space<vmem>>, %arg18: memref<1x4xf32, #tpu.memory_space<vmem>>, %arg19: memref<4x4xf32, #tpu.memory_space<vmem>>, %arg20: memref<1x4xf32, #tpu.memory_space<vmem>>, %arg21: memref<4x4xf32, #tpu.memory_space<vmem>>, %arg22: memref<1x4xf32, #tpu.memory_space<vmem>>, %arg23: memref<1x8x16x4xf32, #tpu.memory_space<vmem>>, %arg24: memref<10x16x8xf32, #tpu.memory_space<vmem>>, %arg25: memref<8x16x4xf32, #tpu.memory_space<vmem>>) attributes {dimension_semantics = [#tpu.dimension_semantics<parallel>, #tpu.dimension_semantics<arbitrary>], iteration_bounds = array<i64: 2, 3>, scalar_prefetch = 0 : i64, scratch_operands = 2 : i64, tpu.core_type = #tpu.core_type<tc>, window_params = [{transform_indices = @transform_0, window_bounds = array<i64: 1, 8, 16, 4>}, {transform_indices = @transform_1, window_bounds = array<i64: 1, 1, 4>}, {pipeline_mode = #tpu.pipeline_mode<synchronous>, transform_indices = @transform_2, window_bounds = array<i64: 1, 4>}, {pipeline_mode = #tpu.pipeline_mode<synchronous>, transform_indices = @transform_3, window_bounds = array<i64: 1, 4>}, {pipeline_mode = #tpu.pipeline_mode<synchronous>, transform_indices = @transform_4, window_bounds = array<i64: 4, 8>}, {pipeline_mode = #tpu.pipeline_mode<synchronous>, transform_indices = @transform_5, window_bounds = array<i64: 1, 8>}, {pipeline_mode = #tpu.pipeline_mode<synchronous>, transform_indices = @transform_6, window_bounds = array<i64: 1, 8>}, {pipeline_mode = #tpu.pipeline_mode<synchronous>, transform_indices = @transform_7, window_bounds = array<i64: 9, 8>}, {pipeline_mode = #tpu.pipeline_mode<synchronous>, transform_indices = @transform_8, window_bounds = array<i64: 1, 8>}, {pipeline_mode = #tpu.pipeline_mode<synchronous>, transform_indices = @transform_9, window_bounds = array<i64: 1, 8>}, {pipeline_mode = #tpu.pipeline_mode<synchronous>, transform_indices = @transform_10, window_bounds = array<i64: 8, 4>}, {pipeline_mode = #tpu.pipeline_mode<synchronous>, transform_indices = @transform_11, window_bounds = array<i64: 1, 4>}, {pipeline_mode = #tpu.pipeline_mode<synchronous>, transform_indices = @transform_12, window_bounds = array<i64: 1, 4>}, {pipeline_mode = #tpu.pipeline_mode<synchronous>, transform_indices = @transform_13, window_bounds = array<i64: 1, 4>}, {pipeline_mode = #tpu.pipeline_mode<synchronous>, transform_indices = @transform_14, window_bounds = array<i64: 1, 4>}, {pipeline_mode = #tpu.pipeline_mode<synchronous>, transform_indices = @transform_15, window_bounds = array<i64: 4, 4>}, {pipeline_mode = #tpu.pipeline_mode<synchronous>, transform_indices = @transform_16, window_bounds = array<i64: 1, 4>}, {pipeline_mode = #tpu.pipeline_mode<synchronous>, transform_indices = @transform_17, window_bounds = array<i64: 4, 4>}, {pipeline_mode = #tpu.pipeline_mode<synchronous>, transform_indices = @transform_18, window_bounds = array<i64: 1, 4>}, {pipeline_mode = #tpu.pipeline_mode<synchronous>, transform_indices = @transform_19, window_bounds = array<i64: 4, 4>}, {pipeline_mode = #tpu.pipeline_mode<synchronous>, transform_indices = @transform_20, window_bounds = array<i64: 1, 4>}, {transform_indices = @transform_21, window_bounds = array<i64: 1, 8, 16, 4>}]} {
    %c0 = arith.constant 0 : index
    %c0_0 = arith.constant 0 : index
    %c0_1 = arith.constant 0 : index
    %c0_2 = arith.constant 0 : index
    %0 = vector.load %arg2[%c0, %c0_0, %c0_1, %c0_2] : memref<1x8x16x4xf32, #tpu.memory_space<vmem>>, vector<1x8x16x4xf32>
    %1 = vector.shape_cast %0 : vector<1x8x16x4xf32> to vector<8x16x4xf32>
    %2 = vector.shape_cast %1 : vector<8x16x4xf32> to vector<128x4xf32>
    %c0_3 = arith.constant 0 : index
    %c0_4 = arith.constant 0 : index
    %c0_5 = arith.constant 0 : index
    %3 = vector.load %arg3[%c0_3, %c0_4, %c0_5] : memref<1x1x4xf32, #tpu.memory_space<vmem>>, vector<1x1x4xf32>
    %4 = vector.shape_cast %3 : vector<1x1x4xf32> to vector<1x4xf32>
    %5 = vector.broadcast %4 : vector<1x4xf32> to vector<128x4xf32>
    %6 = arith.addf %2, %5 : vector<128x4xf32>
    %c0_6 = arith.constant 0 : index
    %c0_7 = arith.constant 0 : index
    %7 = vector.load %arg4[%c0_6, %c0_7] : memref<1x4xf32, #tpu.memory_space<vmem>>, vector<1x4xf32>
    %c0_8 = arith.constant 0 : index
    %c0_9 = arith.constant 0 : index
    %8 = vector.load %arg5[%c0_8, %c0_9] : memref<1x4xf32, #tpu.memory_space<vmem>>, vector<1x4xf32>
    %cst = arith.constant dense<0.000000e+00> : vector<128xf32>
    %9 = vector.multi_reduction <add>, %6, %cst [1] : vector<128x4xf32> to vector<128xf32>
    %10 = vector.shape_cast %9 : vector<128xf32> to vector<128x1xf32>
    %cst_10 = arith.constant 4.000000e+00 : f32
    %11 = vector.broadcast %cst_10 : f32 to vector<128x1xf32>
    %12 = arith.divf %10, %11 : vector<128x1xf32>
    %13 = vector.broadcast %12 : vector<128x1xf32> to vector<128x4xf32>
    %14 = arith.subf %6, %13 : vector<128x4xf32>
    %15 = arith.mulf %14, %14 : vector<128x4xf32>
    %cst_11 = arith.constant dense<0.000000e+00> : vector<128xf32>
    %16 = vector.multi_reduction <add>, %15, %cst_11 [1] : vector<128x4xf32> to vector<128xf32>
    %17 = vector.shape_cast %16 : vector<128xf32> to vector<128x1xf32>
    %cst_12 = arith.constant 4.000000e+00 : f32
    %18 = vector.broadcast %cst_12 : f32 to vector<128x1xf32>
    %19 = arith.divf %17, %18 : vector<128x1xf32>
    %cst_13 = arith.constant 9.99999997E-7 : f32
    %20 = vector.broadcast %cst_13 : f32 to vector<128x1xf32>
    %21 = arith.addf %19, %20 : vector<128x1xf32>
    %22 = math.rsqrt %21 : vector<128x1xf32>
    %23 = vector.broadcast %22 : vector<128x1xf32> to vector<128x4xf32>
    %24 = arith.mulf %14, %23 : vector<128x4xf32>
    %25 = vector.broadcast %7 : vector<1x4xf32> to vector<128x4xf32>
    %26 = arith.mulf %24, %25 : vector<128x4xf32>
    %27 = vector.broadcast %8 : vector<1x4xf32> to vector<128x4xf32>
    %28 = arith.addf %26, %27 : vector<128x4xf32>
    %c0_14 = arith.constant 0 : index
    %c0_15 = arith.constant 0 : index
    %29 = vector.load %arg6[%c0_14, %c0_15] : memref<4x8xf32, #tpu.memory_space<vmem>>, vector<4x8xf32>
    %cst_16 = arith.constant dense<0.000000e+00> : vector<128x8xf32>
    %30 = tpu.matmul %28, %29, %cst_16 {dimension_numbers = #tpu.dot_dimension_numbers<[1], [0], [0], [1], [0, 0, 1, 1], [], []>} : vector<128x4xf32>, vector<4x8xf32>, vector<128x8xf32> -> vector<128x8xf32>
    %c0_17 = arith.constant 0 : index
    %c0_18 = arith.constant 0 : index
    %31 = vector.load %arg7[%c0_17, %c0_18] : memref<1x8xf32, #tpu.memory_space<vmem>>, vector<1x8xf32>
    %c0_19 = arith.constant 0 : index
    %c0_20 = arith.constant 0 : index
    %32 = vector.load %arg8[%c0_19, %c0_20] : memref<1x8xf32, #tpu.memory_space<vmem>>, vector<1x8xf32>
    %cst_21 = arith.constant dense<0.000000e+00> : vector<128xf32>
    %33 = vector.multi_reduction <add>, %30, %cst_21 [1] : vector<128x8xf32> to vector<128xf32>
    %34 = vector.shape_cast %33 : vector<128xf32> to vector<128x1xf32>
    %cst_22 = arith.constant 8.000000e+00 : f32
    %35 = vector.broadcast %cst_22 : f32 to vector<128x1xf32>
    %36 = arith.divf %34, %35 : vector<128x1xf32>
    %37 = vector.broadcast %36 : vector<128x1xf32> to vector<128x8xf32>
    %38 = arith.subf %30, %37 : vector<128x8xf32>
    %39 = arith.mulf %38, %38 : vector<128x8xf32>
    %cst_23 = arith.constant dense<0.000000e+00> : vector<128xf32>
    %40 = vector.multi_reduction <add>, %39, %cst_23 [1] : vector<128x8xf32> to vector<128xf32>
    %41 = vector.shape_cast %40 : vector<128xf32> to vector<128x1xf32>
    %cst_24 = arith.constant 8.000000e+00 : f32
    %42 = vector.broadcast %cst_24 : f32 to vector<128x1xf32>
    %43 = arith.divf %41, %42 : vector<128x1xf32>
    %cst_25 = arith.constant 9.99999997E-7 : f32
    %44 = vector.broadcast %cst_25 : f32 to vector<128x1xf32>
    %45 = arith.addf %43, %44 : vector<128x1xf32>
    %46 = math.rsqrt %45 : vector<128x1xf32>
    %47 = vector.broadcast %46 : vector<128x1xf32> to vector<128x8xf32>
    %48 = arith.mulf %38, %47 : vector<128x8xf32>
    %49 = vector.broadcast %31 : vector<1x8xf32> to vector<128x8xf32>
    %50 = arith.mulf %48, %49 : vector<128x8xf32>
    %51 = vector.broadcast %32 : vector<1x8xf32> to vector<128x8xf32>
    %52 = arith.addf %50, %51 : vector<128x8xf32>
    %cst_26 = arith.constant 5.000000e-01 : f32
    %53 = vector.broadcast %cst_26 : f32 to vector<128x8xf32>
    %54 = arith.mulf %53, %52 : vector<128x8xf32>
    %cst_27 = arith.constant 0.707106769 : f32
    %55 = vector.broadcast %cst_27 : f32 to vector<128x8xf32>
    %56 = arith.mulf %52, %55 : vector<128x8xf32>
    %cst_28 = arith.constant 0.000000e+00 : f32
    %57 = vector.broadcast %cst_28 : f32 to vector<128x8xf32>
    %58 = arith.cmpf olt, %56, %57 : vector<128x8xf32>
    %cst_29 = arith.constant -1.000000e+00 : f32
    %cst_30 = arith.constant 1.000000e+00 : f32
    %59 = vector.broadcast %cst_29 : f32 to vector<128x8xf32>
    %60 = vector.broadcast %cst_30 : f32 to vector<128x8xf32>
    %61 = arith.select %58, %59, %60 : vector<128x8xi1>, vector<128x8xf32>
    %62 = math.absf %56 : vector<128x8xf32>
    %cst_31 = arith.constant 0.327591091 : f32
    %63 = vector.broadcast %cst_31 : f32 to vector<128x8xf32>
    %64 = arith.mulf %63, %62 : vector<128x8xf32>
    %cst_32 = arith.constant 1.000000e+00 : f32
    %65 = vector.broadcast %cst_32 : f32 to vector<128x8xf32>
    %66 = arith.addf %65, %64 : vector<128x8xf32>
    %67 = tpu.reciprocal %66 {approx = true} : vector<128x8xf32> -> vector<128x8xf32>
    %68 = arith.mulf %66, %67 : vector<128x8xf32>
    %cst_33 = arith.constant 2.000000e+00 : f32
    %69 = vector.broadcast %cst_33 : f32 to vector<128x8xf32>
    %70 = arith.subf %69, %68 : vector<128x8xf32>
    %71 = arith.mulf %67, %70 : vector<128x8xf32>
    %cst_34 = arith.constant 1.06140542 : f32
    %72 = vector.broadcast %cst_34 : f32 to vector<128x8xf32>
    %73 = arith.mulf %72, %71 : vector<128x8xf32>
    %cst_35 = arith.constant -1.45315206 : f32
    %74 = vector.broadcast %cst_35 : f32 to vector<128x8xf32>
    %75 = arith.addf %73, %74 : vector<128x8xf32>
    %76 = arith.mulf %75, %71 : vector<128x8xf32>
    %cst_36 = arith.constant 1.42141378 : f32
    %77 = vector.broadcast %cst_36 : f32 to vector<128x8xf32>
    %78 = arith.addf %76, %77 : vector<128x8xf32>
    %79 = arith.mulf %78, %71 : vector<128x8xf32>
    %cst_37 = arith.constant -0.284496725 : f32
    %80 = vector.broadcast %cst_37 : f32 to vector<128x8xf32>
    %81 = arith.addf %79, %80 : vector<128x8xf32>
    %82 = arith.mulf %81, %71 : vector<128x8xf32>
    %cst_38 = arith.constant 0.254829586 : f32
    %83 = vector.broadcast %cst_38 : f32 to vector<128x8xf32>
    %84 = arith.addf %82, %83 : vector<128x8xf32>
    %85 = arith.mulf %84, %71 : vector<128x8xf32>
    %cst_39 = arith.constant 0.000000e+00 : f32
    %86 = vector.broadcast %cst_39 : f32 to vector<128x8xf32>
    %87 = arith.subf %86, %62 : vector<128x8xf32>
    %88 = arith.mulf %87, %62 : vector<128x8xf32>
    %89 = math.exp %88 : vector<128x8xf32>
    %90 = arith.mulf %85, %89 : vector<128x8xf32>
    %cst_40 = arith.constant 1.000000e+00 : f32
    %91 = vector.broadcast %cst_40 : f32 to vector<128x8xf32>
    %92 = arith.subf %91, %90 : vector<128x8xf32>
    %93 = arith.mulf %61, %92 : vector<128x8xf32>
    %cst_41 = arith.constant 1.000000e+00 : f32
    %94 = vector.broadcast %cst_41 : f32 to vector<128x8xf32>
    %95 = arith.addf %94, %93 : vector<128x8xf32>
    %96 = arith.mulf %54, %95 : vector<128x8xf32>
    %97 = vector.shape_cast %6 : vector<128x4xf32> to vector<8x16x4xf32>
    %98 = vector.shape_cast %96 : vector<128x8xf32> to vector<8x16x8xf32>
    %99 = vector.extract_strided_slice %98 {offsets = [0, 0, 0], sizes = [1, 16, 8], strides = [1, 1, 1]} : vector<8x16x8xf32> to vector<1x16x8xf32>
    %c2_i32 = arith.constant 2 : i32
    %100 = arith.cmpi eq, %arg1, %c2_i32 : i32
    %cst_42 = arith.constant 0.000000e+00 : f32
    %101 = vector.broadcast %cst_42 : f32 to vector<1x16x8xf32>
    %102 = arith.select %100, %101, %99 : vector<1x16x8xf32>
    %c9 = arith.constant 9 : index
    %c0_43 = arith.constant 0 : index
    %c0_44 = arith.constant 0 : index
    %103 = vector.load %arg24[%c9, %c0_43, %c0_44] : memref<10x16x8xf32, #tpu.memory_space<vmem>>, vector<1x16x8xf32>
    tpu.vector_store %arg24[%c9, %c0_43, %c0_44], %102 {strides = array<i32>} : memref<10x16x8xf32, #tpu.memory_space<vmem>>, vector<1x16x8xf32>,
    %c0_i32 = arith.constant 0 : i32
    %104 = arith.cmpi sgt, %arg1, %c0_i32 : i32
    %105 = arith.extui %104 : i1 to i32
    %c0_i32_45 = arith.constant 0 : i32
    %106 = arith.cmpi ne, %105, %c0_i32_45 : i32
    scf.if %106 {
      %c0_58 = arith.constant 0 : index
      %c0_59 = arith.constant 0 : index
      %c0_60 = arith.constant 0 : index
      %114 = vector.load %arg24[%c0_58, %c0_59, %c0_60] : memref<10x16x8xf32, #tpu.memory_space<vmem>>, vector<10x16x8xf32>
      %cst_61 = arith.constant 0.000000e+00 : f32
      %115 = vector.broadcast %cst_61 : f32 to vector<8x1x8xf32>
      %cst_62 = arith.constant 0.000000e+00 : f32
      %116 = vector.broadcast %cst_62 : f32 to vector<8x16x8xf32>
      %117 = vector.extract_strided_slice %114 {offsets = [0, 0, 0], sizes = [8, 16, 8], strides = [1, 1, 1]} : vector<10x16x8xf32> to vector<8x16x8xf32>
      %c0_63 = arith.constant 0 : index
      %c0_64 = arith.constant 0 : index
      %118 = vector.load %arg9[%c0_63, %c0_64] : memref<9x8xf32, #tpu.memory_space<vmem>>, vector<3x8xf32>
      %119 = vector.extract_strided_slice %117 {offsets = [0, 0, 0], sizes = [8, 15, 8], strides = [1, 1, 1]} : vector<8x16x8xf32> to vector<8x15x8xf32>
      %120 = tpu.concatenate %115, %119 in 1 : vector<8x1x8xf32>, vector<8x15x8xf32> -> vector<8x16x8xf32>
      %121 = vector.extract_strided_slice %117 {offsets = [0, 1, 0], sizes = [8, 15, 8], strides = [1, 1, 1]} : vector<8x16x8xf32> to vector<8x15x8xf32>
      %122 = tpu.concatenate %121, %115 in 1 : vector<8x15x8xf32>, vector<8x1x8xf32> -> vector<8x16x8xf32>
      %123 = vector.extract_strided_slice %118 {offsets = [0, 0], sizes = [1, 8], strides = [1, 1]} : vector<3x8xf32> to vector<1x8xf32>
      %124 = vector.shape_cast %123 : vector<1x8xf32> to vector<1x1x8xf32>
      %125 = vector.broadcast %124 : vector<1x1x8xf32> to vector<8x16x8xf32>
      %126 = arith.mulf %120, %125 : vector<8x16x8xf32>
      %127 = arith.addf %116, %126 : vector<8x16x8xf32>
      %128 = vector.extract_strided_slice %118 {offsets = [1, 0], sizes = [1, 8], strides = [1, 1]} : vector<3x8xf32> to vector<1x8xf32>
      %129 = vector.shape_cast %128 : vector<1x8xf32> to vector<1x1x8xf32>
      %130 = vector.broadcast %129 : vector<1x1x8xf32> to vector<8x16x8xf32>
      %131 = arith.mulf %117, %130 : vector<8x16x8xf32>
      %132 = arith.addf %127, %131 : vector<8x16x8xf32>
      %133 = vector.extract_strided_slice %118 {offsets = [2, 0], sizes = [1, 8], strides = [1, 1]} : vector<3x8xf32> to vector<1x8xf32>
      %134 = vector.shape_cast %133 : vector<1x8xf32> to vector<1x1x8xf32>
      %135 = vector.broadcast %134 : vector<1x1x8xf32> to vector<8x16x8xf32>
      %136 = arith.mulf %122, %135 : vector<8x16x8xf32>
      %137 = arith.addf %132, %136 : vector<8x16x8xf32>
      %138 = vector.extract_strided_slice %114 {offsets = [1, 0, 0], sizes = [8, 16, 8], strides = [1, 1, 1]} : vector<10x16x8xf32> to vector<8x16x8xf32>
      %c3 = arith.constant 3 : index
      %c0_65 = arith.constant 0 : index
      %139 = vector.load %arg9[%c3, %c0_65] : memref<9x8xf32, #tpu.memory_space<vmem>>, vector<3x8xf32>
      %140 = vector.extract_strided_slice %138 {offsets = [0, 0, 0], sizes = [8, 15, 8], strides = [1, 1, 1]} : vector<8x16x8xf32> to vector<8x15x8xf32>
      %141 = tpu.concatenate %115, %140 in 1 : vector<8x1x8xf32>, vector<8x15x8xf32> -> vector<8x16x8xf32>
      %142 = vector.extract_strided_slice %138 {offsets = [0, 1, 0], sizes = [8, 15, 8], strides = [1, 1, 1]} : vector<8x16x8xf32> to vector<8x15x8xf32>
      %143 = tpu.concatenate %142, %115 in 1 : vector<8x15x8xf32>, vector<8x1x8xf32> -> vector<8x16x8xf32>
      %144 = vector.extract_strided_slice %139 {offsets = [0, 0], sizes = [1, 8], strides = [1, 1]} : vector<3x8xf32> to vector<1x8xf32>
      %145 = vector.shape_cast %144 : vector<1x8xf32> to vector<1x1x8xf32>
      %146 = vector.broadcast %145 : vector<1x1x8xf32> to vector<8x16x8xf32>
      %147 = arith.mulf %141, %146 : vector<8x16x8xf32>
      %148 = arith.addf %137, %147 : vector<8x16x8xf32>
      %149 = vector.extract_strided_slice %139 {offsets = [1, 0], sizes = [1, 8], strides = [1, 1]} : vector<3x8xf32> to vector<1x8xf32>
      %150 = vector.shape_cast %149 : vector<1x8xf32> to vector<1x1x8xf32>
      %151 = vector.broadcast %150 : vector<1x1x8xf32> to vector<8x16x8xf32>
      %152 = arith.mulf %138, %151 : vector<8x16x8xf32>
      %153 = arith.addf %148, %152 : vector<8x16x8xf32>
      %154 = vector.extract_strided_slice %139 {offsets = [2, 0], sizes = [1, 8], strides = [1, 1]} : vector<3x8xf32> to vector<1x8xf32>
      %155 = vector.shape_cast %154 : vector<1x8xf32> to vector<1x1x8xf32>
      %156 = vector.broadcast %155 : vector<1x1x8xf32> to vector<8x16x8xf32>
      %157 = arith.mulf %143, %156 : vector<8x16x8xf32>
      %158 = arith.addf %153, %157 : vector<8x16x8xf32>
      %159 = vector.extract_strided_slice %114 {offsets = [2, 0, 0], sizes = [8, 16, 8], strides = [1, 1, 1]} : vector<10x16x8xf32> to vector<8x16x8xf32>
      %c6 = arith.constant 6 : index
      %c0_66 = arith.constant 0 : index
      %160 = vector.load %arg9[%c6, %c0_66] : memref<9x8xf32, #tpu.memory_space<vmem>>, vector<3x8xf32>
      %161 = vector.extract_strided_slice %159 {offsets = [0, 0, 0], sizes = [8, 15, 8], strides = [1, 1, 1]} : vector<8x16x8xf32> to vector<8x15x8xf32>
      %162 = tpu.concatenate %115, %161 in 1 : vector<8x1x8xf32>, vector<8x15x8xf32> -> vector<8x16x8xf32>
      %163 = vector.extract_strided_slice %159 {offsets = [0, 1, 0], sizes = [8, 15, 8], strides = [1, 1, 1]} : vector<8x16x8xf32> to vector<8x15x8xf32>
      %164 = tpu.concatenate %163, %115 in 1 : vector<8x15x8xf32>, vector<8x1x8xf32> -> vector<8x16x8xf32>
      %165 = vector.extract_strided_slice %160 {offsets = [0, 0], sizes = [1, 8], strides = [1, 1]} : vector<3x8xf32> to vector<1x8xf32>
      %166 = vector.shape_cast %165 : vector<1x8xf32> to vector<1x1x8xf32>
      %167 = vector.broadcast %166 : vector<1x1x8xf32> to vector<8x16x8xf32>
      %168 = arith.mulf %162, %167 : vector<8x16x8xf32>
      %169 = arith.addf %158, %168 : vector<8x16x8xf32>
      %170 = vector.extract_strided_slice %160 {offsets = [1, 0], sizes = [1, 8], strides = [1, 1]} : vector<3x8xf32> to vector<1x8xf32>
      %171 = vector.shape_cast %170 : vector<1x8xf32> to vector<1x1x8xf32>
      %172 = vector.broadcast %171 : vector<1x1x8xf32> to vector<8x16x8xf32>
      %173 = arith.mulf %159, %172 : vector<8x16x8xf32>
      %174 = arith.addf %169, %173 : vector<8x16x8xf32>
      %175 = vector.extract_strided_slice %160 {offsets = [2, 0], sizes = [1, 8], strides = [1, 1]} : vector<3x8xf32> to vector<1x8xf32>
      %176 = vector.shape_cast %175 : vector<1x8xf32> to vector<1x1x8xf32>
      %177 = vector.broadcast %176 : vector<1x1x8xf32> to vector<8x16x8xf32>
      %178 = arith.mulf %164, %177 : vector<8x16x8xf32>
      %179 = arith.addf %174, %178 : vector<8x16x8xf32>
      %180 = vector.shape_cast %179 : vector<8x16x8xf32> to vector<128x8xf32>
      %c0_67 = arith.constant 0 : index
      %c0_68 = arith.constant 0 : index
      %181 = vector.load %arg10[%c0_67, %c0_68] : memref<1x8xf32, #tpu.memory_space<vmem>>, vector<1x8xf32>
      %c0_69 = arith.constant 0 : index
      %c0_70 = arith.constant 0 : index
      %182 = vector.load %arg11[%c0_69, %c0_70] : memref<1x8xf32, #tpu.memory_space<vmem>>, vector<1x8xf32>
      %cst_71 = arith.constant dense<0.000000e+00> : vector<128xf32>
      %183 = vector.multi_reduction <add>, %180, %cst_71 [1] : vector<128x8xf32> to vector<128xf32>
      %184 = vector.shape_cast %183 : vector<128xf32> to vector<128x1xf32>
      %cst_72 = arith.constant 8.000000e+00 : f32
      %185 = vector.broadcast %cst_72 : f32 to vector<128x1xf32>
      %186 = arith.divf %184, %185 : vector<128x1xf32>
      %187 = vector.broadcast %186 : vector<128x1xf32> to vector<128x8xf32>
      %188 = arith.subf %180, %187 : vector<128x8xf32>
      %189 = arith.mulf %188, %188 : vector<128x8xf32>
      %cst_73 = arith.constant dense<0.000000e+00> : vector<128xf32>
      %190 = vector.multi_reduction <add>, %189, %cst_73 [1] : vector<128x8xf32> to vector<128xf32>
      %191 = vector.shape_cast %190 : vector<128xf32> to vector<128x1xf32>
      %cst_74 = arith.constant 8.000000e+00 : f32
      %192 = vector.broadcast %cst_74 : f32 to vector<128x1xf32>
      %193 = arith.divf %191, %192 : vector<128x1xf32>
      %cst_75 = arith.constant 9.99999997E-7 : f32
      %194 = vector.broadcast %cst_75 : f32 to vector<128x1xf32>
      %195 = arith.addf %193, %194 : vector<128x1xf32>
      %196 = math.rsqrt %195 : vector<128x1xf32>
      %197 = vector.broadcast %196 : vector<128x1xf32> to vector<128x8xf32>
      %198 = arith.mulf %188, %197 : vector<128x8xf32>
      %199 = vector.broadcast %181 : vector<1x8xf32> to vector<128x8xf32>
      %200 = arith.mulf %198, %199 : vector<128x8xf32>
      %201 = vector.broadcast %182 : vector<1x8xf32> to vector<128x8xf32>
      %202 = arith.addf %200, %201 : vector<128x8xf32>
      %cst_76 = arith.constant 5.000000e-01 : f32
      %203 = vector.broadcast %cst_76 : f32 to vector<128x8xf32>
      %204 = arith.mulf %203, %202 : vector<128x8xf32>
      %cst_77 = arith.constant 0.707106769 : f32
      %205 = vector.broadcast %cst_77 : f32 to vector<128x8xf32>
      %206 = arith.mulf %202, %205 : vector<128x8xf32>
      %cst_78 = arith.constant 0.000000e+00 : f32
      %207 = vector.broadcast %cst_78 : f32 to vector<128x8xf32>
      %208 = arith.cmpf olt, %206, %207 : vector<128x8xf32>
      %cst_79 = arith.constant -1.000000e+00 : f32
      %cst_80 = arith.constant 1.000000e+00 : f32
      %209 = vector.broadcast %cst_79 : f32 to vector<128x8xf32>
      %210 = vector.broadcast %cst_80 : f32 to vector<128x8xf32>
      %211 = arith.select %208, %209, %210 : vector<128x8xi1>, vector<128x8xf32>
      %212 = math.absf %206 : vector<128x8xf32>
      %cst_81 = arith.constant 0.327591091 : f32
      %213 = vector.broadcast %cst_81 : f32 to vector<128x8xf32>
      %214 = arith.mulf %213, %212 : vector<128x8xf32>
      %cst_82 = arith.constant 1.000000e+00 : f32
      %215 = vector.broadcast %cst_82 : f32 to vector<128x8xf32>
      %216 = arith.addf %215, %214 : vector<128x8xf32>
      %217 = tpu.reciprocal %216 {approx = true} : vector<128x8xf32> -> vector<128x8xf32>
      %218 = arith.mulf %216, %217 : vector<128x8xf32>
      %cst_83 = arith.constant 2.000000e+00 : f32
      %219 = vector.broadcast %cst_83 : f32 to vector<128x8xf32>
      %220 = arith.subf %219, %218 : vector<128x8xf32>
      %221 = arith.mulf %217, %220 : vector<128x8xf32>
      %cst_84 = arith.constant 1.06140542 : f32
      %222 = vector.broadcast %cst_84 : f32 to vector<128x8xf32>
      %223 = arith.mulf %222, %221 : vector<128x8xf32>
      %cst_85 = arith.constant -1.45315206 : f32
      %224 = vector.broadcast %cst_85 : f32 to vector<128x8xf32>
      %225 = arith.addf %223, %224 : vector<128x8xf32>
      %226 = arith.mulf %225, %221 : vector<128x8xf32>
      %cst_86 = arith.constant 1.42141378 : f32
      %227 = vector.broadcast %cst_86 : f32 to vector<128x8xf32>
      %228 = arith.addf %226, %227 : vector<128x8xf32>
      %229 = arith.mulf %228, %221 : vector<128x8xf32>
      %cst_87 = arith.constant -0.284496725 : f32
      %230 = vector.broadcast %cst_87 : f32 to vector<128x8xf32>
      %231 = arith.addf %229, %230 : vector<128x8xf32>
      %232 = arith.mulf %231, %221 : vector<128x8xf32>
      %cst_88 = arith.constant 0.254829586 : f32
      %233 = vector.broadcast %cst_88 : f32 to vector<128x8xf32>
      %234 = arith.addf %232, %233 : vector<128x8xf32>
      %235 = arith.mulf %234, %221 : vector<128x8xf32>
      %cst_89 = arith.constant 0.000000e+00 : f32
      %236 = vector.broadcast %cst_89 : f32 to vector<128x8xf32>
      %237 = arith.subf %236, %212 : vector<128x8xf32>
      %238 = arith.mulf %237, %212 : vector<128x8xf32>
      %239 = math.exp %238 : vector<128x8xf32>
      %240 = arith.mulf %235, %239 : vector<128x8xf32>
      %cst_90 = arith.constant 1.000000e+00 : f32
      %241 = vector.broadcast %cst_90 : f32 to vector<128x8xf32>
      %242 = arith.subf %241, %240 : vector<128x8xf32>
      %243 = arith.mulf %211, %242 : vector<128x8xf32>
      %cst_91 = arith.constant 1.000000e+00 : f32
      %244 = vector.broadcast %cst_91 : f32 to vector<128x8xf32>
      %245 = arith.addf %244, %243 : vector<128x8xf32>
      %246 = arith.mulf %204, %245 : vector<128x8xf32>
      %c0_92 = arith.constant 0 : index
      %c0_93 = arith.constant 0 : index
      %247 = vector.load %arg12[%c0_92, %c0_93] : memref<8x4xf32, #tpu.memory_space<vmem>>, vector<8x4xf32>
      %cst_94 = arith.constant dense<0.000000e+00> : vector<128x4xf32>
      %248 = tpu.matmul %246, %247, %cst_94 {dimension_numbers = #tpu.dot_dimension_numbers<[1], [0], [0], [1], [0, 0, 1, 1], [], []>} : vector<128x8xf32>, vector<8x4xf32>, vector<128x4xf32> -> vector<128x4xf32>
      %c0_95 = arith.constant 0 : index
      %c0_96 = arith.constant 0 : index
      %249 = vector.load %arg13[%c0_95, %c0_96] : memref<1x4xf32, #tpu.memory_space<vmem>>, vector<1x4xf32>
      %c0_97 = arith.constant 0 : index
      %c0_98 = arith.constant 0 : index
      %250 = vector.load %arg14[%c0_97, %c0_98] : memref<1x4xf32, #tpu.memory_space<vmem>>, vector<1x4xf32>
      %cst_99 = arith.constant dense<0.000000e+00> : vector<128xf32>
      %251 = vector.multi_reduction <add>, %248, %cst_99 [1] : vector<128x4xf32> to vector<128xf32>
      %252 = vector.shape_cast %251 : vector<128xf32> to vector<128x1xf32>
      %cst_100 = arith.constant 4.000000e+00 : f32
      %253 = vector.broadcast %cst_100 : f32 to vector<128x1xf32>
      %254 = arith.divf %252, %253 : vector<128x1xf32>
      %255 = vector.broadcast %254 : vector<128x1xf32> to vector<128x4xf32>
      %256 = arith.subf %248, %255 : vector<128x4xf32>
      %257 = arith.mulf %256, %256 : vector<128x4xf32>
      %cst_101 = arith.constant dense<0.000000e+00> : vector<128xf32>
      %258 = vector.multi_reduction <add>, %257, %cst_101 [1] : vector<128x4xf32> to vector<128xf32>
      %259 = vector.shape_cast %258 : vector<128xf32> to vector<128x1xf32>
      %cst_102 = arith.constant 4.000000e+00 : f32
      %260 = vector.broadcast %cst_102 : f32 to vector<128x1xf32>
      %261 = arith.divf %259, %260 : vector<128x1xf32>
      %cst_103 = arith.constant 9.99999997E-7 : f32
      %262 = vector.broadcast %cst_103 : f32 to vector<128x1xf32>
      %263 = arith.addf %261, %262 : vector<128x1xf32>
      %264 = math.rsqrt %263 : vector<128x1xf32>
      %265 = vector.broadcast %264 : vector<128x1xf32> to vector<128x4xf32>
      %266 = arith.mulf %256, %265 : vector<128x4xf32>
      %267 = vector.broadcast %249 : vector<1x4xf32> to vector<128x4xf32>
      %268 = arith.mulf %266, %267 : vector<128x4xf32>
      %269 = vector.broadcast %250 : vector<1x4xf32> to vector<128x4xf32>
      %270 = arith.addf %268, %269 : vector<128x4xf32>
      %c0_104 = arith.constant 0 : index
      %c0_105 = arith.constant 0 : index
      %c0_106 = arith.constant 0 : index
      %271 = vector.load %arg25[%c0_104, %c0_105, %c0_106] : memref<8x16x4xf32, #tpu.memory_space<vmem>>, vector<8x16x4xf32>
      %272 = vector.shape_cast %271 : vector<8x16x4xf32> to vector<128x4xf32>
      %273 = arith.addf %270, %272 : vector<128x4xf32>
      %c0_107 = arith.constant 0 : index
      %c0_108 = arith.constant 0 : index
      %274 = vector.load %arg15[%c0_107, %c0_108] : memref<1x4xf32, #tpu.memory_space<vmem>>, vector<1x4xf32>
      %c0_109 = arith.constant 0 : index
      %c0_110 = arith.constant 0 : index
      %275 = vector.load %arg16[%c0_109, %c0_110] : memref<1x4xf32, #tpu.memory_space<vmem>>, vector<1x4xf32>
      %cst_111 = arith.constant dense<0.000000e+00> : vector<128xf32>
      %276 = vector.multi_reduction <add>, %273, %cst_111 [1] : vector<128x4xf32> to vector<128xf32>
      %277 = vector.shape_cast %276 : vector<128xf32> to vector<128x1xf32>
      %cst_112 = arith.constant 4.000000e+00 : f32
      %278 = vector.broadcast %cst_112 : f32 to vector<128x1xf32>
      %279 = arith.divf %277, %278 : vector<128x1xf32>
      %280 = vector.broadcast %279 : vector<128x1xf32> to vector<128x4xf32>
      %281 = arith.subf %273, %280 : vector<128x4xf32>
      %282 = arith.mulf %281, %281 : vector<128x4xf32>
      %cst_113 = arith.constant dense<0.000000e+00> : vector<128xf32>
      %283 = vector.multi_reduction <add>, %282, %cst_113 [1] : vector<128x4xf32> to vector<128xf32>
      %284 = vector.shape_cast %283 : vector<128xf32> to vector<128x1xf32>
      %cst_114 = arith.constant 4.000000e+00 : f32
      %285 = vector.broadcast %cst_114 : f32 to vector<128x1xf32>
      %286 = arith.divf %284, %285 : vector<128x1xf32>
      %cst_115 = arith.constant 9.99999997E-7 : f32
      %287 = vector.broadcast %cst_115 : f32 to vector<128x1xf32>
      %288 = arith.addf %286, %287 : vector<128x1xf32>
      %289 = math.rsqrt %288 : vector<128x1xf32>
      %290 = vector.broadcast %289 : vector<128x1xf32> to vector<128x4xf32>
      %291 = arith.mulf %281, %290 : vector<128x4xf32>
      %292 = vector.broadcast %274 : vector<1x4xf32> to vector<128x4xf32>
      %293 = arith.mulf %291, %292 : vector<128x4xf32>
      %294 = vector.broadcast %275 : vector<1x4xf32> to vector<128x4xf32>
      %295 = arith.addf %293, %294 : vector<128x4xf32>
      %c0_116 = arith.constant 0 : index
      %c0_117 = arith.constant 0 : index
      %296 = vector.load %arg17[%c0_116, %c0_117] : memref<4x4xf32, #tpu.memory_space<vmem>>, vector<4x4xf32>
      %cst_118 = arith.constant dense<0.000000e+00> : vector<128x4xf32>
      %297 = tpu.matmul %295, %296, %cst_118 {dimension_numbers = #tpu.dot_dimension_numbers<[1], [0], [0], [1], [0, 0, 1, 1], [], []>} : vector<128x4xf32>, vector<4x4xf32>, vector<128x4xf32> -> vector<128x4xf32>
      %c0_119 = arith.constant 0 : index
      %c0_120 = arith.constant 0 : index
      %298 = vector.load %arg18[%c0_119, %c0_120] : memref<1x4xf32, #tpu.memory_space<vmem>>, vector<1x4xf32>
      %299 = vector.broadcast %298 : vector<1x4xf32> to vector<128x4xf32>
      %300 = arith.addf %297, %299 : vector<128x4xf32>
      %c0_121 = arith.constant 0 : index
      %c0_122 = arith.constant 0 : index
      %301 = vector.load %arg19[%c0_121, %c0_122] : memref<4x4xf32, #tpu.memory_space<vmem>>, vector<4x4xf32>
      %cst_123 = arith.constant dense<0.000000e+00> : vector<128x4xf32>
      %302 = tpu.matmul %295, %301, %cst_123 {dimension_numbers = #tpu.dot_dimension_numbers<[1], [0], [0], [1], [0, 0, 1, 1], [], []>} : vector<128x4xf32>, vector<4x4xf32>, vector<128x4xf32> -> vector<128x4xf32>
      %c0_124 = arith.constant 0 : index
      %c0_125 = arith.constant 0 : index
      %303 = vector.load %arg20[%c0_124, %c0_125] : memref<1x4xf32, #tpu.memory_space<vmem>>, vector<1x4xf32>
      %304 = vector.broadcast %303 : vector<1x4xf32> to vector<128x4xf32>
      %305 = arith.addf %302, %304 : vector<128x4xf32>
      %306 = arith.mulf %300, %305 : vector<128x4xf32>
      %c0_126 = arith.constant 0 : index
      %c0_127 = arith.constant 0 : index
      %307 = vector.load %arg21[%c0_126, %c0_127] : memref<4x4xf32, #tpu.memory_space<vmem>>, vector<4x4xf32>
      %cst_128 = arith.constant dense<0.000000e+00> : vector<128x4xf32>
      %308 = tpu.matmul %306, %307, %cst_128 {dimension_numbers = #tpu.dot_dimension_numbers<[1], [0], [0], [1], [0, 0, 1, 1], [], []>} : vector<128x4xf32>, vector<4x4xf32>, vector<128x4xf32> -> vector<128x4xf32>
      %c0_129 = arith.constant 0 : index
      %c0_130 = arith.constant 0 : index
      %309 = vector.load %arg22[%c0_129, %c0_130] : memref<1x4xf32, #tpu.memory_space<vmem>>, vector<1x4xf32>
      %310 = vector.broadcast %309 : vector<1x4xf32> to vector<128x4xf32>
      %311 = arith.addf %308, %310 : vector<128x4xf32>
      %312 = arith.addf %311, %273 : vector<128x4xf32>
      %313 = vector.shape_cast %312 : vector<128x4xf32> to vector<8x16x4xf32>
      %c0_131 = arith.constant 0 : index
      %c0_132 = arith.constant 0 : index
      %c0_133 = arith.constant 0 : index
      %c0_134 = arith.constant 0 : index
      %314 = vector.load %arg23[%c0_131, %c0_132, %c0_133, %c0_134] : memref<1x8x16x4xf32, #tpu.memory_space<vmem>>, vector<1x8x16x4xf32>
      %315 = vector.shape_cast %314 : vector<1x8x16x4xf32> to vector<8x16x4xf32>
      %316 = vector.shape_cast %313 : vector<8x16x4xf32> to vector<1x8x16x4xf32>
      tpu.vector_store %arg23[%c0_131, %c0_132, %c0_133, %c0_134], %316 {strides = array<i32>} : memref<1x8x16x4xf32, #tpu.memory_space<vmem>>, vector<1x8x16x4xf32>,
    } else {
    }
    %c8 = arith.constant 8 : index
    %c0_46 = arith.constant 0 : index
    %c0_47 = arith.constant 0 : index
    %107 = vector.load %arg24[%c8, %c0_46, %c0_47] : memref<10x16x8xf32, #tpu.memory_space<vmem>>, vector<1x16x8xf32>
    %c0_i32_48 = arith.constant 0 : i32
    %108 = arith.cmpi eq, %arg1, %c0_i32_48 : i32
    %cst_49 = arith.constant 0.000000e+00 : f32
    %109 = vector.broadcast %cst_49 : f32 to vector<1x16x8xf32>
    %110 = arith.select %108, %109, %107 : vector<1x16x8xf32>
    %c0_50 = arith.constant 0 : index
    %c0_51 = arith.constant 0 : index
    %c0_52 = arith.constant 0 : index
    %111 = vector.load %arg24[%c0_50, %c0_51, %c0_52] : memref<10x16x8xf32, #tpu.memory_space<vmem>>, vector<1x16x8xf32>
    tpu.vector_store %arg24[%c0_50, %c0_51, %c0_52], %110 {strides = array<i32>} : memref<10x16x8xf32, #tpu.memory_space<vmem>>, vector<1x16x8xf32>,
    %c1 = arith.constant 1 : index
    %c0_53 = arith.constant 0 : index
    %c0_54 = arith.constant 0 : index
    %112 = vector.load %arg24[%c1, %c0_53, %c0_54] : memref<10x16x8xf32, #tpu.memory_space<vmem>>, vector<8x16x8xf32>
    tpu.vector_store %arg24[%c1, %c0_53, %c0_54], %98 {strides = array<i32>} : memref<10x16x8xf32, #tpu.memory_space<vmem>>, vector<8x16x8xf32>,
    %c0_55 = arith.constant 0 : index
    %c0_56 = arith.constant 0 : index
    %c0_57 = arith.constant 0 : index
    %113 = vector.load %arg25[%c0_55, %c0_56, %c0_57] : memref<8x16x4xf32, #tpu.memory_space<vmem>>, vector<8x16x4xf32>
    tpu.vector_store %arg25[%c0_55, %c0_56, %c0_57], %97 {strides = array<i32>} : memref<8x16x4xf32, #tpu.memory_space<vmem>>, vector<8x16x4xf32>,
    return
  }
  func.func @transform_0(%arg0: i32, %arg1: i32) -> (i32, i32, i32, i32) {
    %c1_i32 = arith.constant 1 : i32
    %0 = arith.minsi %arg1, %c1_i32 : i32
    %c0_i32 = arith.constant 0 : i32
    %c0_i32_0 = arith.constant 0 : i32
    %c0_i32_1 = arith.constant 0 : i32
    return %arg0, %0, %c0_i32, %c0_i32_0 : i32, i32, i32, i32
  }
  func.func @transform_1(%arg0: i32, %arg1: i32) -> (i32, i32, i32) {
    %c0_i32 = arith.constant 0 : i32
    %c0_i32_0 = arith.constant 0 : i32
    %c0_i32_1 = arith.constant 0 : i32
    return %arg0, %c0_i32, %c0_i32_0 : i32, i32, i32
  }
  func.func @transform_2(%arg0: i32, %arg1: i32) -> (i32, i32) {
    %c0_i32 = arith.constant 0 : i32
    %c0_i32_0 = arith.constant 0 : i32
    %c0_i32_1 = arith.constant 0 : i32
    return %c0_i32, %c0_i32_0 : i32, i32
  }
  func.func @transform_3(%arg0: i32, %arg1: i32) -> (i32, i32) {
    %c0_i32 = arith.constant 0 : i32
    %c0_i32_0 = arith.constant 0 : i32
    %c0_i32_1 = arith.constant 0 : i32
    return %c0_i32, %c0_i32_0 : i32, i32
  }
  func.func @transform_4(%arg0: i32, %arg1: i32) -> (i32, i32) {
    %c0_i32 = arith.constant 0 : i32
    %c0_i32_0 = arith.constant 0 : i32
    %c0_i32_1 = arith.constant 0 : i32
    return %c0_i32, %c0_i32_0 : i32, i32
  }
  func.func @transform_5(%arg0: i32, %arg1: i32) -> (i32, i32) {
    %c0_i32 = arith.constant 0 : i32
    %c0_i32_0 = arith.constant 0 : i32
    %c0_i32_1 = arith.constant 0 : i32
    return %c0_i32, %c0_i32_0 : i32, i32
  }
  func.func @transform_6(%arg0: i32, %arg1: i32) -> (i32, i32) {
    %c0_i32 = arith.constant 0 : i32
    %c0_i32_0 = arith.constant 0 : i32
    %c0_i32_1 = arith.constant 0 : i32
    return %c0_i32, %c0_i32_0 : i32, i32
  }
  func.func @transform_7(%arg0: i32, %arg1: i32) -> (i32, i32) {
    %c0_i32 = arith.constant 0 : i32
    %c0_i32_0 = arith.constant 0 : i32
    %c0_i32_1 = arith.constant 0 : i32
    return %c0_i32, %c0_i32_0 : i32, i32
  }
  func.func @transform_8(%arg0: i32, %arg1: i32) -> (i32, i32) {
    %c0_i32 = arith.constant 0 : i32
    %c0_i32_0 = arith.constant 0 : i32
    %c0_i32_1 = arith.constant 0 : i32
    return %c0_i32, %c0_i32_0 : i32, i32
  }
  func.func @transform_9(%arg0: i32, %arg1: i32) -> (i32, i32) {
    %c0_i32 = arith.constant 0 : i32
    %c0_i32_0 = arith.constant 0 : i32
    %c0_i32_1 = arith.constant 0 : i32
    return %c0_i32, %c0_i32_0 : i32, i32
  }
  func.func @transform_10(%arg0: i32, %arg1: i32) -> (i32, i32) {
    %c0_i32 = arith.constant 0 : i32
    %c0_i32_0 = arith.constant 0 : i32
    %c0_i32_1 = arith.constant 0 : i32
    return %c0_i32, %c0_i32_0 : i32, i32
  }
  func.func @transform_11(%arg0: i32, %arg1: i32) -> (i32, i32) {
    %c0_i32 = arith.constant 0 : i32
    %c0_i32_0 = arith.constant 0 : i32
    %c0_i32_1 = arith.constant 0 : i32
    return %c0_i32, %c0_i32_0 : i32, i32
  }
  func.func @transform_12(%arg0: i32, %arg1: i32) -> (i32, i32) {
    %c0_i32 = arith.constant 0 : i32
    %c0_i32_0 = arith.constant 0 : i32
    %c0_i32_1 = arith.constant 0 : i32
    return %c0_i32, %c0_i32_0 : i32, i32
  }
  func.func @transform_13(%arg0: i32, %arg1: i32) -> (i32, i32) {
    %c0_i32 = arith.constant 0 : i32
    %c0_i32_0 = arith.constant 0 : i32
    %c0_i32_1 = arith.constant 0 : i32
    return %c0_i32, %c0_i32_0 : i32, i32
  }
  func.func @transform_14(%arg0: i32, %arg1: i32) -> (i32, i32) {
    %c0_i32 = arith.constant 0 : i32
    %c0_i32_0 = arith.constant 0 : i32
    %c0_i32_1 = arith.constant 0 : i32
    return %c0_i32, %c0_i32_0 : i32, i32
  }
  func.func @transform_15(%arg0: i32, %arg1: i32) -> (i32, i32) {
    %c0_i32 = arith.constant 0 : i32
    %c0_i32_0 = arith.constant 0 : i32
    %c0_i32_1 = arith.constant 0 : i32
    return %c0_i32, %c0_i32_0 : i32, i32
  }
  func.func @transform_16(%arg0: i32, %arg1: i32) -> (i32, i32) {
    %c0_i32 = arith.constant 0 : i32
    %c0_i32_0 = arith.constant 0 : i32
    %c0_i32_1 = arith.constant 0 : i32
    return %c0_i32, %c0_i32_0 : i32, i32
  }
  func.func @transform_17(%arg0: i32, %arg1: i32) -> (i32, i32) {
    %c0_i32 = arith.constant 0 : i32
    %c0_i32_0 = arith.constant 0 : i32
    %c0_i32_1 = arith.constant 0 : i32
    return %c0_i32, %c0_i32_0 : i32, i32
  }
  func.func @transform_18(%arg0: i32, %arg1: i32) -> (i32, i32) {
    %c0_i32 = arith.constant 0 : i32
    %c0_i32_0 = arith.constant 0 : i32
    %c0_i32_1 = arith.constant 0 : i32
    return %c0_i32, %c0_i32_0 : i32, i32
  }
  func.func @transform_19(%arg0: i32, %arg1: i32) -> (i32, i32) {
    %c0_i32 = arith.constant 0 : i32
    %c0_i32_0 = arith.constant 0 : i32
    %c0_i32_1 = arith.constant 0 : i32
    return %c0_i32, %c0_i32_0 : i32, i32
  }
  func.func @transform_20(%arg0: i32, %arg1: i32) -> (i32, i32) {
    %c0_i32 = arith.constant 0 : i32
    %c0_i32_0 = arith.constant 0 : i32
    %c0_i32_1 = arith.constant 0 : i32
    return %c0_i32, %c0_i32_0 : i32, i32
  }
  func.func @transform_21(%arg0: i32, %arg1: i32) -> (i32, i32, i32, i32) {
    %c1_i32 = arith.constant 1 : i32
    %0 = arith.subi %arg1, %c1_i32 : i32
    %c0_i32 = arith.constant 0 : i32
    %1 = arith.maxsi %0, %c0_i32 : i32
    %c0_i32_0 = arith.constant 0 : i32
    %c0_i32_1 = arith.constant 0 : i32
    %c0_i32_2 = arith.constant 0 : i32
    return %arg0, %1, %c0_i32_0, %c0_i32_1 : i32, i32, i32, i32
  }
}

</mosaic_0001>

<llo_original>
// kernel: tpu_custom_call.1
$region0: #{tpu_custom_call.1}
  #allocation0 [shape = 'u32[]', space=smem, size = 0x4, offset = 0x4, fixed_abs, tag = 'smem constant byte address 0x4 - core index']
  #allocation1 [shape = 'u32[144,128]{1,0:T(1,128)}', space=vmem, size = 0x12000, scoped, tag = 'internal scratch']
  #allocation2 [shape = 'f32[10,16,8]{2,1,0:T(8,128)}', space=vmem, size = 0x14000, scoped, tag = 'scratch operand']
  #allocation3 [shape = 'f32[8,16,4]{2,1,0:T(8,128)}', space=vmem, size = 0x10000, scoped, tag = 'scratch operand']
  %s0 = inlined_call_operand.vmem [shape: f32[2,16,16,4], index: 0, kind: input, shape index: {}]
  %s1 = inlined_call_operand.vmem [shape: f32[2,1,4], index: 1, kind: input, shape index: {}]
  %s2 = inlined_call_operand.vmem [shape: f32[1,4], index: 2, kind: input, shape index: {}]
  %s3 = inlined_call_operand.vmem [shape: f32[1,4], index: 3, kind: input, shape index: {}]
  %s4 = inlined_call_operand.vmem [shape: f32[4,8], index: 4, kind: input, shape index: {}]
  %s5 = inlined_call_operand.vmem [shape: f32[1,8], index: 5, kind: input, shape index: {}]
  %s6 = inlined_call_operand.vmem [shape: f32[1,8], index: 6, kind: input, shape index: {}]
  %s7 = inlined_call_operand.vmem [shape: f32[9,8], index: 7, kind: input, shape index: {}]
  %s8 = inlined_call_operand.vmem [shape: f32[1,8], index: 8, kind: input, shape index: {}]
  %s9 = inlined_call_operand.vmem [shape: f32[1,8], index: 9, kind: input, shape index: {}]
  %s10 = inlined_call_operand.vmem [shape: f32[8,4], index: 10, kind: input, shape index: {}]
  %s11 = inlined_call_operand.vmem [shape: f32[1,4], index: 11, kind: input, shape index: {}]
  %s12 = inlined_call_operand.vmem [shape: f32[1,4], index: 12, kind: input, shape index: {}]
  %s13 = inlined_call_operand.vmem [shape: f32[1,4], index: 13, kind: input, shape index: {}]
  %s14 = inlined_call_operand.vmem [shape: f32[1,4], index: 14, kind: input, shape index: {}]
  %s15 = inlined_call_operand.vmem [shape: f32[4,4], index: 15, kind: input, shape index: {}]
  %s16 = inlined_call_operand.vmem [shape: f32[1,4], index: 16, kind: input, shape index: {}]
  %s17 = inlined_call_operand.vmem [shape: f32[4,4], index: 17, kind: input, shape index: {}]
  %s18 = inlined_call_operand.vmem [shape: f32[1,4], index: 18, kind: input, shape index: {}]
  %s19 = inlined_call_operand.vmem [shape: f32[4,4], index: 19, kind: input, shape index: {}]
  %s20 = inlined_call_operand.vmem [shape: f32[1,4], index: 20, kind: input, shape index: {}]
  %s21 = inlined_call_operand.vmem [shape: f32[2,16,16,4], index: 21, kind: output, shape index: {}]
  %s22 = sld [smem:[#allocation0]]
  $region121: #{tpu_custom_call.1} parent=0
    _
  %s24 = ssub.s32 1, %s22
  %s25 = scalar_select 0, %s24, %s22
  loop: start=0, step=1, limit=8
  $region2: #{tpu_custom_call.1} parent=0 // loop_pre_header
    _
  $region3: #{tpu_custom_call.1} parent=0 // loop_header
    %s27 = sphi 0, %s31
    %p28 = scmp.ge.s32.totalorder %s27, 8
    %s34 = sphi 0, %s46
    %s35 = sphi 0, %s42
    %s36 = sphi 0, %s34
    %s37 = sphi 0, %s35
    %s38 = sphi 0, %s36
    %s39 = sphi 0, %s37
    %s55 = sphi 0, %s57
    %s58 = sphi 0, %s55
    %s59 = sphi 0, %s58
    %s75 = sphi 0, %s59
    %s81 = sphi 0, %s83
    %s84 = sphi 0, %s81
    %s85 = sphi 0, %s84
    %s101 = sphi 0, %s85
    %s105 = sphi 0, %s105
    %s107 = sphi 0, %s105
    %s108 = sphi 0, %s107
    %s122 = sphi 0, %s108
    %s126 = sphi 0, %s126
    %s128 = sphi 0, %s126
    %s129 = sphi 0, %s128
    %s143 = sphi 0, %s129
    %s147 = sphi 0, %s147
    %s149 = sphi 0, %s147
    %s150 = sphi 0, %s149
    %s164 = sphi 0, %s150
    %s168 = sphi 0, %s168
    %s170 = sphi 0, %s168
    %s171 = sphi 0, %s170
    %s185 = sphi 0, %s171
    %s189 = sphi 0, %s189
    %s191 = sphi 0, %s189
    %s192 = sphi 0, %s191
    %s206 = sphi 0, %s192
    %s210 = sphi 0, %s210
    %s212 = sphi 0, %s210
    %s213 = sphi 0, %s212
    %s227 = sphi 0, %s213
    %s231 = sphi 0, %s231
    %s233 = sphi 0, %s231
    %s234 = sphi 0, %s233
    %s248 = sphi 0, %s234
    %s252 = sphi 0, %s252
    %s254 = sphi 0, %s252
    %s255 = sphi 0, %s254
    %s269 = sphi 0, %s255
    %s273 = sphi 0, %s273
    %s275 = sphi 0, %s273
    %s276 = sphi 0, %s275
    %s290 = sphi 0, %s276
    %s294 = sphi 0, %s294
    %s296 = sphi 0, %s294
    %s297 = sphi 0, %s296
    %s311 = sphi 0, %s297
    %s315 = sphi 0, %s315
    %s317 = sphi 0, %s315
    %s318 = sphi 0, %s317
    %s332 = sphi 0, %s318
    %s336 = sphi 0, %s336
    %s338 = sphi 0, %s336
    %s339 = sphi 0, %s338
    %s353 = sphi 0, %s339
    %s357 = sphi 0, %s357
    %s359 = sphi 0, %s357
    %s360 = sphi 0, %s359
    %s374 = sphi 0, %s360
    %s378 = sphi 0, %s378
    %s380 = sphi 0, %s378
    %s381 = sphi 0, %s380
    %s395 = sphi 0, %s381
    %s399 = sphi 0, %s399
    %s401 = sphi 0, %s399
    %s402 = sphi 0, %s401
    %s416 = sphi 0, %s402
    %s420 = sphi 0, %s420
    %s422 = sphi 0, %s420
    %s423 = sphi 0, %s422
    %s437 = sphi 0, %s423
    %s441 = sphi 0, %s441
    %s443 = sphi 0, %s441
    %s444 = sphi 0, %s443
    %s458 = sphi 0, %s444
    %s462 = sphi 0, %s462
    %s464 = sphi 0, %s462
    %s465 = sphi 0, %s464
    %s479 = sphi 0, %s465
    %s483 = sphi 0, %s483
    %s485 = sphi 0, %s483
    %s486 = sphi 0, %s485
    %s500 = sphi 0, %s486
    %s514 = sphi 0, %s516
    %s517 = sphi 0, %s514
    %s518 = sphi 0, %s517
    %s534 = sphi 0, %s518
  $region4: #{tpu_custom_call.1} parent=0 // loop_header_branch
    %30 = sbr.rel (%p28) target = $region8
  $region5: #{tpu_custom_call.1} parent=0 // loop_body
    %s32 = ssub.s32 %s27, 1
    %s33 = ssub.s32 %s27, 2
    %s40 = sadd.s32 1, %s35
    %p41 = scmp.ge.s32.totalorder %s40, 3
    %s42 = scalar_select %p41, 0, %s40
    %s43 = sadd.s32 1, %s34
    %s44 = scalar_select %p41, %s43, %s34
    %p45 = scmp.ge.s32.totalorder %s44, 2
    %s46 = scalar_select %p45, 0, %s44
    %p47 = scmp.lt.s32.totalorder %s35, 1
    %s48 = scalar_select %p47, %s35, 1
    %p49 = scmp.lt.s32.totalorder %s42, 1
    %s50 = scalar_select %p49, %s42, 1
    %s51 = ssub.s32 %s34, %s46
    %s52 = ssub.s32 %s48, %s50
    %s53 = sor.u32 %s51, %s52
    %p54 = scmp.eq.s32.totalorder %s53, 0
    %s56 = sadd.s32 %s55, 1
    %s57 = scalar_select %p54, %s55, %s56
    %p60 = pneg %p54
    %p61 = scmp.eq.s32.totalorder %s27, 5
    %p62 = por %p60, %p61
    %p63 = scmp.ne.s32.totalorder %s55, %s58
    %p64 = scmp.eq.s32.totalorder %s27, 0
    %p65 = por %p63, %p64
    %p66 = scmp.ne.s32.totalorder %s55, %s58
    %p67 = scmp.eq.s32.totalorder %s32, 5
    %p68 = por %p66, %p67
    %p69 = scmp.ne.s32.totalorder %s58, %s59
    %p70 = scmp.eq.s32.totalorder %s32, 0
    %p71 = por %p69, %p70
    %p72 = scmp.ne.s32.totalorder %s58, %s59
    %p73 = scmp.eq.s32.totalorder %s33, 5
    %p74 = por %p72, %p73
    %p76 = scmp.ne.s32.totalorder %s59, %s75
    %p77 = scmp.eq.s32.totalorder %s33, 0
    %p78 = por %p76, %p77
    %s79 = ssub.s32 %s34, %s46
    %p80 = scmp.eq.s32.totalorder %s79, 0
    %s82 = sadd.s32 %s81, 1
    %s83 = scalar_select %p80, %s81, %s82
    %p86 = pneg %p80
    %p87 = scmp.eq.s32.totalorder %s27, 5
    %p88 = por %p86, %p87
    %p89 = scmp.ne.s32.totalorder %s81, %s84
    %p90 = scmp.eq.s32.totalorder %s27, 0
    %p91 = por %p89, %p90
    %p92 = scmp.ne.s32.totalorder %s81, %s84
    %p93 = scmp.eq.s32.totalorder %s32, 5
    %p94 = por %p92, %p93
    %p95 = scmp.ne.s32.totalorder %s84, %s85
    %p96 = scmp.eq.s32.totalorder %s32, 0
    %p97 = por %p95, %p96
    %p98 = scmp.ne.s32.totalorder %s84, %s85
    %p99 = scmp.eq.s32.totalorder %s33, 5
    %p100 = por %p98, %p99
    %p102 = scmp.ne.s32.totalorder %s85, %s101
    %p103 = scmp.eq.s32.totalorder %s33, 0
    %p104 = por %p102, %p103
    %s106 = sadd.s32 %s105, 1
    %p109 = scmp.eq.s32.totalorder %s27, 5
    %p110 = scmp.ne.s32.totalorder %s105, %s107
    %p111 = scmp.eq.s32.totalorder %s27, 0
    %p112 = por %p110, %p111
    %p113 = scmp.ne.s32.totalorder %s105, %s107
    %p114 = scmp.eq.s32.totalorder %s32, 5
    %p115 = por %p113, %p114
    %p116 = scmp.ne.s32.totalorder %s107, %s108
    %p117 = scmp.eq.s32.totalorder %s32, 0
    %p118 = por %p116, %p117
    %p119 = scmp.ne.s32.totalorder %s107, %s108
    %p120 = scmp.eq.s32.totalorder %s33, 5
    %p121 = por %p119, %p120
    %p123 = scmp.ne.s32.totalorder %s108, %s122
    %p124 = scmp.eq.s32.totalorder %s33, 0
    %p125 = por %p123, %p124
    %s127 = sadd.s32 %s126, 1
    %p130 = scmp.eq.s32.totalorder %s27, 5
    %p131 = scmp.ne.s32.totalorder %s126, %s128
    %p132 = scmp.eq.s32.totalorder %s27, 0
    %p133 = por %p131, %p132
    %p134 = scmp.ne.s32.totalorder %s126, %s128
    %p135 = scmp.eq.s32.totalorder %s32, 5
    %p136 = por %p134, %p135
    %p137 = scmp.ne.s32.totalorder %s128, %s129
    %p138 = scmp.eq.s32.totalorder %s32, 0
    %p139 = por %p137, %p138
    %p140 = scmp.ne.s32.totalorder %s128, %s129
    %p141 = scmp.eq.s32.totalorder %s33, 5
    %p142 = por %p140, %p141
    %p144 = scmp.ne.s32.totalorder %s129, %s143
    %p145 = scmp.eq.s32.totalorder %s33, 0
    %p146 = por %p144, %p145
    %s148 = sadd.s32 %s147, 1
    %p151 = scmp.eq.s32.totalorder %s27, 5
    %p152 = scmp.ne.s32.totalorder %s147, %s149
    %p153 = scmp.eq.s32.totalorder %s27, 0
    %p154 = por %p152, %p153
    %p155 = scmp.ne.s32.totalorder %s147, %s149
    %p156 = scmp.eq.s32.totalorder %s32, 5
    %p157 = por %p155, %p156
    %p158 = scmp.ne.s32.totalorder %s149, %s150
    %p159 = scmp.eq.s32.totalorder %s32, 0
    %p160 = por %p158, %p159
    %p161 = scmp.ne.s32.totalorder %s149, %s150
    %p162 = scmp.eq.s32.totalorder %s33, 5
    %p163 = por %p161, %p162
    %p165 = scmp.ne.s32.totalorder %s150, %s164
    %p166 = scmp.eq.s32.totalorder %s33, 0
    %p167 = por %p165, %p166
    %s169 = sadd.s32 %s168, 1
    %p172 = scmp.eq.s32.totalorder %s27, 5
    %p173 = scmp.ne.s32.totalorder %s168, %s170
    %p174 = scmp.eq.s32.totalorder %s27, 0
    %p175 = por %p173, %p174
    %p176 = scmp.ne.s32.totalorder %s168, %s170
    %p177 = scmp.eq.s32.totalorder %s32, 5
    %p178 = por %p176, %p177
    %p179 = scmp.ne.s32.totalorder %s170, %s171
    %p180 = scmp.eq.s32.totalorder %s32, 0
    %p181 = por %p179, %p180
    %p182 = scmp.ne.s32.totalorder %s170, %s171
    %p183 = scmp.eq.s32.totalorder %s33, 5
    %p184 = por %p182, %p183
    %p186 = scmp.ne.s32.totalorder %s171, %s185
    %p187 = scmp.eq.s32.totalorder %s33, 0
    %p188 = por %p186, %p187
    %s190 = sadd.s32 %s189, 1
    %p193 = scmp.eq.s32.totalorder %s27, 5
    %p194 = scmp.ne.s32.totalorder %s189, %s191
    %p195 = scmp.eq.s32.totalorder %s27, 0
    %p196 = por %p194, %p195
    %p197 = scmp.ne.s32.totalorder %s189, %s191
    %p198 = scmp.eq.s32.totalorder %s32, 5
    %p199 = por %p197, %p198
    %p200 = scmp.ne.s32.totalorder %s191, %s192
    %p201 = scmp.eq.s32.totalorder %s32, 0
    %p202 = por %p200, %p201
    %p203 = scmp.ne.s32.totalorder %s191, %s192
    %p204 = scmp.eq.s32.totalorder %s33, 5
    %p205 = por %p203, %p204
    %p207 = scmp.ne.s32.totalorder %s192, %s206
    %p208 = scmp.eq.s32.totalorder %s33, 0
    %p209 = por %p207, %p208
    %s211 = sadd.s32 %s210, 1
    %p214 = scmp.eq.s32.totalorder %s27, 5
    %p215 = scmp.ne.s32.totalorder %s210, %s212
    %p216 = scmp.eq.s32.totalorder %s27, 0
    %p217 = por %p215, %p216
    %p218 = scmp.ne.s32.totalorder %s210, %s212
    %p219 = scmp.eq.s32.totalorder %s32, 5
    %p220 = por %p218, %p219
    %p221 = scmp.ne.s32.totalorder %s212, %s213
    %p222 = scmp.eq.s32.totalorder %s32, 0
    %p223 = por %p221, %p222
    %p224 = scmp.ne.s32.totalorder %s212, %s213
    %p225 = scmp.eq.s32.totalorder %s33, 5
    %p226 = por %p224, %p225
    %p228 = scmp.ne.s32.totalorder %s213, %s227
    %p229 = scmp.eq.s32.totalorder %s33, 0
    %p230 = por %p228, %p229
    %s232 = sadd.s32 %s231, 1
    %p235 = scmp.eq.s32.totalorder %s27, 5
    %p236 = scmp.ne.s32.totalorder %s231, %s233
    %p237 = scmp.eq.s32.totalorder %s27, 0
    %p238 = por %p236, %p237
    %p239 = scmp.ne.s32.totalorder %s231, %s233
    %p240 = scmp.eq.s32.totalorder %s32, 5
    %p241 = por %p239, %p240
    %p242 = scmp.ne.s32.totalorder %s233, %s234
    %p243 = scmp.eq.s32.totalorder %s32, 0
    %p244 = por %p242, %p243
    %p245 = scmp.ne.s32.totalorder %s233, %s234
    %p246 = scmp.eq.s32.totalorder %s33, 5
    %p247 = por %p245, %p246
    %p249 = scmp.ne.s32.totalorder %s234, %s248
    %p250 = scmp.eq.s32.totalorder %s33, 0
    %p251 = por %p249, %p250
    %s253 = sadd.s32 %s252, 1
    %p256 = scmp.eq.s32.totalorder %s27, 5
    %p257 = scmp.ne.s32.totalorder %s252, %s254
    %p258 = scmp.eq.s32.totalorder %s27, 0
    %p259 = por %p257, %p258
    %p260 = scmp.ne.s32.totalorder %s252, %s254
    %p261 = scmp.eq.s32.totalorder %s32, 5
    %p262 = por %p260, %p261
    %p263 = scmp.ne.s32.totalorder %s254, %s255
    %p264 = scmp.eq.s32.totalorder %s32, 0
    %p265 = por %p263, %p264
    %p266 = scmp.ne.s32.totalorder %s254, %s255
    %p267 = scmp.eq.s32.totalorder %s33, 5
    %p268 = por %p266, %p267
    %p270 = scmp.ne.s32.totalorder %s255, %s269
    %p271 = scmp.eq.s32.totalorder %s33, 0
    %p272 = por %p270, %p271
    %s274 = sadd.s32 %s273, 1
    %p277 = scmp.eq.s32.totalorder %s27, 5
    %p278 = scmp.ne.s32.totalorder %s273, %s275
    %p279 = scmp.eq.s32.totalorder %s27, 0
    %p280 = por %p278, %p279
    %p281 = scmp.ne.s32.totalorder %s273, %s275
    %p282 = scmp.eq.s32.totalorder %s32, 5
    %p283 = por %p281, %p282
    %p284 = scmp.ne.s32.totalorder %s275, %s276
    %p285 = scmp.eq.s32.totalorder %s32, 0
    %p286 = por %p284, %p285
    %p287 = scmp.ne.s32.totalorder %s275, %s276
    %p288 = scmp.eq.s32.totalorder %s33, 5
    %p289 = por %p287, %p288
    %p291 = scmp.ne.s32.totalorder %s276, %s290
    %p292 = scmp.eq.s32.totalorder %s33, 0
    %p293 = por %p291, %p292
    %s295 = sadd.s32 %s294, 1
    %p298 = scmp.eq.s32.totalorder %s27, 5
    %p299 = scmp.ne.s32.totalorder %s294, %s296
    %p300 = scmp.eq.s32.totalorder %s27, 0
    %p301 = por %p299, %p300
    %p302 = scmp.ne.s32.totalorder %s294, %s296
    %p303 = scmp.eq.s32.totalorder %s32, 5
    %p304 = por %p302, %p303
    %p305 = scmp.ne.s32.totalorder %s296, %s297
    %p306 = scmp.eq.s32.totalorder %s32, 0
    %p307 = por %p305, %p306
    %p308 = scmp.ne.s32.totalorder %s296, %s297
    %p309 = scmp.eq.s32.totalorder %s33, 5
    %p310 = por %p308, %p309
    %p312 = scmp.ne.s32.totalorder %s297, %s311
    %p313 = scmp.eq.s32.totalorder %s33, 0
    %p314 = por %p312, %p313
    %s316 = sadd.s32 %s315, 1
    %p319 = scmp.eq.s32.totalorder %s27, 5
    %p320 = scmp.ne.s32.totalorder %s315, %s317
    %p321 = scmp.eq.s32.totalorder %s27, 0
    %p322 = por %p320, %p321
    %p323 = scmp.ne.s32.totalorder %s315, %s317
    %p324 = scmp.eq.s32.totalorder %s32, 5
    %p325 = por %p323, %p324
    %p326 = scmp.ne.s32.totalorder %s317, %s318
    %p327 = scmp.eq.s32.totalorder %s32, 0
    %p328 = por %p326, %p327
    %p329 = scmp.ne.s32.totalorder %s317, %s318
    %p330 = scmp.eq.s32.totalorder %s33, 5
    %p331 = por %p329, %p330
    %p333 = scmp.ne.s32.totalorder %s318, %s332
    %p334 = scmp.eq.s32.totalorder %s33, 0
    %p335 = por %p333, %p334
    %s337 = sadd.s32 %s336, 1
    %p340 = scmp.eq.s32.totalorder %s27, 5
    %p341 = scmp.ne.s32.totalorder %s336, %s338
    %p342 = scmp.eq.s32.totalorder %s27, 0
    %p343 = por %p341, %p342
    %p344 = scmp.ne.s32.totalorder %s336, %s338
    %p345 = scmp.eq.s32.totalorder %s32, 5
    %p346 = por %p344, %p345
    %p347 = scmp.ne.s32.totalorder %s338, %s339
    %p348 = scmp.eq.s32.totalorder %s32, 0
    %p349 = por %p347, %p348
    %p350 = scmp.ne.s32.totalorder %s338, %s339
    %p351 = scmp.eq.s32.totalorder %s33, 5
    %p352 = por %p350, %p351
    %p354 = scmp.ne.s32.totalorder %s339, %s353
    %p355 = scmp.eq.s32.totalorder %s33, 0
    %p356 = por %p354, %p355
    %s358 = sadd.s32 %s357, 1
    %p361 = scmp.eq.s32.totalorder %s27, 5
    %p362 = scmp.ne.s32.totalorder %s357, %s359
    %p363 = scmp.eq.s32.totalorder %s27, 0
    %p364 = por %p362, %p363
    %p365 = scmp.ne.s32.totalorder %s357, %s359
    %p366 = scmp.eq.s32.totalorder %s32, 5
    %p367 = por %p365, %p366
    %p368 = scmp.ne.s32.totalorder %s359, %s360
    %p369 = scmp.eq.s32.totalorder %s32, 0
    %p370 = por %p368, %p369
    %p371 = scmp.ne.s32.totalorder %s359, %s360
    %p372 = scmp.eq.s32.totalorder %s33, 5
    %p373 = por %p371, %p372
    %p375 = scmp.ne.s32.totalorder %s360, %s374
    %p376 = scmp.eq.s32.totalorder %s33, 0
    %p377 = por %p375, %p376
    %s379 = sadd.s32 %s378, 1
    %p382 = scmp.eq.s32.totalorder %s27, 5
    %p383 = scmp.ne.s32.totalorder %s378, %s380
    %p384 = scmp.eq.s32.totalorder %s27, 0
    %p385 = por %p383, %p384
    %p386 = scmp.ne.s32.totalorder %s378, %s380
    %p387 = scmp.eq.s32.totalorder %s32, 5
    %p388 = por %p386, %p387
    %p389 = scmp.ne.s32.totalorder %s380, %s381
    %p390 = scmp.eq.s32.totalorder %s32, 0
    %p391 = por %p389, %p390
    %p392 = scmp.ne.s32.totalorder %s380, %s381
    %p393 = scmp.eq.s32.totalorder %s33, 5
    %p394 = por %p392, %p393
    %p396 = scmp.ne.s32.totalorder %s381, %s395
    %p397 = scmp.eq.s32.totalorder %s33, 0
    %p398 = por %p396, %p397
    %s400 = sadd.s32 %s399, 1
    %p403 = scmp.eq.s32.totalorder %s27, 5
    %p404 = scmp.ne.s32.totalorder %s399, %s401
    %p405 = scmp.eq.s32.totalorder %s27, 0
    %p406 = por %p404, %p405
    %p407 = scmp.ne.s32.totalorder %s399, %s401
    %p408 = scmp.eq.s32.totalorder %s32, 5
    %p409 = por %p407, %p408
    %p410 = scmp.ne.s32.totalorder %s401, %s402
    %p411 = scmp.eq.s32.totalorder %s32, 0
    %p412 = por %p410, %p411
    %p413 = scmp.ne.s32.totalorder %s401, %s402
    %p414 = scmp.eq.s32.totalorder %s33, 5
    %p415 = por %p413, %p414
    %p417 = scmp.ne.s32.totalorder %s402, %s416
    %p418 = scmp.eq.s32.totalorder %s33, 0
    %p419 = por %p417, %p418
    %s421 = sadd.s32 %s420, 1
    %p424 = scmp.eq.s32.totalorder %s27, 5
    %p425 = scmp.ne.s32.totalorder %s420, %s422
    %p426 = scmp.eq.s32.totalorder %s27, 0
    %p427 = por %p425, %p426
    %p428 = scmp.ne.s32.totalorder %s420, %s422
    %p429 = scmp.eq.s32.totalorder %s32, 5
    %p430 = por %p428, %p429
    %p431 = scmp.ne.s32.totalorder %s422, %s423
    %p432 = scmp.eq.s32.totalorder %s32, 0
    %p433 = por %p431, %p432
    %p434 = scmp.ne.s32.totalorder %s422, %s423
    %p435 = scmp.eq.s32.totalorder %s33, 5
    %p436 = por %p434, %p435
    %p438 = scmp.ne.s32.totalorder %s423, %s437
    %p439 = scmp.eq.s32.totalorder %s33, 0
    %p440 = por %p438, %p439
    %s442 = sadd.s32 %s441, 1
    %p445 = scmp.eq.s32.totalorder %s27, 5
    %p446 = scmp.ne.s32.totalorder %s441, %s443
    %p447 = scmp.eq.s32.totalorder %s27, 0
    %p448 = por %p446, %p447
    %p449 = scmp.ne.s32.totalorder %s441, %s443
    %p450 = scmp.eq.s32.totalorder %s32, 5
    %p451 = por %p449, %p450
    %p452 = scmp.ne.s32.totalorder %s443, %s444
    %p453 = scmp.eq.s32.totalorder %s32, 0
    %p454 = por %p452, %p453
    %p455 = scmp.ne.s32.totalorder %s443, %s444
    %p456 = scmp.eq.s32.totalorder %s33, 5
    %p457 = por %p455, %p456
    %p459 = scmp.ne.s32.totalorder %s444, %s458
    %p460 = scmp.eq.s32.totalorder %s33, 0
    %p461 = por %p459, %p460
    %s463 = sadd.s32 %s462, 1
    %p466 = scmp.eq.s32.totalorder %s27, 5
    %p467 = scmp.ne.s32.totalorder %s462, %s464
    %p468 = scmp.eq.s32.totalorder %s27, 0
    %p469 = por %p467, %p468
    %p470 = scmp.ne.s32.totalorder %s462, %s464
    %p471 = scmp.eq.s32.totalorder %s32, 5
    %p472 = por %p470, %p471
    %p473 = scmp.ne.s32.totalorder %s464, %s465
    %p474 = scmp.eq.s32.totalorder %s32, 0
    %p475 = por %p473, %p474
    %p476 = scmp.ne.s32.totalorder %s464, %s465
    %p477 = scmp.eq.s32.totalorder %s33, 5
    %p478 = por %p476, %p477
    %p480 = scmp.ne.s32.totalorder %s465, %s479
    %p481 = scmp.eq.s32.totalorder %s33, 0
    %p482 = por %p480, %p481
    %s484 = sadd.s32 %s483, 1
    %p487 = scmp.eq.s32.totalorder %s27, 5
    %p488 = scmp.ne.s32.totalorder %s483, %s485
    %p489 = scmp.eq.s32.totalorder %s27, 0
    %p490 = por %p488, %p489
    %p491 = scmp.ne.s32.totalorder %s483, %s485
    %p492 = scmp.eq.s32.totalorder %s32, 5
    %p493 = por %p491, %p492
    %p494 = scmp.ne.s32.totalorder %s485, %s486
    %p495 = scmp.eq.s32.totalorder %s32, 0
    %p496 = por %p494, %p495
    %p497 = scmp.ne.s32.totalorder %s485, %s486
    %p498 = scmp.eq.s32.totalorder %s33, 5
    %p499 = por %p497, %p498
    %p501 = scmp.ne.s32.totalorder %s486, %s500
    %p502 = scmp.eq.s32.totalorder %s33, 0
    %p503 = por %p501, %p502
    %s504 = ssub.s32 %s35, 1
    %p505 = scmp.gt.s32.totalorder %s504, 0
    %s506 = scalar_select %p505, %s504, 0
    %s507 = ssub.s32 %s42, 1
    %p508 = scmp.gt.s32.totalorder %s507, 0
    %s509 = scalar_select %p508, %s507, 0
    %s510 = ssub.s32 %s34, %s46
    %s511 = ssub.s32 %s506, %s509
    %s512 = sor.u32 %s510, %s511
    %p513 = scmp.eq.s32.totalorder %s512, 0
    %s515 = sadd.s32 %s514, 1
    %s516 = scalar_select %p513, %s514, %s515
    %p519 = pneg %p513
    %p520 = scmp.eq.s32.totalorder %s27, 5
    %p521 = por %p519, %p520
    %p522 = scmp.ne.s32.totalorder %s514, %s517
    %p523 = scmp.eq.s32.totalorder %s27, 0
    %p524 = por %p522, %p523
    %p525 = scmp.ne.s32.totalorder %s514, %s517
    %p526 = scmp.eq.s32.totalorder %s32, 5
    %p527 = por %p525, %p526
    %p528 = scmp.ne.s32.totalorder %s517, %s518
    %p529 = scmp.eq.s32.totalorder %s32, 0
    %p530 = por %p528, %p529
    %p531 = scmp.ne.s32.totalorder %s517, %s518
    %p532 = scmp.eq.s32.totalorder %s33, 5
    %p533 = por %p531, %p532
    %p535 = scmp.ne.s32.totalorder %s518, %s534
    %p536 = scmp.eq.s32.totalorder %s33, 0
    %p537 = por %p535, %p536
    %p538 = scmp.le.s32.totalorder 1, %s27
    %p539 = scmp.lt.s32.totalorder %s27, 7
    %p540 = pnand %p538, %p539
    %p541 = pneg %p540
    // Predicated region
    $region9: #{tpu_custom_call.1} parent=5 // pred_check
      _
    $region10: #{tpu_custom_call.1} parent=5 // pred_check_branch
      %543 = sbr.rel (%p540) target = $region12
    $region11: #{tpu_custom_call.1} parent=5 // pred_region
      %s544 = ssub.s32 %s27, 1
      // Predicated region
      $region13: #{tpu_custom_call.1} parent=11 // pred_check
        %p545 = pneg %p118
      $region14: #{tpu_custom_call.1} parent=11 // pred_check_branch
        %547 = sbr.rel (%p545) target = $region16
      $region15: #{tpu_custom_call.1} parent=11 // pred_region
        _
      $region16: #{tpu_custom_call.1} parent=11 // pred_fallthru
        _
      // Predicated region
      $region17: #{tpu_custom_call.1} parent=11 // pred_check
        %p548 = pneg %p139
      $region18: #{tpu_custom_call.1} parent=11 // pred_check_branch
        %550 = sbr.rel (%p548) target = $region20
      $region19: #{tpu_custom_call.1} parent=11 // pred_region
        _
      $region20: #{tpu_custom_call.1} parent=11 // pred_fallthru
        _
      // Predicated region
      $region21: #{tpu_custom_call.1} parent=11 // pred_check
        %p551 = pneg %p160
      $region22: #{tpu_custom_call.1} parent=11 // pred_check_branch
        %553 = sbr.rel (%p551) target = $region24
      $region23: #{tpu_custom_call.1} parent=11 // pred_region
        _
      $region24: #{tpu_custom_call.1} parent=11 // pred_fallthru
        _
      // Predicated region
      $region25: #{tpu_custom_call.1} parent=11 // pred_check
        %p554 = pneg %p181
      $region26: #{tpu_custom_call.1} parent=11 // pred_check_branch
        %556 = sbr.rel (%p554) target = $region28
      $region27: #{tpu_custom_call.1} parent=11 // pred_region
        _
      $region28: #{tpu_custom_call.1} parent=11 // pred_fallthru
        _
      // Predicated region
      $region29: #{tpu_custom_call.1} parent=11 // pred_check
        %p557 = pneg %p202
      $region30: #{tpu_custom_call.1} parent=11 // pred_check_branch
        %559 = sbr.rel (%p557) target = $region32
      $region31: #{tpu_custom_call.1} parent=11 // pred_region
        _
      $region32: #{tpu_custom_call.1} parent=11 // pred_fallthru
        _
      // Predicated region
      $region33: #{tpu_custom_call.1} parent=11 // pred_check
        %p560 = pneg %p223
      $region34: #{tpu_custom_call.1} parent=11 // pred_check_branch
        %562 = sbr.rel (%p560) target = $region36
      $region35: #{tpu_custom_call.1} parent=11 // pred_region
        _
      $region36: #{tpu_custom_call.1} parent=11 // pred_fallthru
        _
      // Predicated region
      $region37: #{tpu_custom_call.1} parent=11 // pred_check
        %p563 = pneg %p244
      $region38: #{tpu_custom_call.1} parent=11 // pred_check_branch
        %565 = sbr.rel (%p563) target = $region40
      $region39: #{tpu_custom_call.1} parent=11 // pred_region
        _
      $region40: #{tpu_custom_call.1} parent=11 // pred_fallthru
        _
      // Predicated region
      $region41: #{tpu_custom_call.1} parent=11 // pred_check
        %p566 = pneg %p265
      $region42: #{tpu_custom_call.1} parent=11 // pred_check_branch
        %568 = sbr.rel (%p566) target = $region44
      $region43: #{tpu_custom_call.1} parent=11 // pred_region
        _
      $region44: #{tpu_custom_call.1} parent=11 // pred_fallthru
        _
      // Predicated region
      $region45: #{tpu_custom_call.1} parent=11 // pred_check
        %p569 = pneg %p286
      $region46: #{tpu_custom_call.1} parent=11 // pred_check_branch
        %571 = sbr.rel (%p569) target = $region48
      $region47: #{tpu_custom_call.1} parent=11 // pred_region
        _
      $region48: #{tpu_custom_call.1} parent=11 // pred_fallthru
        _
      // Predicated region
      $region49: #{tpu_custom_call.1} parent=11 // pred_check
        %p572 = pneg %p307
      $region50: #{tpu_custom_call.1} parent=11 // pred_check_branch
        %574 = sbr.rel (%p572) target = $region52
      $region51: #{tpu_custom_call.1} parent=11 // pred_region
        _
      $region52: #{tpu_custom_call.1} parent=11 // pred_fallthru
        _
      // Predicated region
      $region53: #{tpu_custom_call.1} parent=11 // pred_check
        %p575 = pneg %p328
      $region54: #{tpu_custom_call.1} parent=11 // pred_check_branch
        %577 = sbr.rel (%p575) target = $region56
      $region55: #{tpu_custom_call.1} parent=11 // pred_region
        _
      $region56: #{tpu_custom_call.1} parent=11 // pred_fallthru
        _
      // Predicated region
      $region57: #{tpu_custom_call.1} parent=11 // pred_check
        %p578 = pneg %p349
      $region58: #{tpu_custom_call.1} parent=11 // pred_check_branch
        %580 = sbr.rel (%p578) target = $region60
      $region59: #{tpu_custom_call.1} parent=11 // pred_region
        _
      $region60: #{tpu_custom_call.1} parent=11 // pred_fallthru
        _
      // Predicated region
      $region61: #{tpu_custom_call.1} parent=11 // pred_check
        %p581 = pneg %p370
      $region62: #{tpu_custom_call.1} parent=11 // pred_check_branch
        %583 = sbr.rel (%p581) target = $region64
      $region63: #{tpu_custom_call.1} parent=11 // pred_region
        _
      $region64: #{tpu_custom_call.1} parent=11 // pred_fallthru
        _
      // Predicated region
      $region65: #{tpu_custom_call.1} parent=11 // pred_check
        %p584 = pneg %p391
      $region66: #{tpu_custom_call.1} parent=11 // pred_check_branch
        %586 = sbr.rel (%p584) target = $region68
      $region67: #{tpu_custom_call.1} parent=11 // pred_region
        _
      $region68: #{tpu_custom_call.1} parent=11 // pred_fallthru
        _
      // Predicated region
      $region69: #{tpu_custom_call.1} parent=11 // pred_check
        %p587 = pneg %p412
      $region70: #{tpu_custom_call.1} parent=11 // pred_check_branch
        %589 = sbr.rel (%p587) target = $region72
      $region71: #{tpu_custom_call.1} parent=11 // pred_region
        _
      $region72: #{tpu_custom_call.1} parent=11 // pred_fallthru
        _
      // Predicated region
      $region73: #{tpu_custom_call.1} parent=11 // pred_check
        %p590 = pneg %p433
      $region74: #{tpu_custom_call.1} parent=11 // pred_check_branch
        %592 = sbr.rel (%p590) target = $region76
      $region75: #{tpu_custom_call.1} parent=11 // pred_region
        _
      $region76: #{tpu_custom_call.1} parent=11 // pred_fallthru
        _
      // Predicated region
      $region77: #{tpu_custom_call.1} parent=11 // pred_check
        %p593 = pneg %p454
      $region78: #{tpu_custom_call.1} parent=11 // pred_check_branch
        %595 = sbr.rel (%p593) target = $region80
      $region79: #{tpu_custom_call.1} parent=11 // pred_region
        _
      $region80: #{tpu_custom_call.1} parent=11 // pred_fallthru
        _
      // Predicated region
      $region81: #{tpu_custom_call.1} parent=11 // pred_check
        %p596 = pneg %p475
      $region82: #{tpu_custom_call.1} parent=11 // pred_check_branch
        %598 = sbr.rel (%p596) target = $region84
      $region83: #{tpu_custom_call.1} parent=11 // pred_region
        _
      $region84: #{tpu_custom_call.1} parent=11 // pred_fallthru
        _
      // Predicated region
      $region85: #{tpu_custom_call.1} parent=11 // pred_check
        %p599 = pneg %p496
      $region86: #{tpu_custom_call.1} parent=11 // pred_check_branch
        %601 = sbr.rel (%p599) target = $region88
      $region87: #{tpu_custom_call.1} parent=11 // pred_region
        _
      $region88: #{tpu_custom_call.1} parent=11 // pred_fallthru
        _
    $region12: #{tpu_custom_call.1} parent=5 // pred_fallthru
      _
    %p602 = scmp.lt.s32.totalorder %s27, 6
    // Predicated region
    $region89: #{tpu_custom_call.1} parent=5 // pred_check
      %p603 = pneg %p602
    $region90: #{tpu_custom_call.1} parent=5 // pred_check_branch
      %605 = sbr.rel (%p603) target = $region92
    $region91: #{tpu_custom_call.1} parent=5 // pred_region
      // Predicated region
      $region93: #{tpu_custom_call.1} parent=91 // pred_check
        %p606 = pneg %p65
      $region94: #{tpu_custom_call.1} parent=91 // pred_check_branch
        %608 = sbr.rel (%p606) target = $region96
      $region95: #{tpu_custom_call.1} parent=91 // pred_region
        %p609 = scmp.lt.s32.totalorder %s35, 1
        %s610 = scalar_select %p609, %s35, 1
        %s611 = smul.u32 8, %s610
        %p612 = scmp.lt.s32.totalorder %s34, 1
        %s613 = scalar_select %p612, %s34, 1
        %p614 = scmp.lt.s32.totalorder %s611, 15
        %s615 = scalar_select %p614, %s611, 15
        %s616 = smul.addr %s615, 2
        %s617 = smul.addr %s613, 32
        %s618 = sadd.s32 %s616, %s617
        %s619 = smul.addr %s618, 8
        %s620 = scalar_lea.vmem %s0, %s619
        %p621 = scmp.lt.s32.totalorder %s35, 1
        %s622 = scalar_select %p621, %s35, 1
        %s623 = smul.u32 8, %s622
      $region96: #{tpu_custom_call.1} parent=91 // pred_fallthru
        _
      // Predicated region
      $region97: #{tpu_custom_call.1} parent=91 // pred_check
        %p624 = pneg %p91
      $region98: #{tpu_custom_call.1} parent=91 // pred_check_branch
        %626 = sbr.rel (%p624) target = $region100
      $region99: #{tpu_custom_call.1} parent=91 // pred_region
        %p627 = scmp.lt.s32.totalorder %s34, 1
        %s628 = scalar_select %p627, %s34, 1
        %s629 = scalar_lea.vmem %s1, %s628
      $region100: #{tpu_custom_call.1} parent=91 // pred_fallthru
        _
    $region92: #{tpu_custom_call.1} parent=5 // pred_fallthru
      _
    %p630 = scmp.le.s32.totalorder 1, %s27
    %p631 = scmp.lt.s32.totalorder %s27, 7
    %p632 = pnand %p630, %p631
    %p633 = pneg %p632
    // Predicated region
    $region101: #{tpu_custom_call.1} parent=5 // pred_check
      _
    $region102: #{tpu_custom_call.1} parent=5 // pred_check_branch
      %635 = sbr.rel (%p632) target = $region104
    $region103: #{tpu_custom_call.1} parent=5 // pred_region
      %s636 = ssub.s32 %s27, 1
      %p637 = scmp.lt.s32.totalorder %s37, 1
      %s638 = scalar_select %p637, %s37, 1
      %s639 = smul.u32 8, %s638
      %p640 = scmp.lt.s32.totalorder %s36, 1
      %s641 = scalar_select %p640, %s36, 1
      %p642 = scmp.lt.s32.totalorder %s639, 15
      %s643 = scalar_select %p642, %s639, 15
      %s644 = smul.addr %s643, 2
      %s645 = smul.addr %s641, 32
      %s646 = sadd.s32 %s644, %s645
      %s647 = smul.addr %s646, 8
      %s648 = scalar_lea.vmem %s0, %s647
      %p649 = pneg %p71
      %p650 = pneg %p68
      %p651 = scmp.lt.s32.totalorder %s36, 1
      %s652 = scalar_select %p651, %s36, 1
      %s653 = scalar_lea.vmem %s1, %s652
      %p654 = pneg %p97
      %p655 = pneg %p94
      %p656 = pneg %p118
      %p657 = pneg %p115
      %p658 = pneg %p139
      %p659 = pneg %p136
      %p660 = pneg %p160
      %p661 = pneg %p157
      %p662 = pneg %p181
      %p663 = pneg %p178
      %p664 = pneg %p202
      %p665 = pneg %p199
      %p666 = pneg %p223
      %p667 = pneg %p220
      %p668 = pneg %p244
      %p669 = pneg %p241
      %p670 = pneg %p265
      %p671 = pneg %p262
      %p672 = pneg %p286
      %p673 = pneg %p283
      %p674 = pneg %p307
      %p675 = pneg %p304
      %p676 = pneg %p328
      %p677 = pneg %p325
      %p678 = pneg %p349
      %p679 = pneg %p346
      %p680 = pneg %p370
      %p681 = pneg %p367
      %p682 = pneg %p391
      %p683 = pneg %p388
      %p684 = pneg %p412
      %p685 = pneg %p409
      %p686 = pneg %p433
      %p687 = pneg %p430
      %p688 = pneg %p454
      %p689 = pneg %p451
      %p690 = pneg %p475
      %p691 = pneg %p472
      %p692 = pneg %p496
      %p693 = pneg %p493
      %p694 = pneg %p530
      %p695 = pneg %p527
      %s696 = ssub.s32 %s37, 1
      %p697 = scmp.gt.s32.totalorder %s696, 0
      %s698 = scalar_select %p697, %s696, 0
      %s699 = smul.u32 8, %s698
      %p700 = scmp.lt.s32.totalorder %s36, 1
      %s701 = scalar_select %p700, %s36, 1
      %p702 = scmp.lt.s32.totalorder %s699, 15
      %s703 = scalar_select %p702, %s699, 15
      %s704 = smul.addr %s703, 2
      %s705 = smul.addr %s701, 32
      %s706 = sadd.s32 %s704, %s705
      %s707 = smul.addr %s706, 8
      %s708 = scalar_lea.vmem %s21, %s707
      %p709 = scmp.lt.s32.totalorder %s37, 1
      %s710 = scalar_select %p709, %s37, 1
      %s711 = smul.u32 8, %s710
      %p712 = scmp.lt.s32.totalorder %s36, 1
      %s713 = scalar_select %p712, %s36, 1
      %p714 = scmp.lt.s32.totalorder %s711, 15
      %s715 = scalar_select %p714, %s711, 15
      %s716 = smul.addr %s715, 2
      %s717 = smul.addr %s713, 32
      %s718 = sadd.s32 %s716, %s717
      %s719 = smul.addr %s718, 8
      %s720 = scalar_lea.vmem %s0, %s719
      %p721 = scmp.lt.s32.totalorder %s37, 1
      %s722 = scalar_select %p721, %s37, 1
      %s723 = smul.u32 8, %s722
      %p724 = scmp.lt.s32.totalorder %s36, 1
      %s725 = scalar_select %p724, %s36, 1
      %s726 = scalar_lea.vmem %s1, %s725
      %s727 = ssub.s32 %s37, 1
      %p728 = scmp.gt.s32.totalorder %s727, 0
      %s729 = scalar_select %p728, %s727, 0
      %s730 = smul.u32 8, %s729
      %p731 = scmp.lt.s32.totalorder %s36, 1
      %s732 = scalar_select %p731, %s36, 1
      %p733 = scmp.lt.s32.totalorder %s730, 15
      %s734 = scalar_select %p733, %s730, 15
      %s735 = smul.addr %s734, 2
      %s736 = smul.addr %s732, 32
      %s737 = sadd.s32 %s735, %s736
      %s738 = smul.addr %s737, 8
      %s739 = scalar_lea.vmem %s21, %s738
      %s740 = ssub.s32 %s37, 1
      %p741 = scmp.gt.s32.totalorder %s740, 0
      %s742 = scalar_select %p741, %s740, 0
      %s743 = smul.u32 8, %s742
      %v744 = vld [vmem:[%s720] sm:$0xff]
      %v745 = vld [vmem:[%s720 + $0x8] sm:$0xff]
      %v746 = vld [vmem:[%s720 + $0x10] sm:$0xff]
      %v747 = vld [vmem:[%s720 + $0x18] sm:$0xff]
      %v748 = vld [vmem:[%s720 + $0x20] sm:$0xff]
      %v749 = vld [vmem:[%s720 + $0x28] sm:$0xff]
      %v750 = vld [vmem:[%s720 + $0x30] sm:$0xff]
      %v751 = vld [vmem:[%s720 + $0x38] sm:$0xff]
      %v752 = vld [vmem:[%s720 + $0x40] sm:$0xff]
      %v753 = vld [vmem:[%s720 + $0x48] sm:$0xff]
      %v754 = vld [vmem:[%s720 + $0x50] sm:$0xff]
      %v755 = vld [vmem:[%s720 + $0x58] sm:$0xff]
      %v756 = vld [vmem:[%s720 + $0x60] sm:$0xff]
      %v757 = vld [vmem:[%s720 + $0x68] sm:$0xff]
      %v758 = vld [vmem:[%s720 + $0x70] sm:$0xff]
      %v759 = vld [vmem:[%s720 + $0x78] sm:$0xff]
      %v760 = vld [vmem:[%s726] sm:$0x1]
      %v762 = vlaneseq
      %v763 = vshrl.u32 %v762, 7
      %v764 = vsub.s32 0, %v763
      %v765 = vrot.slane %v760, %v764
      %v767 = vadd.f32 %v744, %v765
      %v768 = vadd.f32 %v745, %v765
      %v769 = vadd.f32 %v746, %v765
      %v770 = vadd.f32 %v747, %v765
      %v771 = vadd.f32 %v748, %v765
      %v772 = vadd.f32 %v749, %v765
      %v773 = vadd.f32 %v750, %v765
      %v774 = vadd.f32 %v751, %v765
      %v775 = vadd.f32 %v752, %v765
      %v776 = vadd.f32 %v753, %v765
      %v777 = vadd.f32 %v754, %v765
      %v778 = vadd.f32 %v755, %v765
      %v779 = vadd.f32 %v756, %v765
      %v780 = vadd.f32 %v757, %v765
      %v781 = vadd.f32 %v758, %v765
      %v782 = vadd.f32 %v759, %v765
      %v783 = vld [vmem:[%s2] sm:$0x1]
      %v784 = vld [vmem:[%s3] sm:$0x1]
      %vm785 = vcmask 31744
      %v786 = vsel %vm785, %v767, 0.0
      %787 = vadd.xlane.f32.xlu0 %v786
      %v788 = vpop.xlane.xlu0 %787
      %v789 = vsel %vm785, %v768, 0.0
      %790 = vadd.xlane.f32.xlu0 %v789
      %v791 = vpop.xlane.xlu0 %790
      %v792 = vsel %vm785, %v769, 0.0
      %793 = vadd.xlane.f32.xlu0 %v792
      %v794 = vpop.xlane.xlu0 %793
      %v795 = vsel %vm785, %v770, 0.0
      %796 = vadd.xlane.f32.xlu0 %v795
      %v797 = vpop.xlane.xlu0 %796
      %v798 = vsel %vm785, %v771, 0.0
      %799 = vadd.xlane.f32.xlu0 %v798
      %v800 = vpop.xlane.xlu0 %799
      %v801 = vsel %vm785, %v772, 0.0
      %802 = vadd.xlane.f32.xlu0 %v801
      %v803 = vpop.xlane.xlu0 %802
      %v804 = vsel %vm785, %v773, 0.0
      %805 = vadd.xlane.f32.xlu0 %v804
      %v806 = vpop.xlane.xlu0 %805
      %v807 = vsel %vm785, %v774, 0.0
      %808 = vadd.xlane.f32.xlu0 %v807
      %v809 = vpop.xlane.xlu0 %808
      %v810 = vsel %vm785, %v775, 0.0
      %811 = vadd.xlane.f32.xlu0 %v810
      %v812 = vpop.xlane.xlu0 %811
      %v813 = vsel %vm785, %v776, 0.0
      %814 = vadd.xlane.f32.xlu0 %v813
      %v815 = vpop.xlane.xlu0 %814
      %v816 = vsel %vm785, %v777, 0.0
      %817 = vadd.xlane.f32.xlu0 %v816
      %v818 = vpop.xlane.xlu0 %817
      %v819 = vsel %vm785, %v778, 0.0
      %820 = vadd.xlane.f32.xlu0 %v819
      %v821 = vpop.xlane.xlu0 %820
      %v822 = vsel %vm785, %v779, 0.0
      %823 = vadd.xlane.f32.xlu0 %v822
      %v824 = vpop.xlane.xlu0 %823
      %v825 = vsel %vm785, %v780, 0.0
      %826 = vadd.xlane.f32.xlu0 %v825
      %v827 = vpop.xlane.xlu0 %826
      %v828 = vsel %vm785, %v781, 0.0
      %829 = vadd.xlane.f32.xlu0 %v828
      %v830 = vpop.xlane.xlu0 %829
      %v831 = vsel %vm785, %v782, 0.0
      %832 = vadd.xlane.f32.xlu0 %v831
      %v833 = vpop.xlane.xlu0 %832
      %v834 = vrcp.pop 4.0
      %v835 = vmul.f32 %v788, %v834
      %v836 = vmul.f32 %v791, %v834
      %v837 = vmul.f32 %v794, %v834
      %v838 = vmul.f32 %v797, %v834
      %v839 = vmul.f32 %v800, %v834
      %v840 = vmul.f32 %v803, %v834
      %v841 = vmul.f32 %v806, %v834
      %v842 = vmul.f32 %v809, %v834
      %v843 = vmul.f32 %v812, %v834
      %v844 = vmul.f32 %v815, %v834
      %v845 = vmul.f32 %v818, %v834
      %v846 = vmul.f32 %v821, %v834
      %v847 = vmul.f32 %v824, %v834
      %v848 = vmul.f32 %v827, %v834
      %v849 = vmul.f32 %v830, %v834
      %v850 = vmul.f32 %v833, %v834
      %v851 = vsub.f32 %v767, %v835
      %v852 = vsub.f32 %v768, %v836
      %v853 = vsub.f32 %v769, %v837
      %v854 = vsub.f32 %v770, %v838
      %v855 = vsub.f32 %v771, %v839
      %v856 = vsub.f32 %v772, %v840
      %v857 = vsub.f32 %v773, %v841
      %v858 = vsub.f32 %v774, %v842
      %v859 = vsub.f32 %v775, %v843
      %v860 = vsub.f32 %v776, %v844
      %v861 = vsub.f32 %v777, %v845
      %v862 = vsub.f32 %v778, %v846
      %v863 = vsub.f32 %v779, %v847
      %v864 = vsub.f32 %v780, %v848
      %v865 = vsub.f32 %v781, %v849
      %v866 = vsub.f32 %v782, %v850
      %v867 = vmul.f32 %v851, %v851
      %v868 = vmul.f32 %v852, %v852
      %v869 = vmul.f32 %v853, %v853
      %v870 = vmul.f32 %v854, %v854
      %v871 = vmul.f32 %v855, %v855
      %v872 = vmul.f32 %v856, %v856
      %v873 = vmul.f32 %v857, %v857
      %v874 = vmul.f32 %v858, %v858
      %v875 = vmul.f32 %v859, %v859
      %v876 = vmul.f32 %v860, %v860
      %v877 = vmul.f32 %v861, %v861
      %v878 = vmul.f32 %v862, %v862
      %v879 = vmul.f32 %v863, %v863
      %v880 = vmul.f32 %v864, %v864
      %v881 = vmul.f32 %v865, %v865
      %v882 = vmul.f32 %v866, %v866
      %v883 = vsel %vm785, %v867, 0.0
      %884 = vadd.xlane.f32.xlu0 %v883
      %v885 = vpop.xlane.xlu0 %884
      %v886 = vsel %vm785, %v868, 0.0
      %887 = vadd.xlane.f32.xlu0 %v886
      %v888 = vpop.xlane.xlu0 %887
      %v889 = vsel %vm785, %v869, 0.0
      %890 = vadd.xlane.f32.xlu0 %v889
      %v891 = vpop.xlane.xlu0 %890
      %v892 = vsel %vm785, %v870, 0.0
      %893 = vadd.xlane.f32.xlu0 %v892
      %v894 = vpop.xlane.xlu0 %893
      %v895 = vsel %vm785, %v871, 0.0
      %896 = vadd.xlane.f32.xlu0 %v895
      %v897 = vpop.xlane.xlu0 %896
      %v898 = vsel %vm785, %v872, 0.0
      %899 = vadd.xlane.f32.xlu0 %v898
      %v900 = vpop.xlane.xlu0 %899
      %v901 = vsel %vm785, %v873, 0.0
      %902 = vadd.xlane.f32.xlu0 %v901
      %v903 = vpop.xlane.xlu0 %902
      %v904 = vsel %vm785, %v874, 0.0
      %905 = vadd.xlane.f32.xlu0 %v904
      %v906 = vpop.xlane.xlu0 %905
      %v907 = vsel %vm785, %v875, 0.0
      %908 = vadd.xlane.f32.xlu0 %v907
      %v909 = vpop.xlane.xlu0 %908
      %v910 = vsel %vm785, %v876, 0.0
      %911 = vadd.xlane.f32.xlu0 %v910
      %v912 = vpop.xlane.xlu0 %911
      %v913 = vsel %vm785, %v877, 0.0
      %914 = vadd.xlane.f32.xlu0 %v913
      %v915 = vpop.xlane.xlu0 %914
      %v916 = vsel %vm785, %v878, 0.0
      %917 = vadd.xlane.f32.xlu0 %v916
      %v918 = vpop.xlane.xlu0 %917
      %v919 = vsel %vm785, %v879, 0.0
      %920 = vadd.xlane.f32.xlu0 %v919
      %v921 = vpop.xlane.xlu0 %920
      %v922 = vsel %vm785, %v880, 0.0
      %923 = vadd.xlane.f32.xlu0 %v922
      %v924 = vpop.xlane.xlu0 %923
      %v925 = vsel %vm785, %v881, 0.0
      %926 = vadd.xlane.f32.xlu0 %v925
      %v927 = vpop.xlane.xlu0 %926
      %v928 = vsel %vm785, %v882, 0.0
      %929 = vadd.xlane.f32.xlu0 %v928
      %v930 = vpop.xlane.xlu0 %929
      %v931 = vmul.f32 %v885, %v834
      %v932 = vmul.f32 %v888, %v834
      %v933 = vmul.f32 %v891, %v834
      %v934 = vmul.f32 %v894, %v834
      %v935 = vmul.f32 %v897, %v834
      %v936 = vmul.f32 %v900, %v834
      %v937 = vmul.f32 %v903, %v834
      %v938 = vmul.f32 %v906, %v834
      %v939 = vmul.f32 %v909, %v834
      %v940 = vmul.f32 %v912, %v834
      %v941 = vmul.f32 %v915, %v834
      %v942 = vmul.f32 %v918, %v834
      %v943 = vmul.f32 %v921, %v834
      %v944 = vmul.f32 %v924, %v834
      %v945 = vmul.f32 %v927, %v834
      %v946 = vmul.f32 %v930, %v834
      %v947 = vadd.f32 %v931, 1e-06
      %v948 = vadd.f32 %v932, 1e-06
      %v949 = vadd.f32 %v933, 1e-06
      %v950 = vadd.f32 %v934, 1e-06
      %v951 = vadd.f32 %v935, 1e-06
      %v952 = vadd.f32 %v936, 1e-06
      %v953 = vadd.f32 %v937, 1e-06
      %v954 = vadd.f32 %v938, 1e-06
      %v955 = vadd.f32 %v939, 1e-06
      %v956 = vadd.f32 %v940, 1e-06
      %v957 = vadd.f32 %v941, 1e-06
      %v958 = vadd.f32 %v942, 1e-06
      %v959 = vadd.f32 %v943, 1e-06
      %v960 = vadd.f32 %v944, 1e-06
      %v961 = vadd.f32 %v945, 1e-06
      %v962 = vadd.f32 %v946, 1e-06
      %v963 = vrsqrt.pop %v947
      %v964 = vrsqrt.pop %v948
      %v965 = vrsqrt.pop %v949
      %v966 = vrsqrt.pop %v950
      %v967 = vrsqrt.pop %v951
      %v968 = vrsqrt.pop %v952
      %v969 = vrsqrt.pop %v953
      %v970 = vrsqrt.pop %v954
      %v971 = vrsqrt.pop %v955
      %v972 = vrsqrt.pop %v956
      %v973 = vrsqrt.pop %v957
      %v974 = vrsqrt.pop %v958
      %v975 = vrsqrt.pop %v959
      %v976 = vrsqrt.pop %v960
      %v977 = vrsqrt.pop %v961
      %v978 = vrsqrt.pop %v962
      %v979 = vmul.f32 %v851, %v963
      %v980 = vmul.f32 %v852, %v964
      %v981 = vmul.f32 %v853, %v965
      %v982 = vmul.f32 %v854, %v966
      %v983 = vmul.f32 %v855, %v967
      %v984 = vmul.f32 %v856, %v968
      %v985 = vmul.f32 %v857, %v969
      %v986 = vmul.f32 %v858, %v970
      %v987 = vmul.f32 %v859, %v971
      %v988 = vmul.f32 %v860, %v972
      %v989 = vmul.f32 %v861, %v973
      %v990 = vmul.f32 %v862, %v974
      %v991 = vmul.f32 %v863, %v975
      %v992 = vmul.f32 %v864, %v976
      %v993 = vmul.f32 %v865, %v977
      %v994 = vmul.f32 %v866, %v978
      %v996 = vlaneseq
      %v997 = vshrl.u32 %v996, 7
      %v998 = vsub.s32 0, %v997
      %v999 = vrot.slane %v783, %v998
      %v1001 = vmul.f32 %v979, %v999
      %v1002 = vmul.f32 %v980, %v999
      %v1003 = vmul.f32 %v981, %v999
      %v1004 = vmul.f32 %v982, %v999
      %v1005 = vmul.f32 %v983, %v999
      %v1006 = vmul.f32 %v984, %v999
      %v1007 = vmul.f32 %v985, %v999
      %v1008 = vmul.f32 %v986, %v999
      %v1009 = vmul.f32 %v987, %v999
      %v1010 = vmul.f32 %v988, %v999
      %v1011 = vmul.f32 %v989, %v999
      %v1012 = vmul.f32 %v990, %v999
      %v1013 = vmul.f32 %v991, %v999
      %v1014 = vmul.f32 %v992, %v999
      %v1015 = vmul.f32 %v993, %v999
      %v1016 = vmul.f32 %v994, %v999
      %v1018 = vlaneseq
      %v1019 = vshrl.u32 %v1018, 7
      %v1020 = vsub.s32 0, %v1019
      %v1021 = vrot.slane %v784, %v1020
      %v1023 = vadd.f32 %v1001, %v1021
      %v1024 = vadd.f32 %v1002, %v1021
      %v1025 = vadd.f32 %v1003, %v1021
      %v1026 = vadd.f32 %v1004, %v1021
      %v1027 = vadd.f32 %v1005, %v1021
      %v1028 = vadd.f32 %v1006, %v1021
      %v1029 = vadd.f32 %v1007, %v1021
      %v1030 = vadd.f32 %v1008, %v1021
      %v1031 = vadd.f32 %v1009, %v1021
      %v1032 = vadd.f32 %v1010, %v1021
      %v1033 = vadd.f32 %v1011, %v1021
      %v1034 = vadd.f32 %v1012, %v1021
      %v1035 = vadd.f32 %v1013, %v1021
      %v1036 = vadd.f32 %v1014, %v1021
      %v1037 = vadd.f32 %v1015, %v1021
      %v1038 = vadd.f32 %v1016, %v1021
      %v1039 = vld [vmem:[%s4] sm:$0xf]
      %v1041 = vsel %vm785, %v1023, 0
      %v1044 = vsel %vm785, %v1024, 0
      %v1047 = vsel %vm785, %v1025, 0
      %v1050 = vsel %vm785, %v1026, 0
      %v1053 = vsel %vm785, %v1027, 0
      %v1056 = vsel %vm785, %v1028, 0
      %v1059 = vsel %vm785, %v1029, 0
      %v1062 = vsel %vm785, %v1030, 0
      %v1065 = vsel %vm785, %v1031, 0
      %v1068 = vsel %vm785, %v1032, 0
      %v1071 = vsel %vm785, %v1033, 0
      %v1074 = vsel %vm785, %v1034, 0
      %v1077 = vsel %vm785, %v1035, 0
      %v1080 = vsel %vm785, %v1036, 0
      %v1083 = vsel %vm785, %v1037, 0
      %v1086 = vsel %vm785, %v1038, 0
      %vm1088 = vcmask 1043456
      %v1090 = vsel %vm1088, %v1039, 0
      %1092 = vmatprep.subr.mxu0 0.0
      %1093 = vmatpush1.msra.mxu0 %v1090
      %1094 = vmatprep.subr.mxu0 0.0
      %1095 = vmatpush1.msra.mxu0 0.0
      %1096 = vmatprep.subr.mxu0 0.0
      %1097 = vmatpush1.msra.mxu0 0.0
      %1098 = vmatprep.subr.mxu0 0.0
      %1099 = vmatpush1.msra.mxu0 0.0
      %1100 = vmatprep.subr.mxu0 0.0
      %1101 = vmatpush1.msra.mxu0 0.0
      %1102 = vmatprep.subr.mxu0 0.0
      %1103 = vmatpush1.msra.mxu0 0.0
      %1104 = vmatprep.subr.mxu0 0.0
      %1105 = vmatpush1.msra.mxu0 0.0
      %1106 = vmatprep.subr.mxu0 0.0
      %1107 = vmatpush1.msra.mxu0 0.0
      %1108 = vmatprep.subr.mxu0 0.0
      %1109 = vmatpush1.msra.mxu0 0.0
      %1110 = vmatprep.subr.mxu0 0.0
      %1111 = vmatpush1.msra.mxu0 0.0
      %1112 = vmatprep.subr.mxu0 0.0
      %1113 = vmatpush1.msra.mxu0 0.0
      %1114 = vmatprep.subr.mxu0 0.0
      %1115 = vmatpush1.msra.mxu0 0.0
      %1116 = vmatprep.subr.mxu0 0.0
      %1117 = vmatpush1.msra.mxu0 0.0
      %1118 = vmatprep.subr.mxu0 0.0
      %1119 = vmatpush1.msra.mxu0 0.0
      %1120 = vmatprep.subr.mxu0 0.0
      %1121 = vmatpush1.msra.mxu0 0.0
      %1122 = vmatprep.subr.mxu0 0.0
      %1123 = vmatpush1.msra.mxu0 0.0
      %1124 = vmatprep.subr.mxu0 0.0
      %1125 = vmatpush1.msra.mxu0 0.0
      %1126 = vmatprep.subr.mxu0 0.0
      %1127 = vmatpush1.msra.mxu0 0.0
      %1128 = vmatprep.subr.mxu0 0.0
      %1129 = vmatpush1.msra.mxu0 0.0
      %1130 = vmatprep.subr.mxu0 0.0
      %1131 = vmatpush1.msra.mxu0 0.0
      %1132 = vmatprep.subr.mxu0 0.0
      %1133 = vmatpush1.msra.mxu0 0.0
      %1134 = vmatprep.subr.mxu0 0.0
      %1135 = vmatpush1.msra.mxu0 0.0
      %1136 = vmatprep.subr.mxu0 0.0
      %1137 = vmatpush1.msra.mxu0 0.0
      %1138 = vmatprep.subr.mxu0 0.0
      %1139 = vmatpush1.msra.mxu0 0.0
      %1140 = vmatprep.subr.mxu0 0.0
      %1141 = vmatpush1.msra.mxu0 0.0
      %1142 = vmatprep.subr.mxu0 0.0
      %1143 = vmatpush1.msra.mxu0 0.0
      %1144 = vmatprep.subr.mxu0 0.0
      %1145 = vmatpush1.msra.mxu0 0.0
      %1146 = vmatprep.subr.mxu0 0.0
      %1147 = vmatpush1.msra.mxu0 0.0
      %1148 = vmatprep.subr.mxu0 0.0
      %1149 = vmatpush1.msra.mxu0 0.0
      %1150 = vmatprep.subr.mxu0 0.0
      %1151 = vmatpush1.msra.mxu0 0.0
      %1152 = vmatprep.subr.mxu0 0.0
      %1153 = vmatpush1.msra.mxu0 0.0
      %1154 = vmatprep.subr.mxu0 0.0
      %1155 = vmatpush1.msra.mxu0 0.0
      %1156 = vmatprep.mubr.f32.mxu0 0.0
      %1157 = vmatmul.mubr.f32.gmra.mrb[0].mxu0 %v1041
      %v1158 = vpop.f32.mrb[0].mxu0
      %v1159 = vadd.f32 0.0, %v1158
      %v1160 = vpop.f32.mrb[0].mxu0
      %1161 = vmatprep.mubr.f32.mxu0 0.0
      %1162 = vmatmul.mubr.f32.gmra.mrb[0].mxu0 %v1044
      %v1163 = vpop.f32.mrb[0].mxu0
      %v1164 = vadd.f32 0.0, %v1163
      %v1165 = vpop.f32.mrb[0].mxu0
      %1166 = vmatprep.mubr.f32.mxu0 0.0
      %1167 = vmatmul.mubr.f32.gmra.mrb[0].mxu0 %v1047
      %v1168 = vpop.f32.mrb[0].mxu0
      %v1169 = vadd.f32 0.0, %v1168
      %v1170 = vpop.f32.mrb[0].mxu0
      %1171 = vmatprep.mubr.f32.mxu0 0.0
      %1172 = vmatmul.mubr.f32.gmra.mrb[0].mxu0 %v1050
      %v1173 = vpop.f32.mrb[0].mxu0
      %v1174 = vadd.f32 0.0, %v1173
      %v1175 = vpop.f32.mrb[0].mxu0
      %1176 = vmatprep.mubr.f32.mxu0 0.0
      %1177 = vmatmul.mubr.f32.gmra.mrb[0].mxu0 %v1053
      %v1178 = vpop.f32.mrb[0].mxu0
      %v1179 = vadd.f32 0.0, %v1178
      %v1180 = vpop.f32.mrb[0].mxu0
      %1181 = vmatprep.mubr.f32.mxu0 0.0
      %1182 = vmatmul.mubr.f32.gmra.mrb[0].mxu0 %v1056
      %v1183 = vpop.f32.mrb[0].mxu0
      %v1184 = vadd.f32 0.0, %v1183
      %v1185 = vpop.f32.mrb[0].mxu0
      %1186 = vmatprep.mubr.f32.mxu0 0.0
      %1187 = vmatmul.mubr.f32.gmra.mrb[0].mxu0 %v1059
      %v1188 = vpop.f32.mrb[0].mxu0
      %v1189 = vadd.f32 0.0, %v1188
      %v1190 = vpop.f32.mrb[0].mxu0
      %1191 = vmatprep.mubr.f32.mxu0 0.0
      %1192 = vmatmul.mubr.f32.gmra.mrb[0].mxu0 %v1062
      %v1193 = vpop.f32.mrb[0].mxu0
      %v1194 = vadd.f32 0.0, %v1193
      %v1195 = vpop.f32.mrb[0].mxu0
      %1196 = vmatprep.mubr.f32.mxu0 0.0
      %1197 = vmatmul.mubr.f32.gmra.mrb[0].mxu0 %v1065
      %v1198 = vpop.f32.mrb[0].mxu0
      %v1199 = vadd.f32 0.0, %v1198
      %v1200 = vpop.f32.mrb[0].mxu0
      %1201 = vmatprep.mubr.f32.mxu0 0.0
      %1202 = vmatmul.mubr.f32.gmra.mrb[0].mxu0 %v1068
      %v1203 = vpop.f32.mrb[0].mxu0
      %v1204 = vadd.f32 0.0, %v1203
      %v1205 = vpop.f32.mrb[0].mxu0
      %1206 = vmatprep.mubr.f32.mxu0 0.0
      %1207 = vmatmul.mubr.f32.gmra.mrb[0].mxu0 %v1071
      %v1208 = vpop.f32.mrb[0].mxu0
      %v1209 = vadd.f32 0.0, %v1208
      %v1210 = vpop.f32.mrb[0].mxu0
      %1211 = vmatprep.mubr.f32.mxu0 0.0
      %1212 = vmatmul.mubr.f32.gmra.mrb[0].mxu0 %v1074
      %v1213 = vpop.f32.mrb[0].mxu0
      %v1214 = vadd.f32 0.0, %v1213
      %v1215 = vpop.f32.mrb[0].mxu0
      %1216 = vmatprep.mubr.f32.mxu0 0.0
      %1217 = vmatmul.mubr.f32.gmra.mrb[0].mxu0 %v1077
      %v1218 = vpop.f32.mrb[0].mxu0
      %v1219 = vadd.f32 0.0, %v1218
      %v1220 = vpop.f32.mrb[0].mxu0
      %1221 = vmatprep.mubr.f32.mxu0 0.0
      %1222 = vmatmul.mubr.f32.gmra.mrb[0].mxu0 %v1080
      %v1223 = vpop.f32.mrb[0].mxu0
      %v1224 = vadd.f32 0.0, %v1223
      %v1225 = vpop.f32.mrb[0].mxu0
      %1226 = vmatprep.mubr.f32.mxu0 0.0
      %1227 = vmatmul.mubr.f32.gmra.mrb[0].mxu0 %v1083
      %v1228 = vpop.f32.mrb[0].mxu0
      %v1229 = vadd.f32 0.0, %v1228
      %v1230 = vpop.f32.mrb[0].mxu0
      %1231 = vmatprep.mubr.f32.mxu0 0.0
      %1232 = vmatmul.mubr.f32.gmra.mrb[0].mxu0 %v1086
      %v1233 = vpop.f32.mrb[0].mxu0
      %v1234 = vadd.f32 0.0, %v1233
      %v1235 = vpop.f32.mrb[0].mxu0
      %1236 = vdwg.mxu0
      %v1237 = vld [vmem:[%s5] sm:$0x1]
      %v1238 = vld [vmem:[%s6] sm:$0x1]
      %vm1239 = vcmask 64512
      %v1240 = vsel %vm1239, %v1159, 0.0
      %1241 = vadd.xlane.f32.xlu0 %v1240
      %v1242 = vpop.xlane.xlu0 %1241
      %v1243 = vsel %vm1239, %v1164, 0.0
      %1244 = vadd.xlane.f32.xlu0 %v1243
      %v1245 = vpop.xlane.xlu0 %1244
      %v1246 = vsel %vm1239, %v1169, 0.0
      %1247 = vadd.xlane.f32.xlu0 %v1246
      %v1248 = vpop.xlane.xlu0 %1247
      %v1249 = vsel %vm1239, %v1174, 0.0
      %1250 = vadd.xlane.f32.xlu0 %v1249
      %v1251 = vpop.xlane.xlu0 %1250
      %v1252 = vsel %vm1239, %v1179, 0.0
      %1253 = vadd.xlane.f32.xlu0 %v1252
      %v1254 = vpop.xlane.xlu0 %1253
      %v1255 = vsel %vm1239, %v1184, 0.0
      %1256 = vadd.xlane.f32.xlu0 %v1255
      %v1257 = vpop.xlane.xlu0 %1256
      %v1258 = vsel %vm1239, %v1189, 0.0
      %1259 = vadd.xlane.f32.xlu0 %v1258
      %v1260 = vpop.xlane.xlu0 %1259
      %v1261 = vsel %vm1239, %v1194, 0.0
      %1262 = vadd.xlane.f32.xlu0 %v1261
      %v1263 = vpop.xlane.xlu0 %1262
      %v1264 = vsel %vm1239, %v1199, 0.0
      %1265 = vadd.xlane.f32.xlu0 %v1264
      %v1266 = vpop.xlane.xlu0 %1265
      %v1267 = vsel %vm1239, %v1204, 0.0
      %1268 = vadd.xlane.f32.xlu0 %v1267
      %v1269 = vpop.xlane.xlu0 %1268
      %v1270 = vsel %vm1239, %v1209, 0.0
      %1271 = vadd.xlane.f32.xlu0 %v1270
      %v1272 = vpop.xlane.xlu0 %1271
      %v1273 = vsel %vm1239, %v1214, 0.0
      %1274 = vadd.xlane.f32.xlu0 %v1273
      %v1275 = vpop.xlane.xlu0 %1274
      %v1276 = vsel %vm1239, %v1219, 0.0
      %1277 = vadd.xlane.f32.xlu0 %v1276
      %v1278 = vpop.xlane.xlu0 %1277
      %v1279 = vsel %vm1239, %v1224, 0.0
      %1280 = vadd.xlane.f32.xlu0 %v1279
      %v1281 = vpop.xlane.xlu0 %1280
      %v1282 = vsel %vm1239, %v1229, 0.0
      %1283 = vadd.xlane.f32.xlu0 %v1282
      %v1284 = vpop.xlane.xlu0 %1283
      %v1285 = vsel %vm1239, %v1234, 0.0
      %1286 = vadd.xlane.f32.xlu0 %v1285
      %v1287 = vpop.xlane.xlu0 %1286
      %v1288 = vrcp.pop 8.0
      %v1289 = vmul.f32 %v1242, %v1288
      %v1290 = vmul.f32 %v1245, %v1288
      %v1291 = vmul.f32 %v1248, %v1288
      %v1292 = vmul.f32 %v1251, %v1288
      %v1293 = vmul.f32 %v1254, %v1288
      %v1294 = vmul.f32 %v1257, %v1288
      %v1295 = vmul.f32 %v1260, %v1288
      %v1296 = vmul.f32 %v1263, %v1288
      %v1297 = vmul.f32 %v1266, %v1288
      %v1298 = vmul.f32 %v1269, %v1288
      %v1299 = vmul.f32 %v1272, %v1288
      %v1300 = vmul.f32 %v1275, %v1288
      %v1301 = vmul.f32 %v1278, %v1288
      %v1302 = vmul.f32 %v1281, %v1288
      %v1303 = vmul.f32 %v1284, %v1288
      %v1304 = vmul.f32 %v1287, %v1288
      %v1305 = vsub.f32 %v1159, %v1289
      %v1306 = vsub.f32 %v1164, %v1290
      %v1307 = vsub.f32 %v1169, %v1291
      %v1308 = vsub.f32 %v1174, %v1292
      %v1309 = vsub.f32 %v1179, %v1293
      %v1310 = vsub.f32 %v1184, %v1294
      %v1311 = vsub.f32 %v1189, %v1295
      %v1312 = vsub.f32 %v1194, %v1296
      %v1313 = vsub.f32 %v1199, %v1297
      %v1314 = vsub.f32 %v1204, %v1298
      %v1315 = vsub.f32 %v1209, %v1299
      %v1316 = vsub.f32 %v1214, %v1300
      %v1317 = vsub.f32 %v1219, %v1301
      %v1318 = vsub.f32 %v1224, %v1302
      %v1319 = vsub.f32 %v1229, %v1303
      %v1320 = vsub.f32 %v1234, %v1304
      %v1321 = vmul.f32 %v1305, %v1305
      %v1322 = vmul.f32 %v1306, %v1306
      %v1323 = vmul.f32 %v1307, %v1307
      %v1324 = vmul.f32 %v1308, %v1308
      %v1325 = vmul.f32 %v1309, %v1309
      %v1326 = vmul.f32 %v1310, %v1310
      %v1327 = vmul.f32 %v1311, %v1311
      %v1328 = vmul.f32 %v1312, %v1312
      %v1329 = vmul.f32 %v1313, %v1313
      %v1330 = vmul.f32 %v1314, %v1314
      %v1331 = vmul.f32 %v1315, %v1315
      %v1332 = vmul.f32 %v1316, %v1316
      %v1333 = vmul.f32 %v1317, %v1317
      %v1334 = vmul.f32 %v1318, %v1318
      %v1335 = vmul.f32 %v1319, %v1319
      %v1336 = vmul.f32 %v1320, %v1320
      %v1337 = vsel %vm1239, %v1321, 0.0
      %1338 = vadd.xlane.f32.xlu0 %v1337
      %v1339 = vpop.xlane.xlu0 %1338
      %v1340 = vsel %vm1239, %v1322, 0.0
      %1341 = vadd.xlane.f32.xlu0 %v1340
      %v1342 = vpop.xlane.xlu0 %1341
      %v1343 = vsel %vm1239, %v1323, 0.0
      %1344 = vadd.xlane.f32.xlu0 %v1343
      %v1345 = vpop.xlane.xlu0 %1344
      %v1346 = vsel %vm1239, %v1324, 0.0
      %1347 = vadd.xlane.f32.xlu0 %v1346
      %v1348 = vpop.xlane.xlu0 %1347
      %v1349 = vsel %vm1239, %v1325, 0.0
      %1350 = vadd.xlane.f32.xlu0 %v1349
      %v1351 = vpop.xlane.xlu0 %1350
      %v1352 = vsel %vm1239, %v1326, 0.0
      %1353 = vadd.xlane.f32.xlu0 %v1352
      %v1354 = vpop.xlane.xlu0 %1353
      %v1355 = vsel %vm1239, %v1327, 0.0
      %1356 = vadd.xlane.f32.xlu0 %v1355
      %v1357 = vpop.xlane.xlu0 %1356
      %v1358 = vsel %vm1239, %v1328, 0.0
      %1359 = vadd.xlane.f32.xlu0 %v1358
      %v1360 = vpop.xlane.xlu0 %1359
      %v1361 = vsel %vm1239, %v1329, 0.0
      %1362 = vadd.xlane.f32.xlu0 %v1361
      %v1363 = vpop.xlane.xlu0 %1362
      %v1364 = vsel %vm1239, %v1330, 0.0
      %1365 = vadd.xlane.f32.xlu0 %v1364
      %v1366 = vpop.xlane.xlu0 %1365
      %v1367 = vsel %vm1239, %v1331, 0.0
      %1368 = vadd.xlane.f32.xlu0 %v1367
      %v1369 = vpop.xlane.xlu0 %1368
      %v1370 = vsel %vm1239, %v1332, 0.0
      %1371 = vadd.xlane.f32.xlu0 %v1370
      %v1372 = vpop.xlane.xlu0 %1371
      %v1373 = vsel %vm1239, %v1333, 0.0
      %1374 = vadd.xlane.f32.xlu0 %v1373
      %v1375 = vpop.xlane.xlu0 %1374
      %v1376 = vsel %vm1239, %v1334, 0.0
      %1377 = vadd.xlane.f32.xlu0 %v1376
      %v1378 = vpop.xlane.xlu0 %1377
      %v1379 = vsel %vm1239, %v1335, 0.0
      %1380 = vadd.xlane.f32.xlu0 %v1379
      %v1381 = vpop.xlane.xlu0 %1380
      %v1382 = vsel %vm1239, %v1336, 0.0
      %1383 = vadd.xlane.f32.xlu0 %v1382
      %v1384 = vpop.xlane.xlu0 %1383
      %v1385 = vmul.f32 %v1339, %v1288
      %v1386 = vmul.f32 %v1342, %v1288
      %v1387 = vmul.f32 %v1345, %v1288
      %v1388 = vmul.f32 %v1348, %v1288
      %v1389 = vmul.f32 %v1351, %v1288
      %v1390 = vmul.f32 %v1354, %v1288
      %v1391 = vmul.f32 %v1357, %v1288
      %v1392 = vmul.f32 %v1360, %v1288
      %v1393 = vmul.f32 %v1363, %v1288
      %v1394 = vmul.f32 %v1366, %v1288
      %v1395 = vmul.f32 %v1369, %v1288
      %v1396 = vmul.f32 %v1372, %v1288
      %v1397 = vmul.f32 %v1375, %v1288
      %v1398 = vmul.f32 %v1378, %v1288
      %v1399 = vmul.f32 %v1381, %v1288
      %v1400 = vmul.f32 %v1384, %v1288
      %v1401 = vadd.f32 %v1385, 1e-06
      %v1402 = vadd.f32 %v1386, 1e-06
      %v1403 = vadd.f32 %v1387, 1e-06
      %v1404 = vadd.f32 %v1388, 1e-06
      %v1405 = vadd.f32 %v1389, 1e-06
      %v1406 = vadd.f32 %v1390, 1e-06
      %v1407 = vadd.f32 %v1391, 1e-06
      %v1408 = vadd.f32 %v1392, 1e-06
      %v1409 = vadd.f32 %v1393, 1e-06
      %v1410 = vadd.f32 %v1394, 1e-06
      %v1411 = vadd.f32 %v1395, 1e-06
      %v1412 = vadd.f32 %v1396, 1e-06
      %v1413 = vadd.f32 %v1397, 1e-06
      %v1414 = vadd.f32 %v1398, 1e-06
      %v1415 = vadd.f32 %v1399, 1e-06
      %v1416 = vadd.f32 %v1400, 1e-06
      %v1417 = vrsqrt.pop %v1401
      %v1418 = vrsqrt.pop %v1402
      %v1419 = vrsqrt.pop %v1403
      %v1420 = vrsqrt.pop %v1404
      %v1421 = vrsqrt.pop %v1405
      %v1422 = vrsqrt.pop %v1406
      %v1423 = vrsqrt.pop %v1407
      %v1424 = vrsqrt.pop %v1408
      %v1425 = vrsqrt.pop %v1409
      %v1426 = vrsqrt.pop %v1410
      %v1427 = vrsqrt.pop %v1411
      %v1428 = vrsqrt.pop %v1412
      %v1429 = vrsqrt.pop %v1413
      %v1430 = vrsqrt.pop %v1414
      %v1431 = vrsqrt.pop %v1415
      %v1432 = vrsqrt.pop %v1416
      %v1433 = vmul.f32 %v1305, %v1417
      %v1434 = vmul.f32 %v1306, %v1418
      %v1435 = vmul.f32 %v1307, %v1419
      %v1436 = vmul.f32 %v1308, %v1420
      %v1437 = vmul.f32 %v1309, %v1421
      %v1438 = vmul.f32 %v1310, %v1422
      %v1439 = vmul.f32 %v1311, %v1423
      %v1440 = vmul.f32 %v1312, %v1424
      %v1441 = vmul.f32 %v1313, %v1425
      %v1442 = vmul.f32 %v1314, %v1426
      %v1443 = vmul.f32 %v1315, %v1427
      %v1444 = vmul.f32 %v1316, %v1428
      %v1445 = vmul.f32 %v1317, %v1429
      %v1446 = vmul.f32 %v1318, %v1430
      %v1447 = vmul.f32 %v1319, %v1431
      %v1448 = vmul.f32 %v1320, %v1432
      %v1450 = vlaneseq
      %v1451 = vshrl.u32 %v1450, 7
      %v1452 = vsub.s32 0, %v1451
      %v1453 = vrot.slane %v1237, %v1452
      %v1455 = vmul.f32 %v1433, %v1453
      %v1456 = vmul.f32 %v1434, %v1453
      %v1457 = vmul.f32 %v1435, %v1453
      %v1458 = vmul.f32 %v1436, %v1453
      %v1459 = vmul.f32 %v1437, %v1453
      %v1460 = vmul.f32 %v1438, %v1453
      %v1461 = vmul.f32 %v1439, %v1453
      %v1462 = vmul.f32 %v1440, %v1453
      %v1463 = vmul.f32 %v1441, %v1453
      %v1464 = vmul.f32 %v1442, %v1453
      %v1465 = vmul.f32 %v1443, %v1453
      %v1466 = vmul.f32 %v1444, %v1453
      %v1467 = vmul.f32 %v1445, %v1453
      %v1468 = vmul.f32 %v1446, %v1453
      %v1469 = vmul.f32 %v1447, %v1453
      %v1470 = vmul.f32 %v1448, %v1453
      %v1472 = vlaneseq
      %v1473 = vshrl.u32 %v1472, 7
      %v1474 = vsub.s32 0, %v1473
      %v1475 = vrot.slane %v1238, %v1474
      %v1477 = vadd.f32 %v1455, %v1475
      %v1478 = vadd.f32 %v1456, %v1475
      %v1479 = vadd.f32 %v1457, %v1475
      %v1480 = vadd.f32 %v1458, %v1475
      %v1481 = vadd.f32 %v1459, %v1475
      %v1482 = vadd.f32 %v1460, %v1475
      %v1483 = vadd.f32 %v1461, %v1475
      %v1484 = vadd.f32 %v1462, %v1475
      %v1485 = vadd.f32 %v1463, %v1475
      %v1486 = vadd.f32 %v1464, %v1475
      %v1487 = vadd.f32 %v1465, %v1475
      %v1488 = vadd.f32 %v1466, %v1475
      %v1489 = vadd.f32 %v1467, %v1475
      %v1490 = vadd.f32 %v1468, %v1475
      %v1491 = vadd.f32 %v1469, %v1475
      %v1492 = vadd.f32 %v1470, %v1475
      %v1493 = vmul.f32 %v1477, 0.5
      %v1494 = vmul.f32 %v1478, 0.5
      %v1495 = vmul.f32 %v1479, 0.5
      %v1496 = vmul.f32 %v1480, 0.5
      %v1497 = vmul.f32 %v1481, 0.5
      %v1498 = vmul.f32 %v1482, 0.5
      %v1499 = vmul.f32 %v1483, 0.5
      %v1500 = vmul.f32 %v1484, 0.5
      %v1501 = vmul.f32 %v1485, 0.5
      %v1502 = vmul.f32 %v1486, 0.5
      %v1503 = vmul.f32 %v1487, 0.5
      %v1504 = vmul.f32 %v1488, 0.5
      %v1505 = vmul.f32 %v1489, 0.5
      %v1506 = vmul.f32 %v1490, 0.5
      %v1507 = vmul.f32 %v1491, 0.5
      %v1508 = vmul.f32 %v1492, 0.5
      %v1509 = vmul.f32 %v1477, 0.70710677
      %v1510 = vmul.f32 %v1478, 0.70710677
      %v1511 = vmul.f32 %v1479, 0.70710677
      %v1512 = vmul.f32 %v1480, 0.70710677
      %v1513 = vmul.f32 %v1481, 0.70710677
      %v1514 = vmul.f32 %v1482, 0.70710677
      %v1515 = vmul.f32 %v1483, 0.70710677
      %v1516 = vmul.f32 %v1484, 0.70710677
      %v1517 = vmul.f32 %v1485, 0.70710677
      %v1518 = vmul.f32 %v1486, 0.70710677
      %v1519 = vmul.f32 %v1487, 0.70710677
      %v1520 = vmul.f32 %v1488, 0.70710677
      %v1521 = vmul.f32 %v1489, 0.70710677
      %v1522 = vmul.f32 %v1490, 0.70710677
      %v1523 = vmul.f32 %v1491, 0.70710677
      %v1524 = vmul.f32 %v1492, 0.70710677
      %vm1525 = vcmp.lt.f32.partialorder %v1509, 0.0
      %vm1526 = vcmp.lt.f32.partialorder %v1510, 0.0
      %vm1527 = vcmp.lt.f32.partialorder %v1511, 0.0
      %vm1528 = vcmp.lt.f32.partialorder %v1512, 0.0
      %vm1529 = vcmp.lt.f32.partialorder %v1513, 0.0
      %vm1530 = vcmp.lt.f32.partialorder %v1514, 0.0
      %vm1531 = vcmp.lt.f32.partialorder %v1515, 0.0
      %vm1532 = vcmp.lt.f32.partialorder %v1516, 0.0
      %vm1533 = vcmp.lt.f32.partialorder %v1517, 0.0
      %vm1534 = vcmp.lt.f32.partialorder %v1518, 0.0
      %vm1535 = vcmp.lt.f32.partialorder %v1519, 0.0
      %vm1536 = vcmp.lt.f32.partialorder %v1520, 0.0
      %vm1537 = vcmp.lt.f32.partialorder %v1521, 0.0
      %vm1538 = vcmp.lt.f32.partialorder %v1522, 0.0
      %vm1539 = vcmp.lt.f32.partialorder %v1523, 0.0
      %vm1540 = vcmp.lt.f32.partialorder %v1524, 0.0
      %v1541 = vsel %vm1525, -1.0, 1.0
      %v1542 = vsel %vm1526, -1.0, 1.0
      %v1543 = vsel %vm1527, -1.0, 1.0
      %v1544 = vsel %vm1528, -1.0, 1.0
      %v1545 = vsel %vm1529, -1.0, 1.0
      %v1546 = vsel %vm1530, -1.0, 1.0
      %v1547 = vsel %vm1531, -1.0, 1.0
      %v1548 = vsel %vm1532, -1.0, 1.0
      %v1549 = vsel %vm1533, -1.0, 1.0
      %v1550 = vsel %vm1534, -1.0, 1.0
      %v1551 = vsel %vm1535, -1.0, 1.0
      %v1552 = vsel %vm1536, -1.0, 1.0
      %v1553 = vsel %vm1537, -1.0, 1.0
      %v1554 = vsel %vm1538, -1.0, 1.0
      %v1555 = vsel %vm1539, -1.0, 1.0
      %v1556 = vsel %vm1540, -1.0, 1.0
      %v1557 = vand.u32 2147483647, %v1509
      %v1558 = vand.u32 2147483647, %v1510
      %v1559 = vand.u32 2147483647, %v1511
      %v1560 = vand.u32 2147483647, %v1512
      %v1561 = vand.u32 2147483647, %v1513
      %v1562 = vand.u32 2147483647, %v1514
      %v1563 = vand.u32 2147483647, %v1515
      %v1564 = vand.u32 2147483647, %v1516
      %v1565 = vand.u32 2147483647, %v1517
      %v1566 = vand.u32 2147483647, %v1518
      %v1567 = vand.u32 2147483647, %v1519
      %v1568 = vand.u32 2147483647, %v1520
      %v1569 = vand.u32 2147483647, %v1521
      %v1570 = vand.u32 2147483647, %v1522
      %v1571 = vand.u32 2147483647, %v1523
      %v1572 = vand.u32 2147483647, %v1524
      %v1573 = vmul.f32 %v1557, 0.3275911
      %v1574 = vmul.f32 %v1558, 0.3275911
      %v1575 = vmul.f32 %v1559, 0.3275911
      %v1576 = vmul.f32 %v1560, 0.3275911
      %v1577 = vmul.f32 %v1561, 0.3275911
      %v1578 = vmul.f32 %v1562, 0.3275911
      %v1579 = vmul.f32 %v1563, 0.3275911
      %v1580 = vmul.f32 %v1564, 0.3275911
      %v1581 = vmul.f32 %v1565, 0.3275911
      %v1582 = vmul.f32 %v1566, 0.3275911
      %v1583 = vmul.f32 %v1567, 0.3275911
      %v1584 = vmul.f32 %v1568, 0.3275911
      %v1585 = vmul.f32 %v1569, 0.3275911
      %v1586 = vmul.f32 %v1570, 0.3275911
      %v1587 = vmul.f32 %v1571, 0.3275911
      %v1588 = vmul.f32 %v1572, 0.3275911
      %v1589 = vadd.f32 %v1573, 1.0
      %v1590 = vadd.f32 %v1574, 1.0
      %v1591 = vadd.f32 %v1575, 1.0
      %v1592 = vadd.f32 %v1576, 1.0
      %v1593 = vadd.f32 %v1577, 1.0
      %v1594 = vadd.f32 %v1578, 1.0
      %v1595 = vadd.f32 %v1579, 1.0
      %v1596 = vadd.f32 %v1580, 1.0
      %v1597 = vadd.f32 %v1581, 1.0
      %v1598 = vadd.f32 %v1582, 1.0
      %v1599 = vadd.f32 %v1583, 1.0
      %v1600 = vadd.f32 %v1584, 1.0
      %v1601 = vadd.f32 %v1585, 1.0
      %v1602 = vadd.f32 %v1586, 1.0
      %v1603 = vadd.f32 %v1587, 1.0
      %v1604 = vadd.f32 %v1588, 1.0
      %v1605 = vrcp.pop %v1589
      %v1606 = vrcp.pop %v1590
      %v1607 = vrcp.pop %v1591
      %v1608 = vrcp.pop %v1592
      %v1609 = vrcp.pop %v1593
      %v1610 = vrcp.pop %v1594
      %v1611 = vrcp.pop %v1595
      %v1612 = vrcp.pop %v1596
      %v1613 = vrcp.pop %v1597
      %v1614 = vrcp.pop %v1598
      %v1615 = vrcp.pop %v1599
      %v1616 = vrcp.pop %v1600
      %v1617 = vrcp.pop %v1601
      %v1618 = vrcp.pop %v1602
      %v1619 = vrcp.pop %v1603
      %v1620 = vrcp.pop %v1604
      %v1621 = vmul.f32 %v1589, %v1605
      %v1622 = vmul.f32 %v1590, %v1606
      %v1623 = vmul.f32 %v1591, %v1607
      %v1624 = vmul.f32 %v1592, %v1608
      %v1625 = vmul.f32 %v1593, %v1609
      %v1626 = vmul.f32 %v1594, %v1610
      %v1627 = vmul.f32 %v1595, %v1611
      %v1628 = vmul.f32 %v1596, %v1612
      %v1629 = vmul.f32 %v1597, %v1613
      %v1630 = vmul.f32 %v1598, %v1614
      %v1631 = vmul.f32 %v1599, %v1615
      %v1632 = vmul.f32 %v1600, %v1616
      %v1633 = vmul.f32 %v1601, %v1617
      %v1634 = vmul.f32 %v1602, %v1618
      %v1635 = vmul.f32 %v1603, %v1619
      %v1636 = vmul.f32 %v1604, %v1620
      %v1637 = vsub.f32 2.0, %v1621
      %v1638 = vsub.f32 2.0, %v1622
      %v1639 = vsub.f32 2.0, %v1623
      %v1640 = vsub.f32 2.0, %v1624
      %v1641 = vsub.f32 2.0, %v1625
      %v1642 = vsub.f32 2.0, %v1626
      %v1643 = vsub.f32 2.0, %v1627
      %v1644 = vsub.f32 2.0, %v1628
      %v1645 = vsub.f32 2.0, %v1629
      %v1646 = vsub.f32 2.0, %v1630
      %v1647 = vsub.f32 2.0, %v1631
      %v1648 = vsub.f32 2.0, %v1632
      %v1649 = vsub.f32 2.0, %v1633
      %v1650 = vsub.f32 2.0, %v1634
      %v1651 = vsub.f32 2.0, %v1635
      %v1652 = vsub.f32 2.0, %v1636
      %v1653 = vmul.f32 %v1605, %v1637
      %v1654 = vmul.f32 %v1606, %v1638
      %v1655 = vmul.f32 %v1607, %v1639
      %v1656 = vmul.f32 %v1608, %v1640
      %v1657 = vmul.f32 %v1609, %v1641
      %v1658 = vmul.f32 %v1610, %v1642
      %v1659 = vmul.f32 %v1611, %v1643
      %v1660 = vmul.f32 %v1612, %v1644
      %v1661 = vmul.f32 %v1613, %v1645
      %v1662 = vmul.f32 %v1614, %v1646
      %v1663 = vmul.f32 %v1615, %v1647
      %v1664 = vmul.f32 %v1616, %v1648
      %v1665 = vmul.f32 %v1617, %v1649
      %v1666 = vmul.f32 %v1618, %v1650
      %v1667 = vmul.f32 %v1619, %v1651
      %v1668 = vmul.f32 %v1620, %v1652
      %v1669 = vmul.f32 %v1653, 1.0614054
      %v1670 = vmul.f32 %v1654, 1.0614054
      %v1671 = vmul.f32 %v1655, 1.0614054
      %v1672 = vmul.f32 %v1656, 1.0614054
      %v1673 = vmul.f32 %v1657, 1.0614054
      %v1674 = vmul.f32 %v1658, 1.0614054
      %v1675 = vmul.f32 %v1659, 1.0614054
      %v1676 = vmul.f32 %v1660, 1.0614054
      %v1677 = vmul.f32 %v1661, 1.0614054
      %v1678 = vmul.f32 %v1662, 1.0614054
      %v1679 = vmul.f32 %v1663, 1.0614054
      %v1680 = vmul.f32 %v1664, 1.0614054
      %v1681 = vmul.f32 %v1665, 1.0614054
      %v1682 = vmul.f32 %v1666, 1.0614054
      %v1683 = vmul.f32 %v1667, 1.0614054
      %v1684 = vmul.f32 %v1668, 1.0614054
      %v1685 = vadd.f32 %v1669, -1.4531521
      %v1686 = vadd.f32 %v1670, -1.4531521
      %v1687 = vadd.f32 %v1671, -1.4531521
      %v1688 = vadd.f32 %v1672, -1.4531521
      %v1689 = vadd.f32 %v1673, -1.4531521
      %v1690 = vadd.f32 %v1674, -1.4531521
      %v1691 = vadd.f32 %v1675, -1.4531521
      %v1692 = vadd.f32 %v1676, -1.4531521
      %v1693 = vadd.f32 %v1677, -1.4531521
      %v1694 = vadd.f32 %v1678, -1.4531521
      %v1695 = vadd.f32 %v1679, -1.4531521
      %v1696 = vadd.f32 %v1680, -1.4531521
      %v1697 = vadd.f32 %v1681, -1.4531521
      %v1698 = vadd.f32 %v1682, -1.4531521
      %v1699 = vadd.f32 %v1683, -1.4531521
      %v1700 = vadd.f32 %v1684, -1.4531521
      %v1701 = vmul.f32 %v1685, %v1653
      %v1702 = vmul.f32 %v1686, %v1654
      %v1703 = vmul.f32 %v1687, %v1655
      %v1704 = vmul.f32 %v1688, %v1656
      %v1705 = vmul.f32 %v1689, %v1657
      %v1706 = vmul.f32 %v1690, %v1658
      %v1707 = vmul.f32 %v1691, %v1659
      %v1708 = vmul.f32 %v1692, %v1660
      %v1709 = vmul.f32 %v1693, %v1661
      %v1710 = vmul.f32 %v1694, %v1662
      %v1711 = vmul.f32 %v1695, %v1663
      %v1712 = vmul.f32 %v1696, %v1664
      %v1713 = vmul.f32 %v1697, %v1665
      %v1714 = vmul.f32 %v1698, %v1666
      %v1715 = vmul.f32 %v1699, %v1667
      %v1716 = vmul.f32 %v1700, %v1668
      %v1717 = vadd.f32 %v1701, 1.4214138
      %v1718 = vadd.f32 %v1702, 1.4214138
      %v1719 = vadd.f32 %v1703, 1.4214138
      %v1720 = vadd.f32 %v1704, 1.4214138
      %v1721 = vadd.f32 %v1705, 1.4214138
      %v1722 = vadd.f32 %v1706, 1.4214138
      %v1723 = vadd.f32 %v1707, 1.4214138
      %v1724 = vadd.f32 %v1708, 1.4214138
      %v1725 = vadd.f32 %v1709, 1.4214138
      %v1726 = vadd.f32 %v1710, 1.4214138
      %v1727 = vadd.f32 %v1711, 1.4214138
      %v1728 = vadd.f32 %v1712, 1.4214138
      %v1729 = vadd.f32 %v1713, 1.4214138
      %v1730 = vadd.f32 %v1714, 1.4214138
      %v1731 = vadd.f32 %v1715, 1.4214138
      %v1732 = vadd.f32 %v1716, 1.4214138
      %v1733 = vmul.f32 %v1717, %v1653
      %v1734 = vmul.f32 %v1718, %v1654
      %v1735 = vmul.f32 %v1719, %v1655
      %v1736 = vmul.f32 %v1720, %v1656
      %v1737 = vmul.f32 %v1721, %v1657
      %v1738 = vmul.f32 %v1722, %v1658
      %v1739 = vmul.f32 %v1723, %v1659
      %v1740 = vmul.f32 %v1724, %v1660
      %v1741 = vmul.f32 %v1725, %v1661
      %v1742 = vmul.f32 %v1726, %v1662
      %v1743 = vmul.f32 %v1727, %v1663
      %v1744 = vmul.f32 %v1728, %v1664
      %v1745 = vmul.f32 %v1729, %v1665
      %v1746 = vmul.f32 %v1730, %v1666
      %v1747 = vmul.f32 %v1731, %v1667
      %v1748 = vmul.f32 %v1732, %v1668
      %v1749 = vadd.f32 %v1733, -0.28449672
      %v1750 = vadd.f32 %v1734, -0.28449672
      %v1751 = vadd.f32 %v1735, -0.28449672
      %v1752 = vadd.f32 %v1736, -0.28449672
      %v1753 = vadd.f32 %v1737, -0.28449672
      %v1754 = vadd.f32 %v1738, -0.28449672
      %v1755 = vadd.f32 %v1739, -0.28449672
      %v1756 = vadd.f32 %v1740, -0.28449672
      %v1757 = vadd.f32 %v1741, -0.28449672
      %v1758 = vadd.f32 %v1742, -0.28449672
      %v1759 = vadd.f32 %v1743, -0.28449672
      %v1760 = vadd.f32 %v1744, -0.28449672
      %v1761 = vadd.f32 %v1745, -0.28449672
      %v1762 = vadd.f32 %v1746, -0.28449672
      %v1763 = vadd.f32 %v1747, -0.28449672
      %v1764 = vadd.f32 %v1748, -0.28449672
      %v1765 = vmul.f32 %v1749, %v1653
      %v1766 = vmul.f32 %v1750, %v1654
      %v1767 = vmul.f32 %v1751, %v1655
      %v1768 = vmul.f32 %v1752, %v1656
      %v1769 = vmul.f32 %v1753, %v1657
      %v1770 = vmul.f32 %v1754, %v1658
      %v1771 = vmul.f32 %v1755, %v1659
      %v1772 = vmul.f32 %v1756, %v1660
      %v1773 = vmul.f32 %v1757, %v1661
      %v1774 = vmul.f32 %v1758, %v1662
      %v1775 = vmul.f32 %v1759, %v1663
      %v1776 = vmul.f32 %v1760, %v1664
      %v1777 = vmul.f32 %v1761, %v1665
      %v1778 = vmul.f32 %v1762, %v1666
      %v1779 = vmul.f32 %v1763, %v1667
      %v1780 = vmul.f32 %v1764, %v1668
      %v1781 = vadd.f32 %v1765, 0.2548296
      %v1782 = vadd.f32 %v1766, 0.2548296
      %v1783 = vadd.f32 %v1767, 0.2548296
      %v1784 = vadd.f32 %v1768, 0.2548296
      %v1785 = vadd.f32 %v1769, 0.2548296
      %v1786 = vadd.f32 %v1770, 0.2548296
      %v1787 = vadd.f32 %v1771, 0.2548296
      %v1788 = vadd.f32 %v1772, 0.2548296
      %v1789 = vadd.f32 %v1773, 0.2548296
      %v1790 = vadd.f32 %v1774, 0.2548296
      %v1791 = vadd.f32 %v1775, 0.2548296
      %v1792 = vadd.f32 %v1776, 0.2548296
      %v1793 = vadd.f32 %v1777, 0.2548296
      %v1794 = vadd.f32 %v1778, 0.2548296
      %v1795 = vadd.f32 %v1779, 0.2548296
      %v1796 = vadd.f32 %v1780, 0.2548296
      %v1797 = vmul.f32 %v1781, %v1653
      %v1798 = vmul.f32 %v1782, %v1654
      %v1799 = vmul.f32 %v1783, %v1655
      %v1800 = vmul.f32 %v1784, %v1656
      %v1801 = vmul.f32 %v1785, %v1657
      %v1802 = vmul.f32 %v1786, %v1658
      %v1803 = vmul.f32 %v1787, %v1659
      %v1804 = vmul.f32 %v1788, %v1660
      %v1805 = vmul.f32 %v1789, %v1661
      %v1806 = vmul.f32 %v1790, %v1662
      %v1807 = vmul.f32 %v1791, %v1663
      %v1808 = vmul.f32 %v1792, %v1664
      %v1809 = vmul.f32 %v1793, %v1665
      %v1810 = vmul.f32 %v1794, %v1666
      %v1811 = vmul.f32 %v1795, %v1667
      %v1812 = vmul.f32 %v1796, %v1668
      %v1813 = vsub.f32 0.0, %v1557
      %v1814 = vsub.f32 0.0, %v1558
      %v1815 = vsub.f32 0.0, %v1559
      %v1816 = vsub.f32 0.0, %v1560
      %v1817 = vsub.f32 0.0, %v1561
      %v1818 = vsub.f32 0.0, %v1562
      %v1819 = vsub.f32 0.0, %v1563
      %v1820 = vsub.f32 0.0, %v1564
      %v1821 = vsub.f32 0.0, %v1565
      %v1822 = vsub.f32 0.0, %v1566
      %v1823 = vsub.f32 0.0, %v1567
      %v1824 = vsub.f32 0.0, %v1568
      %v1825 = vsub.f32 0.0, %v1569
      %v1826 = vsub.f32 0.0, %v1570
      %v1827 = vsub.f32 0.0, %v1571
      %v1828 = vsub.f32 0.0, %v1572
      %v1829 = vmul.f32 %v1813, %v1557
      %v1830 = vmul.f32 %v1814, %v1558
      %v1831 = vmul.f32 %v1815, %v1559
      %v1832 = vmul.f32 %v1816, %v1560
      %v1833 = vmul.f32 %v1817, %v1561
      %v1834 = vmul.f32 %v1818, %v1562
      %v1835 = vmul.f32 %v1819, %v1563
      %v1836 = vmul.f32 %v1820, %v1564
      %v1837 = vmul.f32 %v1821, %v1565
      %v1838 = vmul.f32 %v1822, %v1566
      %v1839 = vmul.f32 %v1823, %v1567
      %v1840 = vmul.f32 %v1824, %v1568
      %v1841 = vmul.f32 %v1825, %v1569
      %v1842 = vmul.f32 %v1826, %v1570
      %v1843 = vmul.f32 %v1827, %v1571
      %v1844 = vmul.f32 %v1828, %v1572
      %v1845 = vmul.f32 %v1829, 1.442695
      %v1846 = vpow.pop %v1845
      %v1847 = vmul.f32 %v1830, 1.442695
      %v1848 = vpow.pop %v1847
      %v1849 = vmul.f32 %v1831, 1.442695
      %v1850 = vpow.pop %v1849
      %v1851 = vmul.f32 %v1832, 1.442695
      %v1852 = vpow.pop %v1851
      %v1853 = vmul.f32 %v1833, 1.442695
      %v1854 = vpow.pop %v1853
      %v1855 = vmul.f32 %v1834, 1.442695
      %v1856 = vpow.pop %v1855
      %v1857 = vmul.f32 %v1835, 1.442695
      %v1858 = vpow.pop %v1857
      %v1859 = vmul.f32 %v1836, 1.442695
      %v1860 = vpow.pop %v1859
      %v1861 = vmul.f32 %v1837, 1.442695
      %v1862 = vpow.pop %v1861
      %v1863 = vmul.f32 %v1838, 1.442695
      %v1864 = vpow.pop %v1863
      %v1865 = vmul.f32 %v1839, 1.442695
      %v1866 = vpow.pop %v1865
      %v1867 = vmul.f32 %v1840, 1.442695
      %v1868 = vpow.pop %v1867
      %v1869 = vmul.f32 %v1841, 1.442695
      %v1870 = vpow.pop %v1869
      %v1871 = vmul.f32 %v1842, 1.442695
      %v1872 = vpow.pop %v1871
      %v1873 = vmul.f32 %v1843, 1.442695
      %v1874 = vpow.pop %v1873
      %v1875 = vmul.f32 %v1844, 1.442695
      %v1876 = vpow.pop %v1875
      %v1877 = vmul.f32 %v1797, %v1846
      %v1878 = vmul.f32 %v1798, %v1848
      %v1879 = vmul.f32 %v1799, %v1850
      %v1880 = vmul.f32 %v1800, %v1852
      %v1881 = vmul.f32 %v1801, %v1854
      %v1882 = vmul.f32 %v1802, %v1856
      %v1883 = vmul.f32 %v1803, %v1858
      %v1884 = vmul.f32 %v1804, %v1860
      %v1885 = vmul.f32 %v1805, %v1862
      %v1886 = vmul.f32 %v1806, %v1864
      %v1887 = vmul.f32 %v1807, %v1866
      %v1888 = vmul.f32 %v1808, %v1868
      %v1889 = vmul.f32 %v1809, %v1870
      %v1890 = vmul.f32 %v1810, %v1872
      %v1891 = vmul.f32 %v1811, %v1874
      %v1892 = vmul.f32 %v1812, %v1876
      %v1893 = vsub.f32 1.0, %v1877
      %v1894 = vsub.f32 1.0, %v1878
      %v1895 = vsub.f32 1.0, %v1879
      %v1896 = vsub.f32 1.0, %v1880
      %v1897 = vsub.f32 1.0, %v1881
      %v1898 = vsub.f32 1.0, %v1882
      %v1899 = vsub.f32 1.0, %v1883
      %v1900 = vsub.f32 1.0, %v1884
      %v1901 = vsub.f32 1.0, %v1885
      %v1902 = vsub.f32 1.0, %v1886
      %v1903 = vsub.f32 1.0, %v1887
      %v1904 = vsub.f32 1.0, %v1888
      %v1905 = vsub.f32 1.0, %v1889
      %v1906 = vsub.f32 1.0, %v1890
      %v1907 = vsub.f32 1.0, %v1891
      %v1908 = vsub.f32 1.0, %v1892
      %v1909 = vmul.f32 %v1541, %v1893
      %v1910 = vmul.f32 %v1542, %v1894
      %v1911 = vmul.f32 %v1543, %v1895
      %v1912 = vmul.f32 %v1544, %v1896
      %v1913 = vmul.f32 %v1545, %v1897
      %v1914 = vmul.f32 %v1546, %v1898
      %v1915 = vmul.f32 %v1547, %v1899
      %v1916 = vmul.f32 %v1548, %v1900
      %v1917 = vmul.f32 %v1549, %v1901
      %v1918 = vmul.f32 %v1550, %v1902
      %v1919 = vmul.f32 %v1551, %v1903
      %v1920 = vmul.f32 %v1552, %v1904
      %v1921 = vmul.f32 %v1553, %v1905
      %v1922 = vmul.f32 %v1554, %v1906
      %v1923 = vmul.f32 %v1555, %v1907
      %v1924 = vmul.f32 %v1556, %v1908
      %v1925 = vadd.f32 %v1909, 1.0
      %v1926 = vadd.f32 %v1910, 1.0
      %v1927 = vadd.f32 %v1911, 1.0
      %v1928 = vadd.f32 %v1912, 1.0
      %v1929 = vadd.f32 %v1913, 1.0
      %v1930 = vadd.f32 %v1914, 1.0
      %v1931 = vadd.f32 %v1915, 1.0
      %v1932 = vadd.f32 %v1916, 1.0
      %v1933 = vadd.f32 %v1917, 1.0
      %v1934 = vadd.f32 %v1918, 1.0
      %v1935 = vadd.f32 %v1919, 1.0
      %v1936 = vadd.f32 %v1920, 1.0
      %v1937 = vadd.f32 %v1921, 1.0
      %v1938 = vadd.f32 %v1922, 1.0
      %v1939 = vadd.f32 %v1923, 1.0
      %v1940 = vadd.f32 %v1924, 1.0
      %v1941 = vmul.f32 %v1493, %v1925
      %v1942 = vmul.f32 %v1494, %v1926
      %v1943 = vmul.f32 %v1495, %v1927
      %v1944 = vmul.f32 %v1496, %v1928
      %v1945 = vmul.f32 %v1497, %v1929
      %v1946 = vmul.f32 %v1498, %v1930
      %v1947 = vmul.f32 %v1499, %v1931
      %v1948 = vmul.f32 %v1500, %v1932
      %v1949 = vmul.f32 %v1501, %v1933
      %v1950 = vmul.f32 %v1502, %v1934
      %v1951 = vmul.f32 %v1503, %v1935
      %v1952 = vmul.f32 %v1504, %v1936
      %v1953 = vmul.f32 %v1505, %v1937
      %v1954 = vmul.f32 %v1506, %v1938
      %v1955 = vmul.f32 %v1507, %v1939
      %v1956 = vmul.f32 %v1508, %v1940
      %p1957 = scmp.eq.s32.totalorder %s37, 2
      %s1958 = scalar_select %p1957, 1, 0
      %v1959 = vstv %s1958
      %vm1960 = vcmp.eq.s32.totalorder %v1959, 1
      %v1961 = vsel %vm1960, 0.0, %v1941
      %v1962 = vsel %vm1960, 0.0, %v1942
      %s1963 = scalar_lea.vmem [#allocation2], 144
      %1964 = vst.msk [vmem:[%s1963] sm:$0xff] %vm1239, %v1961
      %1965 = vst.msk [vmem:[%s1963 + $0x8] sm:$0xff] %vm1239, %v1962
      %p1966 = scmp.gt.s32.totalorder %s37, 0
      // Predicated region
      $region105: #{tpu_custom_call.1} parent=103 // pred_check
        %p1967 = pneg %p1966
      $region106: #{tpu_custom_call.1} parent=103 // pred_check_branch
        %1969 = sbr.rel (%p1967) target = $region108
      $region107: #{tpu_custom_call.1} parent=103 // pred_region
        %v1970 = vld [vmem:[#allocation2] sm:$0xff]
        %v1971 = vld [vmem:[#allocation2 + $0x8] sm:$0xff]
        %v1972 = vld [vmem:[#allocation2 + $0x10] sm:$0xff]
        %v1973 = vld [vmem:[#allocation2 + $0x18] sm:$0xff]
        %v1974 = vld [vmem:[#allocation2 + $0x20] sm:$0xff]
        %v1975 = vld [vmem:[#allocation2 + $0x28] sm:$0xff]
        %v1976 = vld [vmem:[#allocation2 + $0x30] sm:$0xff]
        %v1977 = vld [vmem:[#allocation2 + $0x38] sm:$0xff]
        %v1978 = vld [vmem:[#allocation2 + $0x40] sm:$0xff]
        %v1979 = vld [vmem:[#allocation2 + $0x48] sm:$0xff]
        %v1980 = vld [vmem:[#allocation2 + $0x50] sm:$0xff]
        %v1981 = vld [vmem:[#allocation2 + $0x58] sm:$0xff]
        %v1982 = vld [vmem:[#allocation2 + $0x60] sm:$0xff]
        %v1983 = vld [vmem:[#allocation2 + $0x68] sm:$0xff]
        %v1984 = vld [vmem:[#allocation2 + $0x70] sm:$0xff]
        %v1985 = vld [vmem:[#allocation2 + $0x78] sm:$0xff]
        %v1986 = vld [vmem:[#allocation2 + $0x80] sm:$0xff]
        %v1987 = vld [vmem:[#allocation2 + $0x88] sm:$0xff]
        %v1988 = vld [vmem:[#allocation2 + $0x90] sm:$0xff]
        %v1989 = vld [vmem:[#allocation2 + $0x98] sm:$0xff]
        %v1990 = vld [vmem:[%s7] sm:$0x7]
        %vm2007 = vcmask 1040384
        %v2008 = vrot.slane %v1970, 7
        %v2009 = vrot.slane %v1971, 7
        %v2010 = vsel %vm2007, %v2008, %v2009
        %v2011 = vrot.slane %v1972, 7
        %v2012 = vrot.slane %v1973, 7
        %v2013 = vsel %vm2007, %v2011, %v2012
        %v2014 = vrot.slane %v1974, 7
        %v2015 = vrot.slane %v1975, 7
        %v2016 = vsel %vm2007, %v2014, %v2015
        %v2017 = vrot.slane %v1976, 7
        %v2018 = vrot.slane %v1977, 7
        %v2019 = vsel %vm2007, %v2017, %v2018
        %v2020 = vrot.slane %v1978, 7
        %v2021 = vrot.slane %v1979, 7
        %v2022 = vsel %vm2007, %v2020, %v2021
        %v2023 = vrot.slane %v1980, 7
        %v2024 = vrot.slane %v1981, 7
        %v2025 = vsel %vm2007, %v2023, %v2024
        %v2026 = vrot.slane %v1982, 7
        %v2027 = vrot.slane %v1983, 7
        %v2028 = vsel %vm2007, %v2026, %v2027
        %v2029 = vrot.slane %v1984, 7
        %v2030 = vrot.slane %v1985, 7
        %v2031 = vsel %vm2007, %v2029, %v2030
        %v2048 = vsel %vm2007, 0.0, %v2008
        %v2049 = vsel %vm2007, 0.0, %v2011
        %v2050 = vsel %vm2007, 0.0, %v2014
        %v2051 = vsel %vm2007, 0.0, %v2017
        %v2052 = vsel %vm2007, 0.0, %v2020
        %v2053 = vsel %vm2007, 0.0, %v2023
        %v2054 = vsel %vm2007, 0.0, %v2026
        %v2055 = vsel %vm2007, 0.0, %v2029
        %vm2056 = vcmask 1046528
        %v2057 = vrot.slane %v1970, 1
        %v2058 = vrot.slane %v1971, 1
        %v2059 = vsel %vm2056, %v2057, %v2058
        %v2060 = vrot.slane %v1972, 1
        %v2061 = vrot.slane %v1973, 1
        %v2062 = vsel %vm2056, %v2060, %v2061
        %v2063 = vrot.slane %v1974, 1
        %v2064 = vrot.slane %v1975, 1
        %v2065 = vsel %vm2056, %v2063, %v2064
        %v2066 = vrot.slane %v1976, 1
        %v2067 = vrot.slane %v1977, 1
        %v2068 = vsel %vm2056, %v2066, %v2067
        %v2069 = vrot.slane %v1978, 1
        %v2070 = vrot.slane %v1979, 1
        %v2071 = vsel %vm2056, %v2069, %v2070
        %v2072 = vrot.slane %v1980, 1
        %v2073 = vrot.slane %v1981, 1
        %v2074 = vsel %vm2056, %v2072, %v2073
        %v2075 = vrot.slane %v1982, 1
        %v2076 = vrot.slane %v1983, 1
        %v2077 = vsel %vm2056, %v2075, %v2076
        %v2078 = vrot.slane %v1984, 1
        %v2079 = vrot.slane %v1985, 1
        %v2080 = vsel %vm2056, %v2078, %v2079
        %v2097 = vsel %vm2056, %v2058, 0.0
        %v2098 = vsel %vm2056, %v2061, 0.0
        %v2099 = vsel %vm2056, %v2064, 0.0
        %v2100 = vsel %vm2056, %v2067, 0.0
        %v2101 = vsel %vm2056, %v2070, 0.0
        %v2102 = vsel %vm2056, %v2073, 0.0
        %v2103 = vsel %vm2056, %v2076, 0.0
        %v2104 = vsel %vm2056, %v2079, 0.0
        %v2105 = vlaneseq
        %v2106 = vshrl.u32 %v2105, 7
        %v2107 = vsub.s32 0, %v2106
        %v2108 = vrot.slane %v1990, %v2107
        %v2109 = vmul.f32 %v2048, %v2108
        %v2110 = vmul.f32 %v2010, %v2108
        %v2111 = vmul.f32 %v2049, %v2108
        %v2112 = vmul.f32 %v2013, %v2108
        %v2113 = vmul.f32 %v2050, %v2108
        %v2114 = vmul.f32 %v2016, %v2108
        %v2115 = vmul.f32 %v2051, %v2108
        %v2116 = vmul.f32 %v2019, %v2108
        %v2117 = vmul.f32 %v2052, %v2108
        %v2118 = vmul.f32 %v2022, %v2108
        %v2119 = vmul.f32 %v2053, %v2108
        %v2120 = vmul.f32 %v2025, %v2108
        %v2121 = vmul.f32 %v2054, %v2108
        %v2122 = vmul.f32 %v2028, %v2108
        %v2123 = vmul.f32 %v2055, %v2108
        %v2124 = vmul.f32 %v2031, %v2108
        %v2125 = vadd.f32 %v2109, 0.0
        %v2126 = vadd.f32 %v2110, 0.0
        %v2127 = vadd.f32 %v2111, 0.0
        %v2128 = vadd.f32 %v2112, 0.0
        %v2129 = vadd.f32 %v2113, 0.0
        %v2130 = vadd.f32 %v2114, 0.0
        %v2131 = vadd.f32 %v2115, 0.0
        %v2132 = vadd.f32 %v2116, 0.0
        %v2133 = vadd.f32 %v2117, 0.0
        %v2134 = vadd.f32 %v2118, 0.0
        %v2135 = vadd.f32 %v2119, 0.0
        %v2136 = vadd.f32 %v2120, 0.0
        %v2137 = vadd.f32 %v2121, 0.0
        %v2138 = vadd.f32 %v2122, 0.0
        %v2139 = vadd.f32 %v2123, 0.0
        %v2140 = vadd.f32 %v2124, 0.0
        %v2141 = vlaneseq
        %v2142 = vshrl.u32 %v2141, 7
        %v2143 = vsub.s32 1, %v2142
        %v2144 = vrot.slane %v1990, %v2143
        %v2145 = vmul.f32 %v1970, %v2144
        %v2146 = vmul.f32 %v1971, %v2144
        %v2147 = vmul.f32 %v1972, %v2144
        %v2148 = vmul.f32 %v1973, %v2144
        %v2149 = vmul.f32 %v1974, %v2144
        %v2150 = vmul.f32 %v1975, %v2144
        %v2151 = vmul.f32 %v1976, %v2144
        %v2152 = vmul.f32 %v1977, %v2144
        %v2153 = vmul.f32 %v1978, %v2144
        %v2154 = vmul.f32 %v1979, %v2144
        %v2155 = vmul.f32 %v1980, %v2144
        %v2156 = vmul.f32 %v1981, %v2144
        %v2157 = vmul.f32 %v1982, %v2144
        %v2158 = vmul.f32 %v1983, %v2144
        %v2159 = vmul.f32 %v1984, %v2144
        %v2160 = vmul.f32 %v1985, %v2144
        %v2161 = vadd.f32 %v2125, %v2145
        %v2162 = vadd.f32 %v2126, %v2146
        %v2163 = vadd.f32 %v2127, %v2147
        %v2164 = vadd.f32 %v2128, %v2148
        %v2165 = vadd.f32 %v2129, %v2149
        %v2166 = vadd.f32 %v2130, %v2150
        %v2167 = vadd.f32 %v2131, %v2151
        %v2168 = vadd.f32 %v2132, %v2152
        %v2169 = vadd.f32 %v2133, %v2153
        %v2170 = vadd.f32 %v2134, %v2154
        %v2171 = vadd.f32 %v2135, %v2155
        %v2172 = vadd.f32 %v2136, %v2156
        %v2173 = vadd.f32 %v2137, %v2157
        %v2174 = vadd.f32 %v2138, %v2158
        %v2175 = vadd.f32 %v2139, %v2159
        %v2176 = vadd.f32 %v2140, %v2160
        %v2177 = vlaneseq
        %v2178 = vshrl.u32 %v2177, 7
        %v2179 = vsub.s32 2, %v2178
        %v2180 = vrot.slane %v1990, %v2179
        %v2181 = vmul.f32 %v2059, %v2180
        %v2182 = vmul.f32 %v2097, %v2180
        %v2183 = vmul.f32 %v2062, %v2180
        %v2184 = vmul.f32 %v2098, %v2180
        %v2185 = vmul.f32 %v2065, %v2180
        %v2186 = vmul.f32 %v2099, %v2180
        %v2187 = vmul.f32 %v2068, %v2180
        %v2188 = vmul.f32 %v2100, %v2180
        %v2189 = vmul.f32 %v2071, %v2180
        %v2190 = vmul.f32 %v2101, %v2180
        %v2191 = vmul.f32 %v2074, %v2180
        %v2192 = vmul.f32 %v2102, %v2180
        %v2193 = vmul.f32 %v2077, %v2180
        %v2194 = vmul.f32 %v2103, %v2180
        %v2195 = vmul.f32 %v2080, %v2180
        %v2196 = vmul.f32 %v2104, %v2180
        %v2197 = vadd.f32 %v2161, %v2181
        %v2198 = vadd.f32 %v2162, %v2182
        %v2199 = vadd.f32 %v2163, %v2183
        %v2200 = vadd.f32 %v2164, %v2184
        %v2201 = vadd.f32 %v2165, %v2185
        %v2202 = vadd.f32 %v2166, %v2186
        %v2203 = vadd.f32 %v2167, %v2187
        %v2204 = vadd.f32 %v2168, %v2188
        %v2205 = vadd.f32 %v2169, %v2189
        %v2206 = vadd.f32 %v2170, %v2190
        %v2207 = vadd.f32 %v2171, %v2191
        %v2208 = vadd.f32 %v2172, %v2192
        %v2209 = vadd.f32 %v2173, %v2193
        %v2210 = vadd.f32 %v2174, %v2194
        %v2211 = vadd.f32 %v2175, %v2195
        %v2212 = vadd.f32 %v2176, %v2196
        %v2213 = vld [vmem:[%s7 + $0x3] sm:$0x7]
        %v2216 = vrot.slane %v1986, 7
        %v2217 = vrot.slane %v1987, 7
        %v2218 = vsel %vm2007, %v2216, %v2217
        %v2221 = vsel %vm2007, 0.0, %v2216
        %v2222 = vrot.slane %v1986, 1
        %v2223 = vrot.slane %v1987, 1
        %v2224 = vsel %vm2056, %v2222, %v2223
        %v2227 = vsel %vm2056, %v2223, 0.0
        %v2228 = vlaneseq
        %v2229 = vshrl.u32 %v2228, 7
        %v2230 = vsub.s32 0, %v2229
        %v2231 = vrot.slane %v2213, %v2230
        %v2232 = vmul.f32 %v2049, %v2231
        %v2233 = vmul.f32 %v2013, %v2231
        %v2234 = vmul.f32 %v2050, %v2231
        %v2235 = vmul.f32 %v2016, %v2231
        %v2236 = vmul.f32 %v2051, %v2231
        %v2237 = vmul.f32 %v2019, %v2231
        %v2238 = vmul.f32 %v2052, %v2231
        %v2239 = vmul.f32 %v2022, %v2231
        %v2240 = vmul.f32 %v2053, %v2231
        %v2241 = vmul.f32 %v2025, %v2231
        %v2242 = vmul.f32 %v2054, %v2231
        %v2243 = vmul.f32 %v2028, %v2231
        %v2244 = vmul.f32 %v2055, %v2231
        %v2245 = vmul.f32 %v2031, %v2231
        %v2246 = vmul.f32 %v2221, %v2231
        %v2247 = vmul.f32 %v2218, %v2231
        %v2248 = vadd.f32 %v2197, %v2232
        %v2249 = vadd.f32 %v2198, %v2233
        %v2250 = vadd.f32 %v2199, %v2234
        %v2251 = vadd.f32 %v2200, %v2235
        %v2252 = vadd.f32 %v2201, %v2236
        %v2253 = vadd.f32 %v2202, %v2237
        %v2254 = vadd.f32 %v2203, %v2238
        %v2255 = vadd.f32 %v2204, %v2239
        %v2256 = vadd.f32 %v2205, %v2240
        %v2257 = vadd.f32 %v2206, %v2241
        %v2258 = vadd.f32 %v2207, %v2242
        %v2259 = vadd.f32 %v2208, %v2243
        %v2260 = vadd.f32 %v2209, %v2244
        %v2261 = vadd.f32 %v2210, %v2245
        %v2262 = vadd.f32 %v2211, %v2246
        %v2263 = vadd.f32 %v2212, %v2247
        %v2264 = vlaneseq
        %v2265 = vshrl.u32 %v2264, 7
        %v2266 = vsub.s32 1, %v2265
        %v2267 = vrot.slane %v2213, %v2266
        %v2268 = vmul.f32 %v1972, %v2267
        %v2269 = vmul.f32 %v1973, %v2267
        %v2270 = vmul.f32 %v1974, %v2267
        %v2271 = vmul.f32 %v1975, %v2267
        %v2272 = vmul.f32 %v1976, %v2267
        %v2273 = vmul.f32 %v1977, %v2267
        %v2274 = vmul.f32 %v1978, %v2267
        %v2275 = vmul.f32 %v1979, %v2267
        %v2276 = vmul.f32 %v1980, %v2267
        %v2277 = vmul.f32 %v1981, %v2267
        %v2278 = vmul.f32 %v1982, %v2267
        %v2279 = vmul.f32 %v1983, %v2267
        %v2280 = vmul.f32 %v1984, %v2267
        %v2281 = vmul.f32 %v1985, %v2267
        %v2282 = vmul.f32 %v1986, %v2267
        %v2283 = vmul.f32 %v1987, %v2267
        %v2284 = vadd.f32 %v2248, %v2268
        %v2285 = vadd.f32 %v2249, %v2269
        %v2286 = vadd.f32 %v2250, %v2270
        %v2287 = vadd.f32 %v2251, %v2271
        %v2288 = vadd.f32 %v2252, %v2272
        %v2289 = vadd.f32 %v2253, %v2273
        %v2290 = vadd.f32 %v2254, %v2274
        %v2291 = vadd.f32 %v2255, %v2275
        %v2292 = vadd.f32 %v2256, %v2276
        %v2293 = vadd.f32 %v2257, %v2277
        %v2294 = vadd.f32 %v2258, %v2278
        %v2295 = vadd.f32 %v2259, %v2279
        %v2296 = vadd.f32 %v2260, %v2280
        %v2297 = vadd.f32 %v2261, %v2281
        %v2298 = vadd.f32 %v2262, %v2282
        %v2299 = vadd.f32 %v2263, %v2283
        %v2300 = vlaneseq
        %v2301 = vshrl.u32 %v2300, 7
        %v2302 = vsub.s32 2, %v2301
        %v2303 = vrot.slane %v2213, %v2302
        %v2304 = vmul.f32 %v2062, %v2303
        %v2305 = vmul.f32 %v2098, %v2303
        %v2306 = vmul.f32 %v2065, %v2303
        %v2307 = vmul.f32 %v2099, %v2303
        %v2308 = vmul.f32 %v2068, %v2303
        %v2309 = vmul.f32 %v2100, %v2303
        %v2310 = vmul.f32 %v2071, %v2303
        %v2311 = vmul.f32 %v2101, %v2303
        %v2312 = vmul.f32 %v2074, %v2303
        %v2313 = vmul.f32 %v2102, %v2303
        %v2314 = vmul.f32 %v2077, %v2303
        %v2315 = vmul.f32 %v2103, %v2303
        %v2316 = vmul.f32 %v2080, %v2303
        %v2317 = vmul.f32 %v2104, %v2303
        %v2318 = vmul.f32 %v2224, %v2303
        %v2319 = vmul.f32 %v2227, %v2303
        %v2320 = vadd.f32 %v2284, %v2304
        %v2321 = vadd.f32 %v2285, %v2305
        %v2322 = vadd.f32 %v2286, %v2306
        %v2323 = vadd.f32 %v2287, %v2307
        %v2324 = vadd.f32 %v2288, %v2308
        %v2325 = vadd.f32 %v2289, %v2309
        %v2326 = vadd.f32 %v2290, %v2310
        %v2327 = vadd.f32 %v2291, %v2311
        %v2328 = vadd.f32 %v2292, %v2312
        %v2329 = vadd.f32 %v2293, %v2313
        %v2330 = vadd.f32 %v2294, %v2314
        %v2331 = vadd.f32 %v2295, %v2315
        %v2332 = vadd.f32 %v2296, %v2316
        %v2333 = vadd.f32 %v2297, %v2317
        %v2334 = vadd.f32 %v2298, %v2318
        %v2335 = vadd.f32 %v2299, %v2319
        %v2336 = vld [vmem:[%s7 + $0x6] sm:$0x7]
        %v2339 = vrot.slane %v1988, 7
        %v2340 = vrot.slane %v1989, 7
        %v2341 = vsel %vm2007, %v2339, %v2340
        %v2344 = vsel %vm2007, 0.0, %v2339
        %v2345 = vrot.slane %v1988, 1
        %v2346 = vrot.slane %v1989, 1
        %v2347 = vsel %vm2056, %v2345, %v2346
        %v2350 = vsel %vm2056, %v2346, 0.0
        %v2351 = vlaneseq
        %v2352 = vshrl.u32 %v2351, 7
        %v2353 = vsub.s32 0, %v2352
        %v2354 = vrot.slane %v2336, %v2353
        %v2355 = vmul.f32 %v2050, %v2354
        %v2356 = vmul.f32 %v2016, %v2354
        %v2357 = vmul.f32 %v2051, %v2354
        %v2358 = vmul.f32 %v2019, %v2354
        %v2359 = vmul.f32 %v2052, %v2354
        %v2360 = vmul.f32 %v2022, %v2354
        %v2361 = vmul.f32 %v2053, %v2354
        %v2362 = vmul.f32 %v2025, %v2354
        %v2363 = vmul.f32 %v2054, %v2354
        %v2364 = vmul.f32 %v2028, %v2354
        %v2365 = vmul.f32 %v2055, %v2354
        %v2366 = vmul.f32 %v2031, %v2354
        %v2367 = vmul.f32 %v2221, %v2354
        %v2368 = vmul.f32 %v2218, %v2354
        %v2369 = vmul.f32 %v2344, %v2354
        %v2370 = vmul.f32 %v2341, %v2354
        %v2371 = vadd.f32 %v2320, %v2355
        %v2372 = vadd.f32 %v2321, %v2356
        %v2373 = vadd.f32 %v2322, %v2357
        %v2374 = vadd.f32 %v2323, %v2358
        %v2375 = vadd.f32 %v2324, %v2359
        %v2376 = vadd.f32 %v2325, %v2360
        %v2377 = vadd.f32 %v2326, %v2361
        %v2378 = vadd.f32 %v2327, %v2362
        %v2379 = vadd.f32 %v2328, %v2363
        %v2380 = vadd.f32 %v2329, %v2364
        %v2381 = vadd.f32 %v2330, %v2365
        %v2382 = vadd.f32 %v2331, %v2366
        %v2383 = vadd.f32 %v2332, %v2367
        %v2384 = vadd.f32 %v2333, %v2368
        %v2385 = vadd.f32 %v2334, %v2369
        %v2386 = vadd.f32 %v2335, %v2370
        %v2387 = vlaneseq
        %v2388 = vshrl.u32 %v2387, 7
        %v2389 = vsub.s32 1, %v2388
        %v2390 = vrot.slane %v2336, %v2389
        %v2391 = vmul.f32 %v1974, %v2390
        %v2392 = vmul.f32 %v1975, %v2390
        %v2393 = vmul.f32 %v1976, %v2390
        %v2394 = vmul.f32 %v1977, %v2390
        %v2395 = vmul.f32 %v1978, %v2390
        %v2396 = vmul.f32 %v1979, %v2390
        %v2397 = vmul.f32 %v1980, %v2390
        %v2398 = vmul.f32 %v1981, %v2390
        %v2399 = vmul.f32 %v1982, %v2390
        %v2400 = vmul.f32 %v1983, %v2390
        %v2401 = vmul.f32 %v1984, %v2390
        %v2402 = vmul.f32 %v1985, %v2390
        %v2403 = vmul.f32 %v1986, %v2390
        %v2404 = vmul.f32 %v1987, %v2390
        %v2405 = vmul.f32 %v1988, %v2390
        %v2406 = vmul.f32 %v1989, %v2390
        %v2407 = vadd.f32 %v2371, %v2391
        %v2408 = vadd.f32 %v2372, %v2392
        %v2409 = vadd.f32 %v2373, %v2393
        %v2410 = vadd.f32 %v2374, %v2394
        %v2411 = vadd.f32 %v2375, %v2395
        %v2412 = vadd.f32 %v2376, %v2396
        %v2413 = vadd.f32 %v2377, %v2397
        %v2414 = vadd.f32 %v2378, %v2398
        %v2415 = vadd.f32 %v2379, %v2399
        %v2416 = vadd.f32 %v2380, %v2400
        %v2417 = vadd.f32 %v2381, %v2401
        %v2418 = vadd.f32 %v2382, %v2402
        %v2419 = vadd.f32 %v2383, %v2403
        %v2420 = vadd.f32 %v2384, %v2404
        %v2421 = vadd.f32 %v2385, %v2405
        %v2422 = vadd.f32 %v2386, %v2406
        %v2423 = vlaneseq
        %v2424 = vshrl.u32 %v2423, 7
        %v2425 = vsub.s32 2, %v2424
        %v2426 = vrot.slane %v2336, %v2425
        %v2427 = vmul.f32 %v2065, %v2426
        %v2428 = vmul.f32 %v2099, %v2426
        %v2429 = vmul.f32 %v2068, %v2426
        %v2430 = vmul.f32 %v2100, %v2426
        %v2431 = vmul.f32 %v2071, %v2426
        %v2432 = vmul.f32 %v2101, %v2426
        %v2433 = vmul.f32 %v2074, %v2426
        %v2434 = vmul.f32 %v2102, %v2426
        %v2435 = vmul.f32 %v2077, %v2426
        %v2436 = vmul.f32 %v2103, %v2426
        %v2437 = vmul.f32 %v2080, %v2426
        %v2438 = vmul.f32 %v2104, %v2426
        %v2439 = vmul.f32 %v2224, %v2426
        %v2440 = vmul.f32 %v2227, %v2426
        %v2441 = vmul.f32 %v2347, %v2426
        %v2442 = vmul.f32 %v2350, %v2426
        %v2443 = vadd.f32 %v2407, %v2427
        %v2444 = vadd.f32 %v2408, %v2428
        %v2445 = vadd.f32 %v2409, %v2429
        %v2446 = vadd.f32 %v2410, %v2430
        %v2447 = vadd.f32 %v2411, %v2431
        %v2448 = vadd.f32 %v2412, %v2432
        %v2449 = vadd.f32 %v2413, %v2433
        %v2450 = vadd.f32 %v2414, %v2434
        %v2451 = vadd.f32 %v2415, %v2435
        %v2452 = vadd.f32 %v2416, %v2436
        %v2453 = vadd.f32 %v2417, %v2437
        %v2454 = vadd.f32 %v2418, %v2438
        %v2455 = vadd.f32 %v2419, %v2439
        %v2456 = vadd.f32 %v2420, %v2440
        %v2457 = vadd.f32 %v2421, %v2441
        %v2458 = vadd.f32 %v2422, %v2442
        %v2459 = vld [vmem:[%s8] sm:$0x1]
        %v2460 = vld [vmem:[%s9] sm:$0x1]
        %v2461 = vsel %vm1239, %v2443, 0.0
        %2462 = vadd.xlane.f32.xlu0 %v2461
        %v2463 = vpop.xlane.xlu0 %2462
        %v2464 = vsel %vm1239, %v2444, 0.0
        %2465 = vadd.xlane.f32.xlu0 %v2464
        %v2466 = vpop.xlane.xlu0 %2465
        %v2467 = vsel %vm1239, %v2445, 0.0
        %2468 = vadd.xlane.f32.xlu0 %v2467
        %v2469 = vpop.xlane.xlu0 %2468
        %v2470 = vsel %vm1239, %v2446, 0.0
        %2471 = vadd.xlane.f32.xlu0 %v2470
        %v2472 = vpop.xlane.xlu0 %2471
        %v2473 = vsel %vm1239, %v2447, 0.0
        %2474 = vadd.xlane.f32.xlu0 %v2473
        %v2475 = vpop.xlane.xlu0 %2474
        %v2476 = vsel %vm1239, %v2448, 0.0
        %2477 = vadd.xlane.f32.xlu0 %v2476
        %v2478 = vpop.xlane.xlu0 %2477
        %v2479 = vsel %vm1239, %v2449, 0.0
        %2480 = vadd.xlane.f32.xlu0 %v2479
        %v2481 = vpop.xlane.xlu0 %2480
        %v2482 = vsel %vm1239, %v2450, 0.0
        %2483 = vadd.xlane.f32.xlu0 %v2482
        %v2484 = vpop.xlane.xlu0 %2483
        %v2485 = vsel %vm1239, %v2451, 0.0
        %2486 = vadd.xlane.f32.xlu0 %v2485
        %v2487 = vpop.xlane.xlu0 %2486
        %v2488 = vsel %vm1239, %v2452, 0.0
        %2489 = vadd.xlane.f32.xlu0 %v2488
        %v2490 = vpop.xlane.xlu0 %2489
        %v2491 = vsel %vm1239, %v2453, 0.0
        %2492 = vadd.xlane.f32.xlu0 %v2491
        %v2493 = vpop.xlane.xlu0 %2492
        %v2494 = vsel %vm1239, %v2454, 0.0
        %2495 = vadd.xlane.f32.xlu0 %v2494
        %v2496 = vpop.xlane.xlu0 %2495
        %v2497 = vsel %vm1239, %v2455, 0.0
        %2498 = vadd.xlane.f32.xlu0 %v2497
        %v2499 = vpop.xlane.xlu0 %2498
        %v2500 = vsel %vm1239, %v2456, 0.0
        %2501 = vadd.xlane.f32.xlu0 %v2500
        %v2502 = vpop.xlane.xlu0 %2501
        %v2503 = vsel %vm1239, %v2457, 0.0
        %2504 = vadd.xlane.f32.xlu0 %v2503
        %v2505 = vpop.xlane.xlu0 %2504
        %v2506 = vsel %vm1239, %v2458, 0.0
        %2507 = vadd.xlane.f32.xlu0 %v2506
        %v2508 = vpop.xlane.xlu0 %2507
        %v2509 = vmul.f32 %v2463, %v1288
        %v2510 = vmul.f32 %v2466, %v1288
        %v2511 = vmul.f32 %v2469, %v1288
        %v2512 = vmul.f32 %v2472, %v1288
        %v2513 = vmul.f32 %v2475, %v1288
        %v2514 = vmul.f32 %v2478, %v1288
        %v2515 = vmul.f32 %v2481, %v1288
        %v2516 = vmul.f32 %v2484, %v1288
        %v2517 = vmul.f32 %v2487, %v1288
        %v2518 = vmul.f32 %v2490, %v1288
        %v2519 = vmul.f32 %v2493, %v1288
        %v2520 = vmul.f32 %v2496, %v1288
        %v2521 = vmul.f32 %v2499, %v1288
        %v2522 = vmul.f32 %v2502, %v1288
        %v2523 = vmul.f32 %v2505, %v1288
        %v2524 = vmul.f32 %v2508, %v1288
        %v2525 = vsub.f32 %v2443, %v2509
        %v2526 = vsub.f32 %v2444, %v2510
        %v2527 = vsub.f32 %v2445, %v2511
        %v2528 = vsub.f32 %v2446, %v2512
        %v2529 = vsub.f32 %v2447, %v2513
        %v2530 = vsub.f32 %v2448, %v2514
        %v2531 = vsub.f32 %v2449, %v2515
        %v2532 = vsub.f32 %v2450, %v2516
        %v2533 = vsub.f32 %v2451, %v2517
        %v2534 = vsub.f32 %v2452, %v2518
        %v2535 = vsub.f32 %v2453, %v2519
        %v2536 = vsub.f32 %v2454, %v2520
        %v2537 = vsub.f32 %v2455, %v2521
        %v2538 = vsub.f32 %v2456, %v2522
        %v2539 = vsub.f32 %v2457, %v2523
        %v2540 = vsub.f32 %v2458, %v2524
        %v2541 = vmul.f32 %v2525, %v2525
        %v2542 = vmul.f32 %v2526, %v2526
        %v2543 = vmul.f32 %v2527, %v2527
        %v2544 = vmul.f32 %v2528, %v2528
        %v2545 = vmul.f32 %v2529, %v2529
        %v2546 = vmul.f32 %v2530, %v2530
        %v2547 = vmul.f32 %v2531, %v2531
        %v2548 = vmul.f32 %v2532, %v2532
        %v2549 = vmul.f32 %v2533, %v2533
        %v2550 = vmul.f32 %v2534, %v2534
        %v2551 = vmul.f32 %v2535, %v2535
        %v2552 = vmul.f32 %v2536, %v2536
        %v2553 = vmul.f32 %v2537, %v2537
        %v2554 = vmul.f32 %v2538, %v2538
        %v2555 = vmul.f32 %v2539, %v2539
        %v2556 = vmul.f32 %v2540, %v2540
        %v2557 = vsel %vm1239, %v2541, 0.0
        %2558 = vadd.xlane.f32.xlu0 %v2557
        %v2559 = vpop.xlane.xlu0 %2558
        %v2560 = vsel %vm1239, %v2542, 0.0
        %2561 = vadd.xlane.f32.xlu0 %v2560
        %v2562 = vpop.xlane.xlu0 %2561
        %v2563 = vsel %vm1239, %v2543, 0.0
        %2564 = vadd.xlane.f32.xlu0 %v2563
        %v2565 = vpop.xlane.xlu0 %2564
        %v2566 = vsel %vm1239, %v2544, 0.0
        %2567 = vadd.xlane.f32.xlu0 %v2566
        %v2568 = vpop.xlane.xlu0 %2567
        %v2569 = vsel %vm1239, %v2545, 0.0
        %2570 = vadd.xlane.f32.xlu0 %v2569
        %v2571 = vpop.xlane.xlu0 %2570
        %v2572 = vsel %vm1239, %v2546, 0.0
        %2573 = vadd.xlane.f32.xlu0 %v2572
        %v2574 = vpop.xlane.xlu0 %2573
        %v2575 = vsel %vm1239, %v2547, 0.0
        %2576 = vadd.xlane.f32.xlu0 %v2575
        %v2577 = vpop.xlane.xlu0 %2576
        %v2578 = vsel %vm1239, %v2548, 0.0
        %2579 = vadd.xlane.f32.xlu0 %v2578
        %v2580 = vpop.xlane.xlu0 %2579
        %v2581 = vsel %vm1239, %v2549, 0.0
        %2582 = vadd.xlane.f32.xlu0 %v2581
        %v2583 = vpop.xlane.xlu0 %2582
        %v2584 = vsel %vm1239, %v2550, 0.0
        %2585 = vadd.xlane.f32.xlu0 %v2584
        %v2586 = vpop.xlane.xlu0 %2585
        %v2587 = vsel %vm1239, %v2551, 0.0
        %2588 = vadd.xlane.f32.xlu0 %v2587
        %v2589 = vpop.xlane.xlu0 %2588
        %v2590 = vsel %vm1239, %v2552, 0.0
        %2591 = vadd.xlane.f32.xlu0 %v2590
        %v2592 = vpop.xlane.xlu0 %2591
        %v2593 = vsel %vm1239, %v2553, 0.0
        %2594 = vadd.xlane.f32.xlu0 %v2593
        %v2595 = vpop.xlane.xlu0 %2594
        %v2596 = vsel %vm1239, %v2554, 0.0
        %2597 = vadd.xlane.f32.xlu0 %v2596
        %v2598 = vpop.xlane.xlu0 %2597
        %v2599 = vsel %vm1239, %v2555, 0.0
        %2600 = vadd.xlane.f32.xlu0 %v2599
        %v2601 = vpop.xlane.xlu0 %2600
        %v2602 = vsel %vm1239, %v2556, 0.0
        %2603 = vadd.xlane.f32.xlu0 %v2602
        %v2604 = vpop.xlane.xlu0 %2603
        %v2605 = vmul.f32 %v2559, %v1288
        %v2606 = vmul.f32 %v2562, %v1288
        %v2607 = vmul.f32 %v2565, %v1288
        %v2608 = vmul.f32 %v2568, %v1288
        %v2609 = vmul.f32 %v2571, %v1288
        %v2610 = vmul.f32 %v2574, %v1288
        %v2611 = vmul.f32 %v2577, %v1288
        %v2612 = vmul.f32 %v2580, %v1288
        %v2613 = vmul.f32 %v2583, %v1288
        %v2614 = vmul.f32 %v2586, %v1288
        %v2615 = vmul.f32 %v2589, %v1288
        %v2616 = vmul.f32 %v2592, %v1288
        %v2617 = vmul.f32 %v2595, %v1288
        %v2618 = vmul.f32 %v2598, %v1288
        %v2619 = vmul.f32 %v2601, %v1288
        %v2620 = vmul.f32 %v2604, %v1288
        %v2621 = vadd.f32 %v2605, 1e-06
        %v2622 = vadd.f32 %v2606, 1e-06
        %v2623 = vadd.f32 %v2607, 1e-06
        %v2624 = vadd.f32 %v2608, 1e-06
        %v2625 = vadd.f32 %v2609, 1e-06
        %v2626 = vadd.f32 %v2610, 1e-06
        %v2627 = vadd.f32 %v2611, 1e-06
        %v2628 = vadd.f32 %v2612, 1e-06
        %v2629 = vadd.f32 %v2613, 1e-06
        %v2630 = vadd.f32 %v2614, 1e-06
        %v2631 = vadd.f32 %v2615, 1e-06
        %v2632 = vadd.f32 %v2616, 1e-06
        %v2633 = vadd.f32 %v2617, 1e-06
        %v2634 = vadd.f32 %v2618, 1e-06
        %v2635 = vadd.f32 %v2619, 1e-06
        %v2636 = vadd.f32 %v2620, 1e-06
        %v2637 = vrsqrt.pop %v2621
        %v2638 = vrsqrt.pop %v2622
        %v2639 = vrsqrt.pop %v2623
        %v2640 = vrsqrt.pop %v2624
        %v2641 = vrsqrt.pop %v2625
        %v2642 = vrsqrt.pop %v2626
        %v2643 = vrsqrt.pop %v2627
        %v2644 = vrsqrt.pop %v2628
        %v2645 = vrsqrt.pop %v2629
        %v2646 = vrsqrt.pop %v2630
        %v2647 = vrsqrt.pop %v2631
        %v2648 = vrsqrt.pop %v2632
        %v2649 = vrsqrt.pop %v2633
        %v2650 = vrsqrt.pop %v2634
        %v2651 = vrsqrt.pop %v2635
        %v2652 = vrsqrt.pop %v2636
        %v2653 = vmul.f32 %v2525, %v2637
        %v2654 = vmul.f32 %v2526, %v2638
        %v2655 = vmul.f32 %v2527, %v2639
        %v2656 = vmul.f32 %v2528, %v2640
        %v2657 = vmul.f32 %v2529, %v2641
        %v2658 = vmul.f32 %v2530, %v2642
        %v2659 = vmul.f32 %v2531, %v2643
        %v2660 = vmul.f32 %v2532, %v2644
        %v2661 = vmul.f32 %v2533, %v2645
        %v2662 = vmul.f32 %v2534, %v2646
        %v2663 = vmul.f32 %v2535, %v2647
        %v2664 = vmul.f32 %v2536, %v2648
        %v2665 = vmul.f32 %v2537, %v2649
        %v2666 = vmul.f32 %v2538, %v2650
        %v2667 = vmul.f32 %v2539, %v2651
        %v2668 = vmul.f32 %v2540, %v2652
        %v2670 = vlaneseq
        %v2671 = vshrl.u32 %v2670, 7
        %v2672 = vsub.s32 0, %v2671
        %v2673 = vrot.slane %v2459, %v2672
        %v2675 = vmul.f32 %v2653, %v2673
        %v2676 = vmul.f32 %v2654, %v2673
        %v2677 = vmul.f32 %v2655, %v2673
        %v2678 = vmul.f32 %v2656, %v2673
        %v2679 = vmul.f32 %v2657, %v2673
        %v2680 = vmul.f32 %v2658, %v2673
        %v2681 = vmul.f32 %v2659, %v2673
        %v2682 = vmul.f32 %v2660, %v2673
        %v2683 = vmul.f32 %v2661, %v2673
        %v2684 = vmul.f32 %v2662, %v2673
        %v2685 = vmul.f32 %v2663, %v2673
        %v2686 = vmul.f32 %v2664, %v2673
        %v2687 = vmul.f32 %v2665, %v2673
        %v2688 = vmul.f32 %v2666, %v2673
        %v2689 = vmul.f32 %v2667, %v2673
        %v2690 = vmul.f32 %v2668, %v2673
        %v2692 = vlaneseq
        %v2693 = vshrl.u32 %v2692, 7
        %v2694 = vsub.s32 0, %v2693
        %v2695 = vrot.slane %v2460, %v2694
        %v2697 = vadd.f32 %v2675, %v2695
        %v2698 = vadd.f32 %v2676, %v2695
        %v2699 = vadd.f32 %v2677, %v2695
        %v2700 = vadd.f32 %v2678, %v2695
        %v2701 = vadd.f32 %v2679, %v2695
        %v2702 = vadd.f32 %v2680, %v2695
        %v2703 = vadd.f32 %v2681, %v2695
        %v2704 = vadd.f32 %v2682, %v2695
        %v2705 = vadd.f32 %v2683, %v2695
        %v2706 = vadd.f32 %v2684, %v2695
        %v2707 = vadd.f32 %v2685, %v2695
        %v2708 = vadd.f32 %v2686, %v2695
        %v2709 = vadd.f32 %v2687, %v2695
        %v2710 = vadd.f32 %v2688, %v2695
        %v2711 = vadd.f32 %v2689, %v2695
        %v2712 = vadd.f32 %v2690, %v2695
        %v2713 = vmul.f32 %v2697, 0.5
        %v2714 = vmul.f32 %v2698, 0.5
        %v2715 = vmul.f32 %v2699, 0.5
        %v2716 = vmul.f32 %v2700, 0.5
        %v2717 = vmul.f32 %v2701, 0.5
        %v2718 = vmul.f32 %v2702, 0.5
        %v2719 = vmul.f32 %v2703, 0.5
        %v2720 = vmul.f32 %v2704, 0.5
        %v2721 = vmul.f32 %v2705, 0.5
        %v2722 = vmul.f32 %v2706, 0.5
        %v2723 = vmul.f32 %v2707, 0.5
        %v2724 = vmul.f32 %v2708, 0.5
        %v2725 = vmul.f32 %v2709, 0.5
        %v2726 = vmul.f32 %v2710, 0.5
        %v2727 = vmul.f32 %v2711, 0.5
        %v2728 = vmul.f32 %v2712, 0.5
        %v2729 = vmul.f32 %v2697, 0.70710677
        %v2730 = vmul.f32 %v2698, 0.70710677
        %v2731 = vmul.f32 %v2699, 0.70710677
        %v2732 = vmul.f32 %v2700, 0.70710677
        %v2733 = vmul.f32 %v2701, 0.70710677
        %v2734 = vmul.f32 %v2702, 0.70710677
        %v2735 = vmul.f32 %v2703, 0.70710677
        %v2736 = vmul.f32 %v2704, 0.70710677
        %v2737 = vmul.f32 %v2705, 0.70710677
        %v2738 = vmul.f32 %v2706, 0.70710677
        %v2739 = vmul.f32 %v2707, 0.70710677
        %v2740 = vmul.f32 %v2708, 0.70710677
        %v2741 = vmul.f32 %v2709, 0.70710677
        %v2742 = vmul.f32 %v2710, 0.70710677
        %v2743 = vmul.f32 %v2711, 0.70710677
        %v2744 = vmul.f32 %v2712, 0.70710677
        %vm2745 = vcmp.lt.f32.partialorder %v2729, 0.0
        %vm2746 = vcmp.lt.f32.partialorder %v2730, 0.0
        %vm2747 = vcmp.lt.f32.partialorder %v2731, 0.0
        %vm2748 = vcmp.lt.f32.partialorder %v2732, 0.0
        %vm2749 = vcmp.lt.f32.partialorder %v2733, 0.0
        %vm2750 = vcmp.lt.f32.partialorder %v2734, 0.0
        %vm2751 = vcmp.lt.f32.partialorder %v2735, 0.0
        %vm2752 = vcmp.lt.f32.partialorder %v2736, 0.0
        %vm2753 = vcmp.lt.f32.partialorder %v2737, 0.0
        %vm2754 = vcmp.lt.f32.partialorder %v2738, 0.0
        %vm2755 = vcmp.lt.f32.partialorder %v2739, 0.0
        %vm2756 = vcmp.lt.f32.partialorder %v2740, 0.0
        %vm2757 = vcmp.lt.f32.partialorder %v2741, 0.0
        %vm2758 = vcmp.lt.f32.partialorder %v2742, 0.0
        %vm2759 = vcmp.lt.f32.partialorder %v2743, 0.0
        %vm2760 = vcmp.lt.f32.partialorder %v2744, 0.0
        %v2761 = vsel %vm2745, -1.0, 1.0
        %v2762 = vsel %vm2746, -1.0, 1.0
        %v2763 = vsel %vm2747, -1.0, 1.0
        %v2764 = vsel %vm2748, -1.0, 1.0
        %v2765 = vsel %vm2749, -1.0, 1.0
        %v2766 = vsel %vm2750, -1.0, 1.0
        %v2767 = vsel %vm2751, -1.0, 1.0
        %v2768 = vsel %vm2752, -1.0, 1.0
        %v2769 = vsel %vm2753, -1.0, 1.0
        %v2770 = vsel %vm2754, -1.0, 1.0
        %v2771 = vsel %vm2755, -1.0, 1.0
        %v2772 = vsel %vm2756, -1.0, 1.0
        %v2773 = vsel %vm2757, -1.0, 1.0
        %v2774 = vsel %vm2758, -1.0, 1.0
        %v2775 = vsel %vm2759, -1.0, 1.0
        %v2776 = vsel %vm2760, -1.0, 1.0
        %v2777 = vand.u32 2147483647, %v2729
        %v2778 = vand.u32 2147483647, %v2730
        %v2779 = vand.u32 2147483647, %v2731
        %v2780 = vand.u32 2147483647, %v2732
        %v2781 = vand.u32 2147483647, %v2733
        %v2782 = vand.u32 2147483647, %v2734
        %v2783 = vand.u32 2147483647, %v2735
        %v2784 = vand.u32 2147483647, %v2736
        %v2785 = vand.u32 2147483647, %v2737
        %v2786 = vand.u32 2147483647, %v2738
        %v2787 = vand.u32 2147483647, %v2739
        %v2788 = vand.u32 2147483647, %v2740
        %v2789 = vand.u32 2147483647, %v2741
        %v2790 = vand.u32 2147483647, %v2742
        %v2791 = vand.u32 2147483647, %v2743
        %v2792 = vand.u32 2147483647, %v2744
        %v2793 = vmul.f32 %v2777, 0.3275911
        %v2794 = vmul.f32 %v2778, 0.3275911
        %v2795 = vmul.f32 %v2779, 0.3275911
        %v2796 = vmul.f32 %v2780, 0.3275911
        %v2797 = vmul.f32 %v2781, 0.3275911
        %v2798 = vmul.f32 %v2782, 0.3275911
        %v2799 = vmul.f32 %v2783, 0.3275911
        %v2800 = vmul.f32 %v2784, 0.3275911
        %v2801 = vmul.f32 %v2785, 0.3275911
        %v2802 = vmul.f32 %v2786, 0.3275911
        %v2803 = vmul.f32 %v2787, 0.3275911
        %v2804 = vmul.f32 %v2788, 0.3275911
        %v2805 = vmul.f32 %v2789, 0.3275911
        %v2806 = vmul.f32 %v2790, 0.3275911
        %v2807 = vmul.f32 %v2791, 0.3275911
        %v2808 = vmul.f32 %v2792, 0.3275911
        %v2809 = vadd.f32 %v2793, 1.0
        %v2810 = vadd.f32 %v2794, 1.0
        %v2811 = vadd.f32 %v2795, 1.0
        %v2812 = vadd.f32 %v2796, 1.0
        %v2813 = vadd.f32 %v2797, 1.0
        %v2814 = vadd.f32 %v2798, 1.0
        %v2815 = vadd.f32 %v2799, 1.0
        %v2816 = vadd.f32 %v2800, 1.0
        %v2817 = vadd.f32 %v2801, 1.0
        %v2818 = vadd.f32 %v2802, 1.0
        %v2819 = vadd.f32 %v2803, 1.0
        %v2820 = vadd.f32 %v2804, 1.0
        %v2821 = vadd.f32 %v2805, 1.0
        %v2822 = vadd.f32 %v2806, 1.0
        %v2823 = vadd.f32 %v2807, 1.0
        %v2824 = vadd.f32 %v2808, 1.0
        %v2825 = vrcp.pop %v2809
        %v2826 = vrcp.pop %v2810
        %v2827 = vrcp.pop %v2811
        %v2828 = vrcp.pop %v2812
        %v2829 = vrcp.pop %v2813
        %v2830 = vrcp.pop %v2814
        %v2831 = vrcp.pop %v2815
        %v2832 = vrcp.pop %v2816
        %v2833 = vrcp.pop %v2817
        %v2834 = vrcp.pop %v2818
        %v2835 = vrcp.pop %v2819
        %v2836 = vrcp.pop %v2820
        %v2837 = vrcp.pop %v2821
        %v2838 = vrcp.pop %v2822
        %v2839 = vrcp.pop %v2823
        %v2840 = vrcp.pop %v2824
        %v2841 = vmul.f32 %v2809, %v2825
        %v2842 = vmul.f32 %v2810, %v2826
        %v2843 = vmul.f32 %v2811, %v2827
        %v2844 = vmul.f32 %v2812, %v2828
        %v2845 = vmul.f32 %v2813, %v2829
        %v2846 = vmul.f32 %v2814, %v2830
        %v2847 = vmul.f32 %v2815, %v2831
        %v2848 = vmul.f32 %v2816, %v2832
        %v2849 = vmul.f32 %v2817, %v2833
        %v2850 = vmul.f32 %v2818, %v2834
        %v2851 = vmul.f32 %v2819, %v2835
        %v2852 = vmul.f32 %v2820, %v2836
        %v2853 = vmul.f32 %v2821, %v2837
        %v2854 = vmul.f32 %v2822, %v2838
        %v2855 = vmul.f32 %v2823, %v2839
        %v2856 = vmul.f32 %v2824, %v2840
        %v2857 = vsub.f32 2.0, %v2841
        %v2858 = vsub.f32 2.0, %v2842
        %v2859 = vsub.f32 2.0, %v2843
        %v2860 = vsub.f32 2.0, %v2844
        %v2861 = vsub.f32 2.0, %v2845
        %v2862 = vsub.f32 2.0, %v2846
        %v2863 = vsub.f32 2.0, %v2847
        %v2864 = vsub.f32 2.0, %v2848
        %v2865 = vsub.f32 2.0, %v2849
        %v2866 = vsub.f32 2.0, %v2850
        %v2867 = vsub.f32 2.0, %v2851
        %v2868 = vsub.f32 2.0, %v2852
        %v2869 = vsub.f32 2.0, %v2853
        %v2870 = vsub.f32 2.0, %v2854
        %v2871 = vsub.f32 2.0, %v2855
        %v2872 = vsub.f32 2.0, %v2856
        %v2873 = vmul.f32 %v2825, %v2857
        %v2874 = vmul.f32 %v2826, %v2858
        %v2875 = vmul.f32 %v2827, %v2859
        %v2876 = vmul.f32 %v2828, %v2860
        %v2877 = vmul.f32 %v2829, %v2861
        %v2878 = vmul.f32 %v2830, %v2862
        %v2879 = vmul.f32 %v2831, %v2863
        %v2880 = vmul.f32 %v2832, %v2864
        %v2881 = vmul.f32 %v2833, %v2865
        %v2882 = vmul.f32 %v2834, %v2866
        %v2883 = vmul.f32 %v2835, %v2867
        %v2884 = vmul.f32 %v2836, %v2868
        %v2885 = vmul.f32 %v2837, %v2869
        %v2886 = vmul.f32 %v2838, %v2870
        %v2887 = vmul.f32 %v2839, %v2871
        %v2888 = vmul.f32 %v2840, %v2872
        %v2889 = vmul.f32 %v2873, 1.0614054
        %v2890 = vmul.f32 %v2874, 1.0614054
        %v2891 = vmul.f32 %v2875, 1.0614054
        %v2892 = vmul.f32 %v2876, 1.0614054
        %v2893 = vmul.f32 %v2877, 1.0614054
        %v2894 = vmul.f32 %v2878, 1.0614054
        %v2895 = vmul.f32 %v2879, 1.0614054
        %v2896 = vmul.f32 %v2880, 1.0614054
        %v2897 = vmul.f32 %v2881, 1.0614054
        %v2898 = vmul.f32 %v2882, 1.0614054
        %v2899 = vmul.f32 %v2883, 1.0614054
        %v2900 = vmul.f32 %v2884, 1.0614054
        %v2901 = vmul.f32 %v2885, 1.0614054
        %v2902 = vmul.f32 %v2886, 1.0614054
        %v2903 = vmul.f32 %v2887, 1.0614054
        %v2904 = vmul.f32 %v2888, 1.0614054
        %v2905 = vadd.f32 %v2889, -1.4531521
        %v2906 = vadd.f32 %v2890, -1.4531521
        %v2907 = vadd.f32 %v2891, -1.4531521
        %v2908 = vadd.f32 %v2892, -1.4531521
        %v2909 = vadd.f32 %v2893, -1.4531521
        %v2910 = vadd.f32 %v2894, -1.4531521
        %v2911 = vadd.f32 %v2895, -1.4531521
        %v2912 = vadd.f32 %v2896, -1.4531521
        %v2913 = vadd.f32 %v2897, -1.4531521
        %v2914 = vadd.f32 %v2898, -1.4531521
        %v2915 = vadd.f32 %v2899, -1.4531521
        %v2916 = vadd.f32 %v2900, -1.4531521
        %v2917 = vadd.f32 %v2901, -1.4531521
        %v2918 = vadd.f32 %v2902, -1.4531521
        %v2919 = vadd.f32 %v2903, -1.4531521
        %v2920 = vadd.f32 %v2904, -1.4531521
        %v2921 = vmul.f32 %v2905, %v2873
        %v2922 = vmul.f32 %v2906, %v2874
        %v2923 = vmul.f32 %v2907, %v2875
        %v2924 = vmul.f32 %v2908, %v2876
        %v2925 = vmul.f32 %v2909, %v2877
        %v2926 = vmul.f32 %v2910, %v2878
        %v2927 = vmul.f32 %v2911, %v2879
        %v2928 = vmul.f32 %v2912, %v2880
        %v2929 = vmul.f32 %v2913, %v2881
        %v2930 = vmul.f32 %v2914, %v2882
        %v2931 = vmul.f32 %v2915, %v2883
        %v2932 = vmul.f32 %v2916, %v2884
        %v2933 = vmul.f32 %v2917, %v2885
        %v2934 = vmul.f32 %v2918, %v2886
        %v2935 = vmul.f32 %v2919, %v2887
        %v2936 = vmul.f32 %v2920, %v2888
        %v2937 = vadd.f32 %v2921, 1.4214138
        %v2938 = vadd.f32 %v2922, 1.4214138
        %v2939 = vadd.f32 %v2923, 1.4214138
        %v2940 = vadd.f32 %v2924, 1.4214138
        %v2941 = vadd.f32 %v2925, 1.4214138
        %v2942 = vadd.f32 %v2926, 1.4214138
        %v2943 = vadd.f32 %v2927, 1.4214138
        %v2944 = vadd.f32 %v2928, 1.4214138
        %v2945 = vadd.f32 %v2929, 1.4214138
        %v2946 = vadd.f32 %v2930, 1.4214138
        %v2947 = vadd.f32 %v2931, 1.4214138
        %v2948 = vadd.f32 %v2932, 1.4214138
        %v2949 = vadd.f32 %v2933, 1.4214138
        %v2950 = vadd.f32 %v2934, 1.4214138
        %v2951 = vadd.f32 %v2935, 1.4214138
        %v2952 = vadd.f32 %v2936, 1.4214138
        %v2953 = vmul.f32 %v2937, %v2873
        %v2954 = vmul.f32 %v2938, %v2874
        %v2955 = vmul.f32 %v2939, %v2875
        %v2956 = vmul.f32 %v2940, %v2876
        %v2957 = vmul.f32 %v2941, %v2877
        %v2958 = vmul.f32 %v2942, %v2878
        %v2959 = vmul.f32 %v2943, %v2879
        %v2960 = vmul.f32 %v2944, %v2880
        %v2961 = vmul.f32 %v2945, %v2881
        %v2962 = vmul.f32 %v2946, %v2882
        %v2963 = vmul.f32 %v2947, %v2883
        %v2964 = vmul.f32 %v2948, %v2884
        %v2965 = vmul.f32 %v2949, %v2885
        %v2966 = vmul.f32 %v2950, %v2886
        %v2967 = vmul.f32 %v2951, %v2887
        %v2968 = vmul.f32 %v2952, %v2888
        %v2969 = vadd.f32 %v2953, -0.28449672
        %v2970 = vadd.f32 %v2954, -0.28449672
        %v2971 = vadd.f32 %v2955, -0.28449672
        %v2972 = vadd.f32 %v2956, -0.28449672
        %v2973 = vadd.f32 %v2957, -0.28449672
        %v2974 = vadd.f32 %v2958, -0.28449672
        %v2975 = vadd.f32 %v2959, -0.28449672
        %v2976 = vadd.f32 %v2960, -0.28449672
        %v2977 = vadd.f32 %v2961, -0.28449672
        %v2978 = vadd.f32 %v2962, -0.28449672
        %v2979 = vadd.f32 %v2963, -0.28449672
        %v2980 = vadd.f32 %v2964, -0.28449672
        %v2981 = vadd.f32 %v2965, -0.28449672
        %v2982 = vadd.f32 %v2966, -0.28449672
        %v2983 = vadd.f32 %v2967, -0.28449672
        %v2984 = vadd.f32 %v2968, -0.28449672
        %v2985 = vmul.f32 %v2969, %v2873
        %v2986 = vmul.f32 %v2970, %v2874
        %v2987 = vmul.f32 %v2971, %v2875
        %v2988 = vmul.f32 %v2972, %v2876
        %v2989 = vmul.f32 %v2973, %v2877
        %v2990 = vmul.f32 %v2974, %v2878
        %v2991 = vmul.f32 %v2975, %v2879
        %v2992 = vmul.f32 %v2976, %v2880
        %v2993 = vmul.f32 %v2977, %v2881
        %v2994 = vmul.f32 %v2978, %v2882
        %v2995 = vmul.f32 %v2979, %v2883
        %v2996 = vmul.f32 %v2980, %v2884
        %v2997 = vmul.f32 %v2981, %v2885
        %v2998 = vmul.f32 %v2982, %v2886
        %v2999 = vmul.f32 %v2983, %v2887
        %v3000 = vmul.f32 %v2984, %v2888
        %v3001 = vadd.f32 %v2985, 0.2548296
        %v3002 = vadd.f32 %v2986, 0.2548296
        %v3003 = vadd.f32 %v2987, 0.2548296
        %v3004 = vadd.f32 %v2988, 0.2548296
        %v3005 = vadd.f32 %v2989, 0.2548296
        %v3006 = vadd.f32 %v2990, 0.2548296
        %v3007 = vadd.f32 %v2991, 0.2548296
        %v3008 = vadd.f32 %v2992, 0.2548296
        %v3009 = vadd.f32 %v2993, 0.2548296
        %v3010 = vadd.f32 %v2994, 0.2548296
        %v3011 = vadd.f32 %v2995, 0.2548296
        %v3012 = vadd.f32 %v2996, 0.2548296
        %v3013 = vadd.f32 %v2997, 0.2548296
        %v3014 = vadd.f32 %v2998, 0.2548296
        %v3015 = vadd.f32 %v2999, 0.2548296
        %v3016 = vadd.f32 %v3000, 0.2548296
        %v3017 = vmul.f32 %v3001, %v2873
        %v3018 = vmul.f32 %v3002, %v2874
        %v3019 = vmul.f32 %v3003, %v2875
        %v3020 = vmul.f32 %v3004, %v2876
        %v3021 = vmul.f32 %v3005, %v2877
        %v3022 = vmul.f32 %v3006, %v2878
        %v3023 = vmul.f32 %v3007, %v2879
        %v3024 = vmul.f32 %v3008, %v2880
        %v3025 = vmul.f32 %v3009, %v2881
        %v3026 = vmul.f32 %v3010, %v2882
        %v3027 = vmul.f32 %v3011, %v2883
        %v3028 = vmul.f32 %v3012, %v2884
        %v3029 = vmul.f32 %v3013, %v2885
        %v3030 = vmul.f32 %v3014, %v2886
        %v3031 = vmul.f32 %v3015, %v2887
        %v3032 = vmul.f32 %v3016, %v2888
        %v3033 = vsub.f32 0.0, %v2777
        %v3034 = vsub.f32 0.0, %v2778
        %v3035 = vsub.f32 0.0, %v2779
        %v3036 = vsub.f32 0.0, %v2780
        %v3037 = vsub.f32 0.0, %v2781
        %v3038 = vsub.f32 0.0, %v2782
        %v3039 = vsub.f32 0.0, %v2783
        %v3040 = vsub.f32 0.0, %v2784
        %v3041 = vsub.f32 0.0, %v2785
        %v3042 = vsub.f32 0.0, %v2786
        %v3043 = vsub.f32 0.0, %v2787
        %v3044 = vsub.f32 0.0, %v2788
        %v3045 = vsub.f32 0.0, %v2789
        %v3046 = vsub.f32 0.0, %v2790
        %v3047 = vsub.f32 0.0, %v2791
        %v3048 = vsub.f32 0.0, %v2792
        %v3049 = vmul.f32 %v3033, %v2777
        %v3050 = vmul.f32 %v3034, %v2778
        %v3051 = vmul.f32 %v3035, %v2779
        %v3052 = vmul.f32 %v3036, %v2780
        %v3053 = vmul.f32 %v3037, %v2781
        %v3054 = vmul.f32 %v3038, %v2782
        %v3055 = vmul.f32 %v3039, %v2783
        %v3056 = vmul.f32 %v3040, %v2784
        %v3057 = vmul.f32 %v3041, %v2785
        %v3058 = vmul.f32 %v3042, %v2786
        %v3059 = vmul.f32 %v3043, %v2787
        %v3060 = vmul.f32 %v3044, %v2788
        %v3061 = vmul.f32 %v3045, %v2789
        %v3062 = vmul.f32 %v3046, %v2790
        %v3063 = vmul.f32 %v3047, %v2791
        %v3064 = vmul.f32 %v3048, %v2792
        %v3065 = vmul.f32 %v3049, 1.442695
        %v3066 = vpow.pop %v3065
        %v3067 = vmul.f32 %v3050, 1.442695
        %v3068 = vpow.pop %v3067
        %v3069 = vmul.f32 %v3051, 1.442695
        %v3070 = vpow.pop %v3069
        %v3071 = vmul.f32 %v3052, 1.442695
        %v3072 = vpow.pop %v3071
        %v3073 = vmul.f32 %v3053, 1.442695
        %v3074 = vpow.pop %v3073
        %v3075 = vmul.f32 %v3054, 1.442695
        %v3076 = vpow.pop %v3075
        %v3077 = vmul.f32 %v3055, 1.442695
        %v3078 = vpow.pop %v3077
        %v3079 = vmul.f32 %v3056, 1.442695
        %v3080 = vpow.pop %v3079
        %v3081 = vmul.f32 %v3057, 1.442695
        %v3082 = vpow.pop %v3081
        %v3083 = vmul.f32 %v3058, 1.442695
        %v3084 = vpow.pop %v3083
        %v3085 = vmul.f32 %v3059, 1.442695
        %v3086 = vpow.pop %v3085
        %v3087 = vmul.f32 %v3060, 1.442695
        %v3088 = vpow.pop %v3087
        %v3089 = vmul.f32 %v3061, 1.442695
        %v3090 = vpow.pop %v3089
        %v3091 = vmul.f32 %v3062, 1.442695
        %v3092 = vpow.pop %v3091
        %v3093 = vmul.f32 %v3063, 1.442695
        %v3094 = vpow.pop %v3093
        %v3095 = vmul.f32 %v3064, 1.442695
        %v3096 = vpow.pop %v3095
        %v3097 = vmul.f32 %v3017, %v3066
        %v3098 = vmul.f32 %v3018, %v3068
        %v3099 = vmul.f32 %v3019, %v3070
        %v3100 = vmul.f32 %v3020, %v3072
        %v3101 = vmul.f32 %v3021, %v3074
        %v3102 = vmul.f32 %v3022, %v3076
        %v3103 = vmul.f32 %v3023, %v3078
        %v3104 = vmul.f32 %v3024, %v3080
        %v3105 = vmul.f32 %v3025, %v3082
        %v3106 = vmul.f32 %v3026, %v3084
        %v3107 = vmul.f32 %v3027, %v3086
        %v3108 = vmul.f32 %v3028, %v3088
        %v3109 = vmul.f32 %v3029, %v3090
        %v3110 = vmul.f32 %v3030, %v3092
        %v3111 = vmul.f32 %v3031, %v3094
        %v3112 = vmul.f32 %v3032, %v3096
        %v3113 = vsub.f32 1.0, %v3097
        %v3114 = vsub.f32 1.0, %v3098
        %v3115 = vsub.f32 1.0, %v3099
        %v3116 = vsub.f32 1.0, %v3100
        %v3117 = vsub.f32 1.0, %v3101
        %v3118 = vsub.f32 1.0, %v3102
        %v3119 = vsub.f32 1.0, %v3103
        %v3120 = vsub.f32 1.0, %v3104
        %v3121 = vsub.f32 1.0, %v3105
        %v3122 = vsub.f32 1.0, %v3106
        %v3123 = vsub.f32 1.0, %v3107
        %v3124 = vsub.f32 1.0, %v3108
        %v3125 = vsub.f32 1.0, %v3109
        %v3126 = vsub.f32 1.0, %v3110
        %v3127 = vsub.f32 1.0, %v3111
        %v3128 = vsub.f32 1.0, %v3112
        %v3129 = vmul.f32 %v2761, %v3113
        %v3130 = vmul.f32 %v2762, %v3114
        %v3131 = vmul.f32 %v2763, %v3115
        %v3132 = vmul.f32 %v2764, %v3116
        %v3133 = vmul.f32 %v2765, %v3117
        %v3134 = vmul.f32 %v2766, %v3118
        %v3135 = vmul.f32 %v2767, %v3119
        %v3136 = vmul.f32 %v2768, %v3120
        %v3137 = vmul.f32 %v2769, %v3121
        %v3138 = vmul.f32 %v2770, %v3122
        %v3139 = vmul.f32 %v2771, %v3123
        %v3140 = vmul.f32 %v2772, %v3124
        %v3141 = vmul.f32 %v2773, %v3125
        %v3142 = vmul.f32 %v2774, %v3126
        %v3143 = vmul.f32 %v2775, %v3127
        %v3144 = vmul.f32 %v2776, %v3128
        %v3145 = vadd.f32 %v3129, 1.0
        %v3146 = vadd.f32 %v3130, 1.0
        %v3147 = vadd.f32 %v3131, 1.0
        %v3148 = vadd.f32 %v3132, 1.0
        %v3149 = vadd.f32 %v3133, 1.0
        %v3150 = vadd.f32 %v3134, 1.0
        %v3151 = vadd.f32 %v3135, 1.0
        %v3152 = vadd.f32 %v3136, 1.0
        %v3153 = vadd.f32 %v3137, 1.0
        %v3154 = vadd.f32 %v3138, 1.0
        %v3155 = vadd.f32 %v3139, 1.0
        %v3156 = vadd.f32 %v3140, 1.0
        %v3157 = vadd.f32 %v3141, 1.0
        %v3158 = vadd.f32 %v3142, 1.0
        %v3159 = vadd.f32 %v3143, 1.0
        %v3160 = vadd.f32 %v3144, 1.0
        %v3161 = vmul.f32 %v2713, %v3145
        %v3162 = vmul.f32 %v2714, %v3146
        %v3163 = vmul.f32 %v2715, %v3147
        %v3164 = vmul.f32 %v2716, %v3148
        %v3165 = vmul.f32 %v2717, %v3149
        %v3166 = vmul.f32 %v2718, %v3150
        %v3167 = vmul.f32 %v2719, %v3151
        %v3168 = vmul.f32 %v2720, %v3152
        %v3169 = vmul.f32 %v2721, %v3153
        %v3170 = vmul.f32 %v2722, %v3154
        %v3171 = vmul.f32 %v2723, %v3155
        %v3172 = vmul.f32 %v2724, %v3156
        %v3173 = vmul.f32 %v2725, %v3157
        %v3174 = vmul.f32 %v2726, %v3158
        %v3175 = vmul.f32 %v2727, %v3159
        %v3176 = vmul.f32 %v2728, %v3160
        %v3177 = vld [vmem:[%s10] sm:$0xff]
        %v3179 = vsel %vm1239, %v3161, 0
        %v3182 = vsel %vm1239, %v3162, 0
        %v3185 = vsel %vm1239, %v3163, 0
        %v3188 = vsel %vm1239, %v3164, 0
        %v3191 = vsel %vm1239, %v3165, 0
        %v3194 = vsel %vm1239, %v3166, 0
        %v3197 = vsel %vm1239, %v3167, 0
        %v3200 = vsel %vm1239, %v3168, 0
        %v3203 = vsel %vm1239, %v3169, 0
        %v3206 = vsel %vm1239, %v3170, 0
        %v3209 = vsel %vm1239, %v3171, 0
        %v3212 = vsel %vm1239, %v3172, 0
        %v3215 = vsel %vm1239, %v3173, 0
        %v3218 = vsel %vm1239, %v3174, 0
        %v3221 = vsel %vm1239, %v3175, 0
        %v3224 = vsel %vm1239, %v3176, 0
        %3226 = vmatprep.subr.mxu0 0.0
        %3227 = vmatpush1.msra.mxu0 %v3177
        %3228 = vmatprep.subr.mxu0 0.0
        %3229 = vmatpush1.msra.mxu0 0.0
        %3230 = vmatprep.subr.mxu0 0.0
        %3231 = vmatpush1.msra.mxu0 0.0
        %3232 = vmatprep.subr.mxu0 0.0
        %3233 = vmatpush1.msra.mxu0 0.0
        %3234 = vmatprep.subr.mxu0 0.0
        %3235 = vmatpush1.msra.mxu0 0.0
        %3236 = vmatprep.subr.mxu0 0.0
        %3237 = vmatpush1.msra.mxu0 0.0
        %3238 = vmatprep.subr.mxu0 0.0
        %3239 = vmatpush1.msra.mxu0 0.0
        %3240 = vmatprep.subr.mxu0 0.0
        %3241 = vmatpush1.msra.mxu0 0.0
        %3242 = vmatprep.subr.mxu0 0.0
        %3243 = vmatpush1.msra.mxu0 0.0
        %3244 = vmatprep.subr.mxu0 0.0
        %3245 = vmatpush1.msra.mxu0 0.0
        %3246 = vmatprep.subr.mxu0 0.0
        %3247 = vmatpush1.msra.mxu0 0.0
        %3248 = vmatprep.subr.mxu0 0.0
        %3249 = vmatpush1.msra.mxu0 0.0
        %3250 = vmatprep.subr.mxu0 0.0
        %3251 = vmatpush1.msra.mxu0 0.0
        %3252 = vmatprep.subr.mxu0 0.0
        %3253 = vmatpush1.msra.mxu0 0.0
        %3254 = vmatprep.subr.mxu0 0.0
        %3255 = vmatpush1.msra.mxu0 0.0
        %3256 = vmatprep.subr.mxu0 0.0
        %3257 = vmatpush1.msra.mxu0 0.0
        %3258 = vmatprep.subr.mxu0 0.0
        %3259 = vmatpush1.msra.mxu0 0.0
        %3260 = vmatprep.subr.mxu0 0.0
        %3261 = vmatpush1.msra.mxu0 0.0
        %3262 = vmatprep.subr.mxu0 0.0
        %3263 = vmatpush1.msra.mxu0 0.0
        %3264 = vmatprep.subr.mxu0 0.0
        %3265 = vmatpush1.msra.mxu0 0.0
        %3266 = vmatprep.subr.mxu0 0.0
        %3267 = vmatpush1.msra.mxu0 0.0
        %3268 = vmatprep.subr.mxu0 0.0
        %3269 = vmatpush1.msra.mxu0 0.0
        %3270 = vmatprep.subr.mxu0 0.0
        %3271 = vmatpush1.msra.mxu0 0.0
        %3272 = vmatprep.subr.mxu0 0.0
        %3273 = vmatpush1.msra.mxu0 0.0
        %3274 = vmatprep.subr.mxu0 0.0
        %3275 = vmatpush1.msra.mxu0 0.0
        %3276 = vmatprep.subr.mxu0 0.0
        %3277 = vmatpush1.msra.mxu0 0.0
        %3278 = vmatprep.subr.mxu0 0.0
        %3279 = vmatpush1.msra.mxu0 0.0
        %3280 = vmatprep.subr.mxu0 0.0
        %3281 = vmatpush1.msra.mxu0 0.0
        %3282 = vmatprep.subr.mxu0 0.0
        %3283 = vmatpush1.msra.mxu0 0.0
        %3284 = vmatprep.subr.mxu0 0.0
        %3285 = vmatpush1.msra.mxu0 0.0
        %3286 = vmatprep.subr.mxu0 0.0
        %3287 = vmatpush1.msra.mxu0 0.0
        %3288 = vmatprep.subr.mxu0 0.0
        %3289 = vmatpush1.msra.mxu0 0.0
        %3290 = vmatprep.mubr.f32.mxu0 0.0
        %3291 = vmatmul.mubr.f32.gmra.mrb[0].mxu0 %v3179
        %v3292 = vpop.f32.mrb[0].mxu0
        %v3293 = vadd.f32 0.0, %v3292
        %v3294 = vpop.f32.mrb[0].mxu0
        %3295 = vmatprep.mubr.f32.mxu0 0.0
        %3296 = vmatmul.mubr.f32.gmra.mrb[0].mxu0 %v3182
        %v3297 = vpop.f32.mrb[0].mxu0
        %v3298 = vadd.f32 0.0, %v3297
        %v3299 = vpop.f32.mrb[0].mxu0
        %3300 = vmatprep.mubr.f32.mxu0 0.0
        %3301 = vmatmul.mubr.f32.gmra.mrb[0].mxu0 %v3185
        %v3302 = vpop.f32.mrb[0].mxu0
        %v3303 = vadd.f32 0.0, %v3302
        %v3304 = vpop.f32.mrb[0].mxu0
        %3305 = vmatprep.mubr.f32.mxu0 0.0
        %3306 = vmatmul.mubr.f32.gmra.mrb[0].mxu0 %v3188
        %v3307 = vpop.f32.mrb[0].mxu0
        %v3308 = vadd.f32 0.0, %v3307
        %v3309 = vpop.f32.mrb[0].mxu0
        %3310 = vmatprep.mubr.f32.mxu0 0.0
        %3311 = vmatmul.mubr.f32.gmra.mrb[0].mxu0 %v3191
        %v3312 = vpop.f32.mrb[0].mxu0
        %v3313 = vadd.f32 0.0, %v3312
        %v3314 = vpop.f32.mrb[0].mxu0
        %3315 = vmatprep.mubr.f32.mxu0 0.0
        %3316 = vmatmul.mubr.f32.gmra.mrb[0].mxu0 %v3194
        %v3317 = vpop.f32.mrb[0].mxu0
        %v3318 = vadd.f32 0.0, %v3317
        %v3319 = vpop.f32.mrb[0].mxu0
        %3320 = vmatprep.mubr.f32.mxu0 0.0
        %3321 = vmatmul.mubr.f32.gmra.mrb[0].mxu0 %v3197
        %v3322 = vpop.f32.mrb[0].mxu0
        %v3323 = vadd.f32 0.0, %v3322
        %v3324 = vpop.f32.mrb[0].mxu0
        %3325 = vmatprep.mubr.f32.mxu0 0.0
        %3326 = vmatmul.mubr.f32.gmra.mrb[0].mxu0 %v3200
        %v3327 = vpop.f32.mrb[0].mxu0
        %v3328 = vadd.f32 0.0, %v3327
        %v3329 = vpop.f32.mrb[0].mxu0
        %3330 = vmatprep.mubr.f32.mxu0 0.0
        %3331 = vmatmul.mubr.f32.gmra.mrb[0].mxu0 %v3203
        %v3332 = vpop.f32.mrb[0].mxu0
        %v3333 = vadd.f32 0.0, %v3332
        %v3334 = vpop.f32.mrb[0].mxu0
        %3335 = vmatprep.mubr.f32.mxu0 0.0
        %3336 = vmatmul.mubr.f32.gmra.mrb[0].mxu0 %v3206
        %v3337 = vpop.f32.mrb[0].mxu0
        %v3338 = vadd.f32 0.0, %v3337
        %v3339 = vpop.f32.mrb[0].mxu0
        %3340 = vmatprep.mubr.f32.mxu0 0.0
        %3341 = vmatmul.mubr.f32.gmra.mrb[0].mxu0 %v3209
        %v3342 = vpop.f32.mrb[0].mxu0
        %v3343 = vadd.f32 0.0, %v3342
        %v3344 = vpop.f32.mrb[0].mxu0
        %3345 = vmatprep.mubr.f32.mxu0 0.0
        %3346 = vmatmul.mubr.f32.gmra.mrb[0].mxu0 %v3212
        %v3347 = vpop.f32.mrb[0].mxu0
        %v3348 = vadd.f32 0.0, %v3347
        %v3349 = vpop.f32.mrb[0].mxu0
        %3350 = vmatprep.mubr.f32.mxu0 0.0
        %3351 = vmatmul.mubr.f32.gmra.mrb[0].mxu0 %v3215
        %v3352 = vpop.f32.mrb[0].mxu0
        %v3353 = vadd.f32 0.0, %v3352
        %v3354 = vpop.f32.mrb[0].mxu0
        %3355 = vmatprep.mubr.f32.mxu0 0.0
        %3356 = vmatmul.mubr.f32.gmra.mrb[0].mxu0 %v3218
        %v3357 = vpop.f32.mrb[0].mxu0
        %v3358 = vadd.f32 0.0, %v3357
        %v3359 = vpop.f32.mrb[0].mxu0
        %3360 = vmatprep.mubr.f32.mxu0 0.0
        %3361 = vmatmul.mubr.f32.gmra.mrb[0].mxu0 %v3221
        %v3362 = vpop.f32.mrb[0].mxu0
        %v3363 = vadd.f32 0.0, %v3362
        %v3364 = vpop.f32.mrb[0].mxu0
        %3365 = vmatprep.mubr.f32.mxu0 0.0
        %3366 = vmatmul.mubr.f32.gmra.mrb[0].mxu0 %v3224
        %v3367 = vpop.f32.mrb[0].mxu0
        %v3368 = vadd.f32 0.0, %v3367
        %v3369 = vpop.f32.mrb[0].mxu0
        %3370 = vdwg.mxu0
        %v3371 = vld [vmem:[%s11] sm:$0x1]
        %v3372 = vld [vmem:[%s12] sm:$0x1]
        %v3373 = vsel %vm785, %v3293, 0.0
        %3374 = vadd.xlane.f32.xlu0 %v3373
        %v3375 = vpop.xlane.xlu0 %3374
        %v3376 = vsel %vm785, %v3298, 0.0
        %3377 = vadd.xlane.f32.xlu0 %v3376
        %v3378 = vpop.xlane.xlu0 %3377
        %v3379 = vsel %vm785, %v3303, 0.0
        %3380 = vadd.xlane.f32.xlu0 %v3379
        %v3381 = vpop.xlane.xlu0 %3380
        %v3382 = vsel %vm785, %v3308, 0.0
        %3383 = vadd.xlane.f32.xlu0 %v3382
        %v3384 = vpop.xlane.xlu0 %3383
        %v3385 = vsel %vm785, %v3313, 0.0
        %3386 = vadd.xlane.f32.xlu0 %v3385
        %v3387 = vpop.xlane.xlu0 %3386
        %v3388 = vsel %vm785, %v3318, 0.0
        %3389 = vadd.xlane.f32.xlu0 %v3388
        %v3390 = vpop.xlane.xlu0 %3389
        %v3391 = vsel %vm785, %v3323, 0.0
        %3392 = vadd.xlane.f32.xlu0 %v3391
        %v3393 = vpop.xlane.xlu0 %3392
        %v3394 = vsel %vm785, %v3328, 0.0
        %3395 = vadd.xlane.f32.xlu0 %v3394
        %v3396 = vpop.xlane.xlu0 %3395
        %v3397 = vsel %vm785, %v3333, 0.0
        %3398 = vadd.xlane.f32.xlu0 %v3397
        %v3399 = vpop.xlane.xlu0 %3398
        %v3400 = vsel %vm785, %v3338, 0.0
        %3401 = vadd.xlane.f32.xlu0 %v3400
        %v3402 = vpop.xlane.xlu0 %3401
        %v3403 = vsel %vm785, %v3343, 0.0
        %3404 = vadd.xlane.f32.xlu0 %v3403
        %v3405 = vpop.xlane.xlu0 %3404
        %v3406 = vsel %vm785, %v3348, 0.0
        %3407 = vadd.xlane.f32.xlu0 %v3406
        %v3408 = vpop.xlane.xlu0 %3407
        %v3409 = vsel %vm785, %v3353, 0.0
        %3410 = vadd.xlane.f32.xlu0 %v3409
        %v3411 = vpop.xlane.xlu0 %3410
        %v3412 = vsel %vm785, %v3358, 0.0
        %3413 = vadd.xlane.f32.xlu0 %v3412
        %v3414 = vpop.xlane.xlu0 %3413
        %v3415 = vsel %vm785, %v3363, 0.0
        %3416 = vadd.xlane.f32.xlu0 %v3415
        %v3417 = vpop.xlane.xlu0 %3416
        %v3418 = vsel %vm785, %v3368, 0.0
        %3419 = vadd.xlane.f32.xlu0 %v3418
        %v3420 = vpop.xlane.xlu0 %3419
        %v3421 = vmul.f32 %v3375, %v834
        %v3422 = vmul.f32 %v3378, %v834
        %v3423 = vmul.f32 %v3381, %v834
        %v3424 = vmul.f32 %v3384, %v834
        %v3425 = vmul.f32 %v3387, %v834
        %v3426 = vmul.f32 %v3390, %v834
        %v3427 = vmul.f32 %v3393, %v834
        %v3428 = vmul.f32 %v3396, %v834
        %v3429 = vmul.f32 %v3399, %v834
        %v3430 = vmul.f32 %v3402, %v834
        %v3431 = vmul.f32 %v3405, %v834
        %v3432 = vmul.f32 %v3408, %v834
        %v3433 = vmul.f32 %v3411, %v834
        %v3434 = vmul.f32 %v3414, %v834
        %v3435 = vmul.f32 %v3417, %v834
        %v3436 = vmul.f32 %v3420, %v834
        %v3437 = vsub.f32 %v3293, %v3421
        %v3438 = vsub.f32 %v3298, %v3422
        %v3439 = vsub.f32 %v3303, %v3423
        %v3440 = vsub.f32 %v3308, %v3424
        %v3441 = vsub.f32 %v3313, %v3425
        %v3442 = vsub.f32 %v3318, %v3426
        %v3443 = vsub.f32 %v3323, %v3427
        %v3444 = vsub.f32 %v3328, %v3428
        %v3445 = vsub.f32 %v3333, %v3429
        %v3446 = vsub.f32 %v3338, %v3430
        %v3447 = vsub.f32 %v3343, %v3431
        %v3448 = vsub.f32 %v3348, %v3432
        %v3449 = vsub.f32 %v3353, %v3433
        %v3450 = vsub.f32 %v3358, %v3434
        %v3451 = vsub.f32 %v3363, %v3435
        %v3452 = vsub.f32 %v3368, %v3436
        %v3453 = vmul.f32 %v3437, %v3437
        %v3454 = vmul.f32 %v3438, %v3438
        %v3455 = vmul.f32 %v3439, %v3439
        %v3456 = vmul.f32 %v3440, %v3440
        %v3457 = vmul.f32 %v3441, %v3441
        %v3458 = vmul.f32 %v3442, %v3442
        %v3459 = vmul.f32 %v3443, %v3443
        %v3460 = vmul.f32 %v3444, %v3444
        %v3461 = vmul.f32 %v3445, %v3445
        %v3462 = vmul.f32 %v3446, %v3446
        %v3463 = vmul.f32 %v3447, %v3447
        %v3464 = vmul.f32 %v3448, %v3448
        %v3465 = vmul.f32 %v3449, %v3449
        %v3466 = vmul.f32 %v3450, %v3450
        %v3467 = vmul.f32 %v3451, %v3451
        %v3468 = vmul.f32 %v3452, %v3452
        %v3469 = vsel %vm785, %v3453, 0.0
        %3470 = vadd.xlane.f32.xlu0 %v3469
        %v3471 = vpop.xlane.xlu0 %3470
        %v3472 = vsel %vm785, %v3454, 0.0
        %3473 = vadd.xlane.f32.xlu0 %v3472
        %v3474 = vpop.xlane.xlu0 %3473
        %v3475 = vsel %vm785, %v3455, 0.0
        %3476 = vadd.xlane.f32.xlu0 %v3475
        %v3477 = vpop.xlane.xlu0 %3476
        %v3478 = vsel %vm785, %v3456, 0.0
        %3479 = vadd.xlane.f32.xlu0 %v3478
        %v3480 = vpop.xlane.xlu0 %3479
        %v3481 = vsel %vm785, %v3457, 0.0
        %3482 = vadd.xlane.f32.xlu0 %v3481
        %v3483 = vpop.xlane.xlu0 %3482
        %v3484 = vsel %vm785, %v3458, 0.0
        %3485 = vadd.xlane.f32.xlu0 %v3484
        %v3486 = vpop.xlane.xlu0 %3485
        %v3487 = vsel %vm785, %v3459, 0.0
        %3488 = vadd.xlane.f32.xlu0 %v3487
        %v3489 = vpop.xlane.xlu0 %3488
        %v3490 = vsel %vm785, %v3460, 0.0
        %3491 = vadd.xlane.f32.xlu0 %v3490
        %v3492 = vpop.xlane.xlu0 %3491
        %v3493 = vsel %vm785, %v3461, 0.0
        %3494 = vadd.xlane.f32.xlu0 %v3493
        %v3495 = vpop.xlane.xlu0 %3494
        %v3496 = vsel %vm785, %v3462, 0.0
        %3497 = vadd.xlane.f32.xlu0 %v3496
        %v3498 = vpop.xlane.xlu0 %3497
        %v3499 = vsel %vm785, %v3463, 0.0
        %3500 = vadd.xlane.f32.xlu0 %v3499
        %v3501 = vpop.xlane.xlu0 %3500
        %v3502 = vsel %vm785, %v3464, 0.0
        %3503 = vadd.xlane.f32.xlu0 %v3502
        %v3504 = vpop.xlane.xlu0 %3503
        %v3505 = vsel %vm785, %v3465, 0.0
        %3506 = vadd.xlane.f32.xlu0 %v3505
        %v3507 = vpop.xlane.xlu0 %3506
        %v3508 = vsel %vm785, %v3466, 0.0
        %3509 = vadd.xlane.f32.xlu0 %v3508
        %v3510 = vpop.xlane.xlu0 %3509
        %v3511 = vsel %vm785, %v3467, 0.0
        %3512 = vadd.xlane.f32.xlu0 %v3511
        %v3513 = vpop.xlane.xlu0 %3512
        %v3514 = vsel %vm785, %v3468, 0.0
        %3515 = vadd.xlane.f32.xlu0 %v3514
        %v3516 = vpop.xlane.xlu0 %3515
        %v3517 = vmul.f32 %v3471, %v834
        %v3518 = vmul.f32 %v3474, %v834
        %v3519 = vmul.f32 %v3477, %v834
        %v3520 = vmul.f32 %v3480, %v834
        %v3521 = vmul.f32 %v3483, %v834
        %v3522 = vmul.f32 %v3486, %v834
        %v3523 = vmul.f32 %v3489, %v834
        %v3524 = vmul.f32 %v3492, %v834
        %v3525 = vmul.f32 %v3495, %v834
        %v3526 = vmul.f32 %v3498, %v834
        %v3527 = vmul.f32 %v3501, %v834
        %v3528 = vmul.f32 %v3504, %v834
        %v3529 = vmul.f32 %v3507, %v834
        %v3530 = vmul.f32 %v3510, %v834
        %v3531 = vmul.f32 %v3513, %v834
        %v3532 = vmul.f32 %v3516, %v834
        %v3533 = vadd.f32 %v3517, 1e-06
        %v3534 = vadd.f32 %v3518, 1e-06
        %v3535 = vadd.f32 %v3519, 1e-06
        %v3536 = vadd.f32 %v3520, 1e-06
        %v3537 = vadd.f32 %v3521, 1e-06
        %v3538 = vadd.f32 %v3522, 1e-06
        %v3539 = vadd.f32 %v3523, 1e-06
        %v3540 = vadd.f32 %v3524, 1e-06
        %v3541 = vadd.f32 %v3525, 1e-06
        %v3542 = vadd.f32 %v3526, 1e-06
        %v3543 = vadd.f32 %v3527, 1e-06
        %v3544 = vadd.f32 %v3528, 1e-06
        %v3545 = vadd.f32 %v3529, 1e-06
        %v3546 = vadd.f32 %v3530, 1e-06
        %v3547 = vadd.f32 %v3531, 1e-06
        %v3548 = vadd.f32 %v3532, 1e-06
        %v3549 = vrsqrt.pop %v3533
        %v3550 = vrsqrt.pop %v3534
        %v3551 = vrsqrt.pop %v3535
        %v3552 = vrsqrt.pop %v3536
        %v3553 = vrsqrt.pop %v3537
        %v3554 = vrsqrt.pop %v3538
        %v3555 = vrsqrt.pop %v3539
        %v3556 = vrsqrt.pop %v3540
        %v3557 = vrsqrt.pop %v3541
        %v3558 = vrsqrt.pop %v3542
        %v3559 = vrsqrt.pop %v3543
        %v3560 = vrsqrt.pop %v3544
        %v3561 = vrsqrt.pop %v3545
        %v3562 = vrsqrt.pop %v3546
        %v3563 = vrsqrt.pop %v3547
        %v3564 = vrsqrt.pop %v3548
        %v3565 = vmul.f32 %v3437, %v3549
        %v3566 = vmul.f32 %v3438, %v3550
        %v3567 = vmul.f32 %v3439, %v3551
        %v3568 = vmul.f32 %v3440, %v3552
        %v3569 = vmul.f32 %v3441, %v3553
        %v3570 = vmul.f32 %v3442, %v3554
        %v3571 = vmul.f32 %v3443, %v3555
        %v3572 = vmul.f32 %v3444, %v3556
        %v3573 = vmul.f32 %v3445, %v3557
        %v3574 = vmul.f32 %v3446, %v3558
        %v3575 = vmul.f32 %v3447, %v3559
        %v3576 = vmul.f32 %v3448, %v3560
        %v3577 = vmul.f32 %v3449, %v3561
        %v3578 = vmul.f32 %v3450, %v3562
        %v3579 = vmul.f32 %v3451, %v3563
        %v3580 = vmul.f32 %v3452, %v3564
        %v3582 = vlaneseq
        %v3583 = vshrl.u32 %v3582, 7
        %v3584 = vsub.s32 0, %v3583
        %v3585 = vrot.slane %v3371, %v3584
        %v3587 = vmul.f32 %v3565, %v3585
        %v3588 = vmul.f32 %v3566, %v3585
        %v3589 = vmul.f32 %v3567, %v3585
        %v3590 = vmul.f32 %v3568, %v3585
        %v3591 = vmul.f32 %v3569, %v3585
        %v3592 = vmul.f32 %v3570, %v3585
        %v3593 = vmul.f32 %v3571, %v3585
        %v3594 = vmul.f32 %v3572, %v3585
        %v3595 = vmul.f32 %v3573, %v3585
        %v3596 = vmul.f32 %v3574, %v3585
        %v3597 = vmul.f32 %v3575, %v3585
        %v3598 = vmul.f32 %v3576, %v3585
        %v3599 = vmul.f32 %v3577, %v3585
        %v3600 = vmul.f32 %v3578, %v3585
        %v3601 = vmul.f32 %v3579, %v3585
        %v3602 = vmul.f32 %v3580, %v3585
        %v3604 = vlaneseq
        %v3605 = vshrl.u32 %v3604, 7
        %v3606 = vsub.s32 0, %v3605
        %v3607 = vrot.slane %v3372, %v3606
        %v3609 = vadd.f32 %v3587, %v3607
        %v3610 = vadd.f32 %v3588, %v3607
        %v3611 = vadd.f32 %v3589, %v3607
        %v3612 = vadd.f32 %v3590, %v3607
        %v3613 = vadd.f32 %v3591, %v3607
        %v3614 = vadd.f32 %v3592, %v3607
        %v3615 = vadd.f32 %v3593, %v3607
        %v3616 = vadd.f32 %v3594, %v3607
        %v3617 = vadd.f32 %v3595, %v3607
        %v3618 = vadd.f32 %v3596, %v3607
        %v3619 = vadd.f32 %v3597, %v3607
        %v3620 = vadd.f32 %v3598, %v3607
        %v3621 = vadd.f32 %v3599, %v3607
        %v3622 = vadd.f32 %v3600, %v3607
        %v3623 = vadd.f32 %v3601, %v3607
        %v3624 = vadd.f32 %v3602, %v3607
        %v3625 = vld [vmem:[#allocation3] sm:$0xff]
        %v3626 = vld [vmem:[#allocation3 + $0x8] sm:$0xff]
        %v3627 = vld [vmem:[#allocation3 + $0x10] sm:$0xff]
        %v3628 = vld [vmem:[#allocation3 + $0x18] sm:$0xff]
        %v3629 = vld [vmem:[#allocation3 + $0x20] sm:$0xff]
        %v3630 = vld [vmem:[#allocation3 + $0x28] sm:$0xff]
        %v3631 = vld [vmem:[#allocation3 + $0x30] sm:$0xff]
        %v3632 = vld [vmem:[#allocation3 + $0x38] sm:$0xff]
        %v3633 = vld [vmem:[#allocation3 + $0x40] sm:$0xff]
        %v3634 = vld [vmem:[#allocation3 + $0x48] sm:$0xff]
        %v3635 = vld [vmem:[#allocation3 + $0x50] sm:$0xff]
        %v3636 = vld [vmem:[#allocation3 + $0x58] sm:$0xff]
        %v3637 = vld [vmem:[#allocation3 + $0x60] sm:$0xff]
        %v3638 = vld [vmem:[#allocation3 + $0x68] sm:$0xff]
        %v3639 = vld [vmem:[#allocation3 + $0x70] sm:$0xff]
        %v3640 = vld [vmem:[#allocation3 + $0x78] sm:$0xff]
        %v3641 = vadd.f32 %v3609, %v3625
        %v3642 = vadd.f32 %v3610, %v3626
        %v3643 = vadd.f32 %v3611, %v3627
        %v3644 = vadd.f32 %v3612, %v3628
        %v3645 = vadd.f32 %v3613, %v3629
        %v3646 = vadd.f32 %v3614, %v3630
        %v3647 = vadd.f32 %v3615, %v3631
        %v3648 = vadd.f32 %v3616, %v3632
        %v3649 = vadd.f32 %v3617, %v3633
        %v3650 = vadd.f32 %v3618, %v3634
        %v3651 = vadd.f32 %v3619, %v3635
        %v3652 = vadd.f32 %v3620, %v3636
        %v3653 = vadd.f32 %v3621, %v3637
        %v3654 = vadd.f32 %v3622, %v3638
        %v3655 = vadd.f32 %v3623, %v3639
        %v3656 = vadd.f32 %v3624, %v3640
        %v3657 = vld [vmem:[%s13] sm:$0x1]
        %v3658 = vld [vmem:[%s14] sm:$0x1]
        %v3659 = vsel %vm785, %v3641, 0.0
        %3660 = vadd.xlane.f32.xlu0 %v3659
        %v3661 = vpop.xlane.xlu0 %3660
        %v3662 = vsel %vm785, %v3642, 0.0
        %3663 = vadd.xlane.f32.xlu0 %v3662
        %v3664 = vpop.xlane.xlu0 %3663
        %v3665 = vsel %vm785, %v3643, 0.0
        %3666 = vadd.xlane.f32.xlu0 %v3665
        %v3667 = vpop.xlane.xlu0 %3666
        %v3668 = vsel %vm785, %v3644, 0.0
        %3669 = vadd.xlane.f32.xlu0 %v3668
        %v3670 = vpop.xlane.xlu0 %3669
        %v3671 = vsel %vm785, %v3645, 0.0
        %3672 = vadd.xlane.f32.xlu0 %v3671
        %v3673 = vpop.xlane.xlu0 %3672
        %v3674 = vsel %vm785, %v3646, 0.0
        %3675 = vadd.xlane.f32.xlu0 %v3674
        %v3676 = vpop.xlane.xlu0 %3675
        %v3677 = vsel %vm785, %v3647, 0.0
        %3678 = vadd.xlane.f32.xlu0 %v3677
        %v3679 = vpop.xlane.xlu0 %3678
        %v3680 = vsel %vm785, %v3648, 0.0
        %3681 = vadd.xlane.f32.xlu0 %v3680
        %v3682 = vpop.xlane.xlu0 %3681
        %v3683 = vsel %vm785, %v3649, 0.0
        %3684 = vadd.xlane.f32.xlu0 %v3683
        %v3685 = vpop.xlane.xlu0 %3684
        %v3686 = vsel %vm785, %v3650, 0.0
        %3687 = vadd.xlane.f32.xlu0 %v3686
        %v3688 = vpop.xlane.xlu0 %3687
        %v3689 = vsel %vm785, %v3651, 0.0
        %3690 = vadd.xlane.f32.xlu0 %v3689
        %v3691 = vpop.xlane.xlu0 %3690
        %v3692 = vsel %vm785, %v3652, 0.0
        %3693 = vadd.xlane.f32.xlu0 %v3692
        %v3694 = vpop.xlane.xlu0 %3693
        %v3695 = vsel %vm785, %v3653, 0.0
        %3696 = vadd.xlane.f32.xlu0 %v3695
        %v3697 = vpop.xlane.xlu0 %3696
        %v3698 = vsel %vm785, %v3654, 0.0
        %3699 = vadd.xlane.f32.xlu0 %v3698
        %v3700 = vpop.xlane.xlu0 %3699
        %v3701 = vsel %vm785, %v3655, 0.0
        %3702 = vadd.xlane.f32.xlu0 %v3701
        %v3703 = vpop.xlane.xlu0 %3702
        %v3704 = vsel %vm785, %v3656, 0.0
        %3705 = vadd.xlane.f32.xlu0 %v3704
        %v3706 = vpop.xlane.xlu0 %3705
        %v3707 = vmul.f32 %v3661, %v834
        %v3708 = vmul.f32 %v3664, %v834
        %v3709 = vmul.f32 %v3667, %v834
        %v3710 = vmul.f32 %v3670, %v834
        %v3711 = vmul.f32 %v3673, %v834
        %v3712 = vmul.f32 %v3676, %v834
        %v3713 = vmul.f32 %v3679, %v834
        %v3714 = vmul.f32 %v3682, %v834
        %v3715 = vmul.f32 %v3685, %v834
        %v3716 = vmul.f32 %v3688, %v834
        %v3717 = vmul.f32 %v3691, %v834
        %v3718 = vmul.f32 %v3694, %v834
        %v3719 = vmul.f32 %v3697, %v834
        %v3720 = vmul.f32 %v3700, %v834
        %v3721 = vmul.f32 %v3703, %v834
        %v3722 = vmul.f32 %v3706, %v834
        %v3723 = vsub.f32 %v3641, %v3707
        %v3724 = vsub.f32 %v3642, %v3708
        %v3725 = vsub.f32 %v3643, %v3709
        %v3726 = vsub.f32 %v3644, %v3710
        %v3727 = vsub.f32 %v3645, %v3711
        %v3728 = vsub.f32 %v3646, %v3712
        %v3729 = vsub.f32 %v3647, %v3713
        %v3730 = vsub.f32 %v3648, %v3714
        %v3731 = vsub.f32 %v3649, %v3715
        %v3732 = vsub.f32 %v3650, %v3716
        %v3733 = vsub.f32 %v3651, %v3717
        %v3734 = vsub.f32 %v3652, %v3718
        %v3735 = vsub.f32 %v3653, %v3719
        %v3736 = vsub.f32 %v3654, %v3720
        %v3737 = vsub.f32 %v3655, %v3721
        %v3738 = vsub.f32 %v3656, %v3722
        %v3739 = vmul.f32 %v3723, %v3723
        %v3740 = vmul.f32 %v3724, %v3724
        %v3741 = vmul.f32 %v3725, %v3725
        %v3742 = vmul.f32 %v3726, %v3726
        %v3743 = vmul.f32 %v3727, %v3727
        %v3744 = vmul.f32 %v3728, %v3728
        %v3745 = vmul.f32 %v3729, %v3729
        %v3746 = vmul.f32 %v3730, %v3730
        %v3747 = vmul.f32 %v3731, %v3731
        %v3748 = vmul.f32 %v3732, %v3732
        %v3749 = vmul.f32 %v3733, %v3733
        %v3750 = vmul.f32 %v3734, %v3734
        %v3751 = vmul.f32 %v3735, %v3735
        %v3752 = vmul.f32 %v3736, %v3736
        %v3753 = vmul.f32 %v3737, %v3737
        %v3754 = vmul.f32 %v3738, %v3738
        %v3755 = vsel %vm785, %v3739, 0.0
        %3756 = vadd.xlane.f32.xlu0 %v3755
        %v3757 = vpop.xlane.xlu0 %3756
        %v3758 = vsel %vm785, %v3740, 0.0
        %3759 = vadd.xlane.f32.xlu0 %v3758
        %v3760 = vpop.xlane.xlu0 %3759
        %v3761 = vsel %vm785, %v3741, 0.0
        %3762 = vadd.xlane.f32.xlu0 %v3761
        %v3763 = vpop.xlane.xlu0 %3762
        %v3764 = vsel %vm785, %v3742, 0.0
        %3765 = vadd.xlane.f32.xlu0 %v3764
        %v3766 = vpop.xlane.xlu0 %3765
        %v3767 = vsel %vm785, %v3743, 0.0
        %3768 = vadd.xlane.f32.xlu0 %v3767
        %v3769 = vpop.xlane.xlu0 %3768
        %v3770 = vsel %vm785, %v3744, 0.0
        %3771 = vadd.xlane.f32.xlu0 %v3770
        %v3772 = vpop.xlane.xlu0 %3771
        %v3773 = vsel %vm785, %v3745, 0.0
        %3774 = vadd.xlane.f32.xlu0 %v3773
        %v3775 = vpop.xlane.xlu0 %3774
        %v3776 = vsel %vm785, %v3746, 0.0
        %3777 = vadd.xlane.f32.xlu0 %v3776
        %v3778 = vpop.xlane.xlu0 %3777
        %v3779 = vsel %vm785, %v3747, 0.0
        %3780 = vadd.xlane.f32.xlu0 %v3779
        %v3781 = vpop.xlane.xlu0 %3780
        %v3782 = vsel %vm785, %v3748, 0.0
        %3783 = vadd.xlane.f32.xlu0 %v3782
        %v3784 = vpop.xlane.xlu0 %3783
        %v3785 = vsel %vm785, %v3749, 0.0
        %3786 = vadd.xlane.f32.xlu0 %v3785
        %v3787 = vpop.xlane.xlu0 %3786
        %v3788 = vsel %vm785, %v3750, 0.0
        %3789 = vadd.xlane.f32.xlu0 %v3788
        %v3790 = vpop.xlane.xlu0 %3789
        %v3791 = vsel %vm785, %v3751, 0.0
        %3792 = vadd.xlane.f32.xlu0 %v3791
        %v3793 = vpop.xlane.xlu0 %3792
        %v3794 = vsel %vm785, %v3752, 0.0
        %3795 = vadd.xlane.f32.xlu0 %v3794
        %v3796 = vpop.xlane.xlu0 %3795
        %v3797 = vsel %vm785, %v3753, 0.0
        %3798 = vadd.xlane.f32.xlu0 %v3797
        %v3799 = vpop.xlane.xlu0 %3798
        %v3800 = vsel %vm785, %v3754, 0.0
        %3801 = vadd.xlane.f32.xlu0 %v3800
        %v3802 = vpop.xlane.xlu0 %3801
        %v3803 = vmul.f32 %v3757, %v834
        %v3804 = vmul.f32 %v3760, %v834
        %v3805 = vmul.f32 %v3763, %v834
        %v3806 = vmul.f32 %v3766, %v834
        %v3807 = vmul.f32 %v3769, %v834
        %v3808 = vmul.f32 %v3772, %v834
        %v3809 = vmul.f32 %v3775, %v834
        %v3810 = vmul.f32 %v3778, %v834
        %v3811 = vmul.f32 %v3781, %v834
        %v3812 = vmul.f32 %v3784, %v834
        %v3813 = vmul.f32 %v3787, %v834
        %v3814 = vmul.f32 %v3790, %v834
        %v3815 = vmul.f32 %v3793, %v834
        %v3816 = vmul.f32 %v3796, %v834
        %v3817 = vmul.f32 %v3799, %v834
        %v3818 = vmul.f32 %v3802, %v834
        %v3819 = vadd.f32 %v3803, 1e-06
        %v3820 = vadd.f32 %v3804, 1e-06
        %v3821 = vadd.f32 %v3805, 1e-06
        %v3822 = vadd.f32 %v3806, 1e-06
        %v3823 = vadd.f32 %v3807, 1e-06
        %v3824 = vadd.f32 %v3808, 1e-06
        %v3825 = vadd.f32 %v3809, 1e-06
        %v3826 = vadd.f32 %v3810, 1e-06
        %v3827 = vadd.f32 %v3811, 1e-06
        %v3828 = vadd.f32 %v3812, 1e-06
        %v3829 = vadd.f32 %v3813, 1e-06
        %v3830 = vadd.f32 %v3814, 1e-06
        %v3831 = vadd.f32 %v3815, 1e-06
        %v3832 = vadd.f32 %v3816, 1e-06
        %v3833 = vadd.f32 %v3817, 1e-06
        %v3834 = vadd.f32 %v3818, 1e-06
        %v3835 = vrsqrt.pop %v3819
        %v3836 = vrsqrt.pop %v3820
        %v3837 = vrsqrt.pop %v3821
        %v3838 = vrsqrt.pop %v3822
        %v3839 = vrsqrt.pop %v3823
        %v3840 = vrsqrt.pop %v3824
        %v3841 = vrsqrt.pop %v3825
        %v3842 = vrsqrt.pop %v3826
        %v3843 = vrsqrt.pop %v3827
        %v3844 = vrsqrt.pop %v3828
        %v3845 = vrsqrt.pop %v3829
        %v3846 = vrsqrt.pop %v3830
        %v3847 = vrsqrt.pop %v3831
        %v3848 = vrsqrt.pop %v3832
        %v3849 = vrsqrt.pop %v3833
        %v3850 = vrsqrt.pop %v3834
        %v3851 = vmul.f32 %v3723, %v3835
        %v3852 = vmul.f32 %v3724, %v3836
        %v3853 = vmul.f32 %v3725, %v3837
        %v3854 = vmul.f32 %v3726, %v3838
        %v3855 = vmul.f32 %v3727, %v3839
        %v3856 = vmul.f32 %v3728, %v3840
        %v3857 = vmul.f32 %v3729, %v3841
        %v3858 = vmul.f32 %v3730, %v3842
        %v3859 = vmul.f32 %v3731, %v3843
        %v3860 = vmul.f32 %v3732, %v3844
        %v3861 = vmul.f32 %v3733, %v3845
        %v3862 = vmul.f32 %v3734, %v3846
        %v3863 = vmul.f32 %v3735, %v3847
        %v3864 = vmul.f32 %v3736, %v3848
        %v3865 = vmul.f32 %v3737, %v3849
        %v3866 = vmul.f32 %v3738, %v3850
        %v3868 = vlaneseq
        %v3869 = vshrl.u32 %v3868, 7
        %v3870 = vsub.s32 0, %v3869
        %v3871 = vrot.slane %v3657, %v3870
        %v3873 = vmul.f32 %v3851, %v3871
        %v3874 = vmul.f32 %v3852, %v3871
        %v3875 = vmul.f32 %v3853, %v3871
        %v3876 = vmul.f32 %v3854, %v3871
        %v3877 = vmul.f32 %v3855, %v3871
        %v3878 = vmul.f32 %v3856, %v3871
        %v3879 = vmul.f32 %v3857, %v3871
        %v3880 = vmul.f32 %v3858, %v3871
        %v3881 = vmul.f32 %v3859, %v3871
        %v3882 = vmul.f32 %v3860, %v3871
        %v3883 = vmul.f32 %v3861, %v3871
        %v3884 = vmul.f32 %v3862, %v3871
        %v3885 = vmul.f32 %v3863, %v3871
        %v3886 = vmul.f32 %v3864, %v3871
        %v3887 = vmul.f32 %v3865, %v3871
        %v3888 = vmul.f32 %v3866, %v3871
        %v3890 = vlaneseq
        %v3891 = vshrl.u32 %v3890, 7
        %v3892 = vsub.s32 0, %v3891
        %v3893 = vrot.slane %v3658, %v3892
        %v3895 = vadd.f32 %v3873, %v3893
        %v3896 = vadd.f32 %v3874, %v3893
        %v3897 = vadd.f32 %v3875, %v3893
        %v3898 = vadd.f32 %v3876, %v3893
        %v3899 = vadd.f32 %v3877, %v3893
        %v3900 = vadd.f32 %v3878, %v3893
        %v3901 = vadd.f32 %v3879, %v3893
        %v3902 = vadd.f32 %v3880, %v3893
        %v3903 = vadd.f32 %v3881, %v3893
        %v3904 = vadd.f32 %v3882, %v3893
        %v3905 = vadd.f32 %v3883, %v3893
        %v3906 = vadd.f32 %v3884, %v3893
        %v3907 = vadd.f32 %v3885, %v3893
        %v3908 = vadd.f32 %v3886, %v3893
        %v3909 = vadd.f32 %v3887, %v3893
        %v3910 = vadd.f32 %v3888, %v3893
        %v3911 = vld [vmem:[%s15] sm:$0xf]
        %v3912 = vld [vmem:[%s16] sm:$0x1]
        %v3914 = vlaneseq
        %v3915 = vshrl.u32 %v3914, 7
        %v3916 = vsub.s32 0, %v3915
        %v3917 = vrot.slane %v3912, %v3916
        %v3920 = vsel %vm785, %v3895, 0
        %v3923 = vsel %vm785, %v3896, 0
        %v3926 = vsel %vm785, %v3897, 0
        %v3929 = vsel %vm785, %v3898, 0
        %v3932 = vsel %vm785, %v3899, 0
        %v3935 = vsel %vm785, %v3900, 0
        %v3938 = vsel %vm785, %v3901, 0
        %v3941 = vsel %vm785, %v3902, 0
        %v3944 = vsel %vm785, %v3903, 0
        %v3947 = vsel %vm785, %v3904, 0
        %v3950 = vsel %vm785, %v3905, 0
        %v3953 = vsel %vm785, %v3906, 0
        %v3956 = vsel %vm785, %v3907, 0
        %v3959 = vsel %vm785, %v3908, 0
        %v3962 = vsel %vm785, %v3909, 0
        %v3965 = vsel %vm785, %v3910, 0
        %v3968 = vsel %vm1088, %v3911, 0
        %3970 = vmatprep.subr.mxu0 0.0
        %3971 = vmatpush1.msra.mxu0 %v3968
        %3972 = vmatprep.subr.mxu0 0.0
        %3973 = vmatpush1.msra.mxu0 0.0
        %3974 = vmatprep.subr.mxu0 0.0
        %3975 = vmatpush1.msra.mxu0 0.0
        %3976 = vmatprep.subr.mxu0 0.0
        %3977 = vmatpush1.msra.mxu0 0.0
        %3978 = vmatprep.subr.mxu0 0.0
        %3979 = vmatpush1.msra.mxu0 0.0
        %3980 = vmatprep.subr.mxu0 0.0
        %3981 = vmatpush1.msra.mxu0 0.0
        %3982 = vmatprep.subr.mxu0 0.0
        %3983 = vmatpush1.msra.mxu0 0.0
        %3984 = vmatprep.subr.mxu0 0.0
        %3985 = vmatpush1.msra.mxu0 0.0
        %3986 = vmatprep.subr.mxu0 0.0
        %3987 = vmatpush1.msra.mxu0 0.0
        %3988 = vmatprep.subr.mxu0 0.0
        %3989 = vmatpush1.msra.mxu0 0.0
        %3990 = vmatprep.subr.mxu0 0.0
        %3991 = vmatpush1.msra.mxu0 0.0
        %3992 = vmatprep.subr.mxu0 0.0
        %3993 = vmatpush1.msra.mxu0 0.0
        %3994 = vmatprep.subr.mxu0 0.0
        %3995 = vmatpush1.msra.mxu0 0.0
        %3996 = vmatprep.subr.mxu0 0.0
        %3997 = vmatpush1.msra.mxu0 0.0
        %3998 = vmatprep.subr.mxu0 0.0
        %3999 = vmatpush1.msra.mxu0 0.0
        %4000 = vmatprep.subr.mxu0 0.0
        %4001 = vmatpush1.msra.mxu0 0.0
        %4002 = vmatprep.subr.mxu0 0.0
        %4003 = vmatpush1.msra.mxu0 0.0
        %4004 = vmatprep.subr.mxu0 0.0
        %4005 = vmatpush1.msra.mxu0 0.0
        %4006 = vmatprep.subr.mxu0 0.0
        %4007 = vmatpush1.msra.mxu0 0.0
        %4008 = vmatprep.subr.mxu0 0.0
        %4009 = vmatpush1.msra.mxu0 0.0
        %4010 = vmatprep.subr.mxu0 0.0
        %4011 = vmatpush1.msra.mxu0 0.0
        %4012 = vmatprep.subr.mxu0 0.0
        %4013 = vmatpush1.msra.mxu0 0.0
        %4014 = vmatprep.subr.mxu0 0.0
        %4015 = vmatpush1.msra.mxu0 0.0
        %4016 = vmatprep.subr.mxu0 0.0
        %4017 = vmatpush1.msra.mxu0 0.0
        %4018 = vmatprep.subr.mxu0 0.0
        %4019 = vmatpush1.msra.mxu0 0.0
        %4020 = vmatprep.subr.mxu0 0.0
        %4021 = vmatpush1.msra.mxu0 0.0
        %4022 = vmatprep.subr.mxu0 0.0
        %4023 = vmatpush1.msra.mxu0 0.0
        %4024 = vmatprep.subr.mxu0 0.0
        %4025 = vmatpush1.msra.mxu0 0.0
        %4026 = vmatprep.subr.mxu0 0.0
        %4027 = vmatpush1.msra.mxu0 0.0
        %4028 = vmatprep.subr.mxu0 0.0
        %4029 = vmatpush1.msra.mxu0 0.0
        %4030 = vmatprep.subr.mxu0 0.0
        %4031 = vmatpush1.msra.mxu0 0.0
        %4032 = vmatprep.subr.mxu0 0.0
        %4033 = vmatpush1.msra.mxu0 0.0
        %4034 = vmatprep.mubr.f32.mxu0 0.0
        %4035 = vmatmul.mubr.f32.gmra.mrb[0].mxu0 %v3920
        %v4036 = vpop.f32.mrb[0].mxu0
        %v4037 = vadd.f32 %v3917, %v4036
        %v4038 = vpop.f32.mrb[0].mxu0
        %4039 = vmatprep.mubr.f32.mxu0 0.0
        %4040 = vmatmul.mubr.f32.gmra.mrb[0].mxu0 %v3923
        %v4041 = vpop.f32.mrb[0].mxu0
        %v4042 = vadd.f32 %v3917, %v4041
        %v4043 = vpop.f32.mrb[0].mxu0
        %4044 = vmatprep.mubr.f32.mxu0 0.0
        %4045 = vmatmul.mubr.f32.gmra.mrb[0].mxu0 %v3926
        %v4046 = vpop.f32.mrb[0].mxu0
        %v4047 = vadd.f32 %v3917, %v4046
        %v4048 = vpop.f32.mrb[0].mxu0
        %4049 = vmatprep.mubr.f32.mxu0 0.0
        %4050 = vmatmul.mubr.f32.gmra.mrb[0].mxu0 %v3929
        %v4051 = vpop.f32.mrb[0].mxu0
        %v4052 = vadd.f32 %v3917, %v4051
        %v4053 = vpop.f32.mrb[0].mxu0
        %4054 = vmatprep.mubr.f32.mxu0 0.0
        %4055 = vmatmul.mubr.f32.gmra.mrb[0].mxu0 %v3932
        %v4056 = vpop.f32.mrb[0].mxu0
        %v4057 = vadd.f32 %v3917, %v4056
        %v4058 = vpop.f32.mrb[0].mxu0
        %4059 = vmatprep.mubr.f32.mxu0 0.0
        %4060 = vmatmul.mubr.f32.gmra.mrb[0].mxu0 %v3935
        %v4061 = vpop.f32.mrb[0].mxu0
        %v4062 = vadd.f32 %v3917, %v4061
        %v4063 = vpop.f32.mrb[0].mxu0
        %4064 = vmatprep.mubr.f32.mxu0 0.0
        %4065 = vmatmul.mubr.f32.gmra.mrb[0].mxu0 %v3938
        %v4066 = vpop.f32.mrb[0].mxu0
        %v4067 = vadd.f32 %v3917, %v4066
        %v4068 = vpop.f32.mrb[0].mxu0
        %4069 = vmatprep.mubr.f32.mxu0 0.0
        %4070 = vmatmul.mubr.f32.gmra.mrb[0].mxu0 %v3941
        %v4071 = vpop.f32.mrb[0].mxu0
        %v4072 = vadd.f32 %v3917, %v4071
        %v4073 = vpop.f32.mrb[0].mxu0
        %4074 = vmatprep.mubr.f32.mxu0 0.0
        %4075 = vmatmul.mubr.f32.gmra.mrb[0].mxu0 %v3944
        %v4076 = vpop.f32.mrb[0].mxu0
        %v4077 = vadd.f32 %v3917, %v4076
        %v4078 = vpop.f32.mrb[0].mxu0
        %4079 = vmatprep.mubr.f32.mxu0 0.0
        %4080 = vmatmul.mubr.f32.gmra.mrb[0].mxu0 %v3947
        %v4081 = vpop.f32.mrb[0].mxu0
        %v4082 = vadd.f32 %v3917, %v4081
        %v4083 = vpop.f32.mrb[0].mxu0
        %4084 = vmatprep.mubr.f32.mxu0 0.0
        %4085 = vmatmul.mubr.f32.gmra.mrb[0].mxu0 %v3950
        %v4086 = vpop.f32.mrb[0].mxu0
        %v4087 = vadd.f32 %v3917, %v4086
        %v4088 = vpop.f32.mrb[0].mxu0
        %4089 = vmatprep.mubr.f32.mxu0 0.0
        %4090 = vmatmul.mubr.f32.gmra.mrb[0].mxu0 %v3953
        %v4091 = vpop.f32.mrb[0].mxu0
        %v4092 = vadd.f32 %v3917, %v4091
        %v4093 = vpop.f32.mrb[0].mxu0
        %4094 = vmatprep.mubr.f32.mxu0 0.0
        %4095 = vmatmul.mubr.f32.gmra.mrb[0].mxu0 %v3956
        %v4096 = vpop.f32.mrb[0].mxu0
        %v4097 = vadd.f32 %v3917, %v4096
        %v4098 = vpop.f32.mrb[0].mxu0
        %4099 = vmatprep.mubr.f32.mxu0 0.0
        %4100 = vmatmul.mubr.f32.gmra.mrb[0].mxu0 %v3959
        %v4101 = vpop.f32.mrb[0].mxu0
        %v4102 = vadd.f32 %v3917, %v4101
        %v4103 = vpop.f32.mrb[0].mxu0
        %4104 = vmatprep.mubr.f32.mxu0 0.0
        %4105 = vmatmul.mubr.f32.gmra.mrb[0].mxu0 %v3962
        %v4106 = vpop.f32.mrb[0].mxu0
        %v4107 = vadd.f32 %v3917, %v4106
        %v4108 = vpop.f32.mrb[0].mxu0
        %4109 = vmatprep.mubr.f32.mxu0 0.0
        %4110 = vmatmul.mubr.f32.gmra.mrb[0].mxu0 %v3965
        %v4111 = vpop.f32.mrb[0].mxu0
        %v4112 = vadd.f32 %v3917, %v4111
        %v4113 = vpop.f32.mrb[0].mxu0
        %4114 = vdwg.mxu0
        %v4115 = vld [vmem:[%s17] sm:$0xf]
        %v4116 = vld [vmem:[%s18] sm:$0x1]
        %v4118 = vlaneseq
        %v4119 = vshrl.u32 %v4118, 7
        %v4120 = vsub.s32 0, %v4119
        %v4121 = vrot.slane %v4116, %v4120
        %v4124 = vsel %vm1088, %v4115, 0
        %4126 = vmatprep.subr.mxu0 0.0
        %4127 = vmatpush1.msra.mxu0 %v4124
        %4128 = vmatprep.subr.mxu0 0.0
        %4129 = vmatpush1.msra.mxu0 0.0
        %4130 = vmatprep.subr.mxu0 0.0
        %4131 = vmatpush1.msra.mxu0 0.0
        %4132 = vmatprep.subr.mxu0 0.0
        %4133 = vmatpush1.msra.mxu0 0.0
        %4134 = vmatprep.subr.mxu0 0.0
        %4135 = vmatpush1.msra.mxu0 0.0
        %4136 = vmatprep.subr.mxu0 0.0
        %4137 = vmatpush1.msra.mxu0 0.0
        %4138 = vmatprep.subr.mxu0 0.0
        %4139 = vmatpush1.msra.mxu0 0.0
        %4140 = vmatprep.subr.mxu0 0.0
        %4141 = vmatpush1.msra.mxu0 0.0
        %4142 = vmatprep.subr.mxu0 0.0
        %4143 = vmatpush1.msra.mxu0 0.0
        %4144 = vmatprep.subr.mxu0 0.0
        %4145 = vmatpush1.msra.mxu0 0.0
        %4146 = vmatprep.subr.mxu0 0.0
        %4147 = vmatpush1.msra.mxu0 0.0
        %4148 = vmatprep.subr.mxu0 0.0
        %4149 = vmatpush1.msra.mxu0 0.0
        %4150 = vmatprep.subr.mxu0 0.0
        %4151 = vmatpush1.msra.mxu0 0.0
        %4152 = vmatprep.subr.mxu0 0.0
        %4153 = vmatpush1.msra.mxu0 0.0
        %4154 = vmatprep.subr.mxu0 0.0
        %4155 = vmatpush1.msra.mxu0 0.0
        %4156 = vmatprep.subr.mxu0 0.0
        %4157 = vmatpush1.msra.mxu0 0.0
        %4158 = vmatprep.subr.mxu0 0.0
        %4159 = vmatpush1.msra.mxu0 0.0
        %4160 = vmatprep.subr.mxu0 0.0
        %4161 = vmatpush1.msra.mxu0 0.0
        %4162 = vmatprep.subr.mxu0 0.0
        %4163 = vmatpush1.msra.mxu0 0.0
        %4164 = vmatprep.subr.mxu0 0.0
        %4165 = vmatpush1.msra.mxu0 0.0
        %4166 = vmatprep.subr.mxu0 0.0
        %4167 = vmatpush1.msra.mxu0 0.0
        %4168 = vmatprep.subr.mxu0 0.0
        %4169 = vmatpush1.msra.mxu0 0.0
        %4170 = vmatprep.subr.mxu0 0.0
        %4171 = vmatpush1.msra.mxu0 0.0
        %4172 = vmatprep.subr.mxu0 0.0
        %4173 = vmatpush1.msra.mxu0 0.0
        %4174 = vmatprep.subr.mxu0 0.0
        %4175 = vmatpush1.msra.mxu0 0.0
        %4176 = vmatprep.subr.mxu0 0.0
        %4177 = vmatpush1.msra.mxu0 0.0
        %4178 = vmatprep.subr.mxu0 0.0
        %4179 = vmatpush1.msra.mxu0 0.0
        %4180 = vmatprep.subr.mxu0 0.0
        %4181 = vmatpush1.msra.mxu0 0.0
        %4182 = vmatprep.subr.mxu0 0.0
        %4183 = vmatpush1.msra.mxu0 0.0
        %4184 = vmatprep.subr.mxu0 0.0
        %4185 = vmatpush1.msra.mxu0 0.0
        %4186 = vmatprep.subr.mxu0 0.0
        %4187 = vmatpush1.msra.mxu0 0.0
        %4188 = vmatprep.subr.mxu0 0.0
        %4189 = vmatpush1.msra.mxu0 0.0
        %4190 = vmatprep.mubr.f32.mxu0 0.0
        %4191 = vmatmul.mubr.f32.gmra.mrb[0].mxu0 %v3920
        %v4192 = vpop.f32.mrb[0].mxu0
        %v4193 = vadd.f32 %v4121, %v4192
        %v4194 = vpop.f32.mrb[0].mxu0
        %4195 = vmatprep.mubr.f32.mxu0 0.0
        %4196 = vmatmul.mubr.f32.gmra.mrb[0].mxu0 %v3923
        %v4197 = vpop.f32.mrb[0].mxu0
        %v4198 = vadd.f32 %v4121, %v4197
        %v4199 = vpop.f32.mrb[0].mxu0
        %4200 = vmatprep.mubr.f32.mxu0 0.0
        %4201 = vmatmul.mubr.f32.gmra.mrb[0].mxu0 %v3926
        %v4202 = vpop.f32.mrb[0].mxu0
        %v4203 = vadd.f32 %v4121, %v4202
        %v4204 = vpop.f32.mrb[0].mxu0
        %4205 = vmatprep.mubr.f32.mxu0 0.0
        %4206 = vmatmul.mubr.f32.gmra.mrb[0].mxu0 %v3929
        %v4207 = vpop.f32.mrb[0].mxu0
        %v4208 = vadd.f32 %v4121, %v4207
        %v4209 = vpop.f32.mrb[0].mxu0
        %4210 = vmatprep.mubr.f32.mxu0 0.0
        %4211 = vmatmul.mubr.f32.gmra.mrb[0].mxu0 %v3932
        %v4212 = vpop.f32.mrb[0].mxu0
        %v4213 = vadd.f32 %v4121, %v4212
        %v4214 = vpop.f32.mrb[0].mxu0
        %4215 = vmatprep.mubr.f32.mxu0 0.0
        %4216 = vmatmul.mubr.f32.gmra.mrb[0].mxu0 %v3935
        %v4217 = vpop.f32.mrb[0].mxu0
        %v4218 = vadd.f32 %v4121, %v4217
        %v4219 = vpop.f32.mrb[0].mxu0
        %4220 = vmatprep.mubr.f32.mxu0 0.0
        %4221 = vmatmul.mubr.f32.gmra.mrb[0].mxu0 %v3938
        %v4222 = vpop.f32.mrb[0].mxu0
        %v4223 = vadd.f32 %v4121, %v4222
        %v4224 = vpop.f32.mrb[0].mxu0
        %4225 = vmatprep.mubr.f32.mxu0 0.0
        %4226 = vmatmul.mubr.f32.gmra.mrb[0].mxu0 %v3941
        %v4227 = vpop.f32.mrb[0].mxu0
        %v4228 = vadd.f32 %v4121, %v4227
        %v4229 = vpop.f32.mrb[0].mxu0
        %4230 = vmatprep.mubr.f32.mxu0 0.0
        %4231 = vmatmul.mubr.f32.gmra.mrb[0].mxu0 %v3944
        %v4232 = vpop.f32.mrb[0].mxu0
        %v4233 = vadd.f32 %v4121, %v4232
        %v4234 = vpop.f32.mrb[0].mxu0
        %4235 = vmatprep.mubr.f32.mxu0 0.0
        %4236 = vmatmul.mubr.f32.gmra.mrb[0].mxu0 %v3947
        %v4237 = vpop.f32.mrb[0].mxu0
        %v4238 = vadd.f32 %v4121, %v4237
        %v4239 = vpop.f32.mrb[0].mxu0
        %4240 = vmatprep.mubr.f32.mxu0 0.0
        %4241 = vmatmul.mubr.f32.gmra.mrb[0].mxu0 %v3950
        %v4242 = vpop.f32.mrb[0].mxu0
        %v4243 = vadd.f32 %v4121, %v4242
        %v4244 = vpop.f32.mrb[0].mxu0
        %4245 = vmatprep.mubr.f32.mxu0 0.0
        %4246 = vmatmul.mubr.f32.gmra.mrb[0].mxu0 %v3953
        %v4247 = vpop.f32.mrb[0].mxu0
        %v4248 = vadd.f32 %v4121, %v4247
        %v4249 = vpop.f32.mrb[0].mxu0
        %4250 = vmatprep.mubr.f32.mxu0 0.0
        %4251 = vmatmul.mubr.f32.gmra.mrb[0].mxu0 %v3956
        %v4252 = vpop.f32.mrb[0].mxu0
        %v4253 = vadd.f32 %v4121, %v4252
        %v4254 = vpop.f32.mrb[0].mxu0
        %4255 = vmatprep.mubr.f32.mxu0 0.0
        %4256 = vmatmul.mubr.f32.gmra.mrb[0].mxu0 %v3959
        %v4257 = vpop.f32.mrb[0].mxu0
        %v4258 = vadd.f32 %v4121, %v4257
        %v4259 = vpop.f32.mrb[0].mxu0
        %4260 = vmatprep.mubr.f32.mxu0 0.0
        %4261 = vmatmul.mubr.f32.gmra.mrb[0].mxu0 %v3962
        %v4262 = vpop.f32.mrb[0].mxu0
        %v4263 = vadd.f32 %v4121, %v4262
        %v4264 = vpop.f32.mrb[0].mxu0
        %4265 = vmatprep.mubr.f32.mxu0 0.0
        %4266 = vmatmul.mubr.f32.gmra.mrb[0].mxu0 %v3965
        %v4267 = vpop.f32.mrb[0].mxu0
        %v4268 = vadd.f32 %v4121, %v4267
        %v4269 = vpop.f32.mrb[0].mxu0
        %4270 = vdwg.mxu0
        %v4271 = vmul.f32 %v4037, %v4193
        %v4272 = vmul.f32 %v4042, %v4198
        %v4273 = vmul.f32 %v4047, %v4203
        %v4274 = vmul.f32 %v4052, %v4208
        %v4275 = vmul.f32 %v4057, %v4213
        %v4276 = vmul.f32 %v4062, %v4218
        %v4277 = vmul.f32 %v4067, %v4223
        %v4278 = vmul.f32 %v4072, %v4228
        %v4279 = vmul.f32 %v4077, %v4233
        %v4280 = vmul.f32 %v4082, %v4238
        %v4281 = vmul.f32 %v4087, %v4243
        %v4282 = vmul.f32 %v4092, %v4248
        %v4283 = vmul.f32 %v4097, %v4253
        %v4284 = vmul.f32 %v4102, %v4258
        %v4285 = vmul.f32 %v4107, %v4263
        %v4286 = vmul.f32 %v4112, %v4268
        %v4287 = vld [vmem:[%s19] sm:$0xf]
        %v4288 = vld [vmem:[%s20] sm:$0x1]
        %v4290 = vlaneseq
        %v4291 = vshrl.u32 %v4290, 7
        %v4292 = vsub.s32 0, %v4291
        %v4293 = vrot.slane %v4288, %v4292
        %v4296 = vsel %vm785, %v4271, 0
        %v4299 = vsel %vm785, %v4272, 0
        %v4302 = vsel %vm785, %v4273, 0
        %v4305 = vsel %vm785, %v4274, 0
        %v4308 = vsel %vm785, %v4275, 0
        %v4311 = vsel %vm785, %v4276, 0
        %v4314 = vsel %vm785, %v4277, 0
        %v4317 = vsel %vm785, %v4278, 0
        %v4320 = vsel %vm785, %v4279, 0
        %v4323 = vsel %vm785, %v4280, 0
        %v4326 = vsel %vm785, %v4281, 0
        %v4329 = vsel %vm785, %v4282, 0
        %v4332 = vsel %vm785, %v4283, 0
        %v4335 = vsel %vm785, %v4284, 0
        %v4338 = vsel %vm785, %v4285, 0
        %v4341 = vsel %vm785, %v4286, 0
        %v4344 = vsel %vm1088, %v4287, 0
        %4346 = vmatprep.subr.mxu0 0.0
        %4347 = vmatpush1.msra.mxu0 %v4344
        %4348 = vmatprep.subr.mxu0 0.0
        %4349 = vmatpush1.msra.mxu0 0.0
        %4350 = vmatprep.subr.mxu0 0.0
        %4351 = vmatpush1.msra.mxu0 0.0
        %4352 = vmatprep.subr.mxu0 0.0
        %4353 = vmatpush1.msra.mxu0 0.0
        %4354 = vmatprep.subr.mxu0 0.0
        %4355 = vmatpush1.msra.mxu0 0.0
        %4356 = vmatprep.subr.mxu0 0.0
        %4357 = vmatpush1.msra.mxu0 0.0
        %4358 = vmatprep.subr.mxu0 0.0
        %4359 = vmatpush1.msra.mxu0 0.0
        %4360 = vmatprep.subr.mxu0 0.0
        %4361 = vmatpush1.msra.mxu0 0.0
        %4362 = vmatprep.subr.mxu0 0.0
        %4363 = vmatpush1.msra.mxu0 0.0
        %4364 = vmatprep.subr.mxu0 0.0
        %4365 = vmatpush1.msra.mxu0 0.0
        %4366 = vmatprep.subr.mxu0 0.0
        %4367 = vmatpush1.msra.mxu0 0.0
        %4368 = vmatprep.subr.mxu0 0.0
        %4369 = vmatpush1.msra.mxu0 0.0
        %4370 = vmatprep.subr.mxu0 0.0
        %4371 = vmatpush1.msra.mxu0 0.0
        %4372 = vmatprep.subr.mxu0 0.0
        %4373 = vmatpush1.msra.mxu0 0.0
        %4374 = vmatprep.subr.mxu0 0.0
        %4375 = vmatpush1.msra.mxu0 0.0
        %4376 = vmatprep.subr.mxu0 0.0
        %4377 = vmatpush1.msra.mxu0 0.0
        %4378 = vmatprep.subr.mxu0 0.0
        %4379 = vmatpush1.msra.mxu0 0.0
        %4380 = vmatprep.subr.mxu0 0.0
        %4381 = vmatpush1.msra.mxu0 0.0
        %4382 = vmatprep.subr.mxu0 0.0
        %4383 = vmatpush1.msra.mxu0 0.0
        %4384 = vmatprep.subr.mxu0 0.0
        %4385 = vmatpush1.msra.mxu0 0.0
        %4386 = vmatprep.subr.mxu0 0.0
        %4387 = vmatpush1.msra.mxu0 0.0
        %4388 = vmatprep.subr.mxu0 0.0
        %4389 = vmatpush1.msra.mxu0 0.0
        %4390 = vmatprep.subr.mxu0 0.0
        %4391 = vmatpush1.msra.mxu0 0.0
        %4392 = vmatprep.subr.mxu0 0.0
        %4393 = vmatpush1.msra.mxu0 0.0
        %4394 = vmatprep.subr.mxu0 0.0
        %4395 = vmatpush1.msra.mxu0 0.0
        %4396 = vmatprep.subr.mxu0 0.0
        %4397 = vmatpush1.msra.mxu0 0.0
        %4398 = vmatprep.subr.mxu0 0.0
        %4399 = vmatpush1.msra.mxu0 0.0
        %4400 = vmatprep.subr.mxu0 0.0
        %4401 = vmatpush1.msra.mxu0 0.0
        %4402 = vmatprep.subr.mxu0 0.0
        %4403 = vmatpush1.msra.mxu0 0.0
        %4404 = vmatprep.subr.mxu0 0.0
        %4405 = vmatpush1.msra.mxu0 0.0
        %4406 = vmatprep.subr.mxu0 0.0
        %4407 = vmatpush1.msra.mxu0 0.0
        %4408 = vmatprep.subr.mxu0 0.0
        %4409 = vmatpush1.msra.mxu0 0.0
        %4410 = vmatprep.mubr.f32.mxu0 0.0
        %4411 = vmatmul.mubr.f32.gmra.mrb[0].mxu0 %v4296
        %v4412 = vpop.f32.mrb[0].mxu0
        %v4413 = vadd.f32 %v4293, %v4412
        %v4414 = vpop.f32.mrb[0].mxu0
        %4415 = vmatprep.mubr.f32.mxu0 0.0
        %4416 = vmatmul.mubr.f32.gmra.mrb[0].mxu0 %v4299
        %v4417 = vpop.f32.mrb[0].mxu0
        %v4418 = vadd.f32 %v4293, %v4417
        %v4419 = vpop.f32.mrb[0].mxu0
        %4420 = vmatprep.mubr.f32.mxu0 0.0
        %4421 = vmatmul.mubr.f32.gmra.mrb[0].mxu0 %v4302
        %v4422 = vpop.f32.mrb[0].mxu0
        %v4423 = vadd.f32 %v4293, %v4422
        %v4424 = vpop.f32.mrb[0].mxu0
        %4425 = vmatprep.mubr.f32.mxu0 0.0
        %4426 = vmatmul.mubr.f32.gmra.mrb[0].mxu0 %v4305
        %v4427 = vpop.f32.mrb[0].mxu0
        %v4428 = vadd.f32 %v4293, %v4427
        %v4429 = vpop.f32.mrb[0].mxu0
        %4430 = vmatprep.mubr.f32.mxu0 0.0
        %4431 = vmatmul.mubr.f32.gmra.mrb[0].mxu0 %v4308
        %v4432 = vpop.f32.mrb[0].mxu0
        %v4433 = vadd.f32 %v4293, %v4432
        %v4434 = vpop.f32.mrb[0].mxu0
        %4435 = vmatprep.mubr.f32.mxu0 0.0
        %4436 = vmatmul.mubr.f32.gmra.mrb[0].mxu0 %v4311
        %v4437 = vpop.f32.mrb[0].mxu0
        %v4438 = vadd.f32 %v4293, %v4437
        %v4439 = vpop.f32.mrb[0].mxu0
        %4440 = vmatprep.mubr.f32.mxu0 0.0
        %4441 = vmatmul.mubr.f32.gmra.mrb[0].mxu0 %v4314
        %v4442 = vpop.f32.mrb[0].mxu0
        %v4443 = vadd.f32 %v4293, %v4442
        %v4444 = vpop.f32.mrb[0].mxu0
        %4445 = vmatprep.mubr.f32.mxu0 0.0
        %4446 = vmatmul.mubr.f32.gmra.mrb[0].mxu0 %v4317
        %v4447 = vpop.f32.mrb[0].mxu0
        %v4448 = vadd.f32 %v4293, %v4447
        %v4449 = vpop.f32.mrb[0].mxu0
        %4450 = vmatprep.mubr.f32.mxu0 0.0
        %4451 = vmatmul.mubr.f32.gmra.mrb[0].mxu0 %v4320
        %v4452 = vpop.f32.mrb[0].mxu0
        %v4453 = vadd.f32 %v4293, %v4452
        %v4454 = vpop.f32.mrb[0].mxu0
        %4455 = vmatprep.mubr.f32.mxu0 0.0
        %4456 = vmatmul.mubr.f32.gmra.mrb[0].mxu0 %v4323
        %v4457 = vpop.f32.mrb[0].mxu0
        %v4458 = vadd.f32 %v4293, %v4457
        %v4459 = vpop.f32.mrb[0].mxu0
        %4460 = vmatprep.mubr.f32.mxu0 0.0
        %4461 = vmatmul.mubr.f32.gmra.mrb[0].mxu0 %v4326
        %v4462 = vpop.f32.mrb[0].mxu0
        %v4463 = vadd.f32 %v4293, %v4462
        %v4464 = vpop.f32.mrb[0].mxu0
        %4465 = vmatprep.mubr.f32.mxu0 0.0
        %4466 = vmatmul.mubr.f32.gmra.mrb[0].mxu0 %v4329
        %v4467 = vpop.f32.mrb[0].mxu0
        %v4468 = vadd.f32 %v4293, %v4467
        %v4469 = vpop.f32.mrb[0].mxu0
        %4470 = vmatprep.mubr.f32.mxu0 0.0
        %4471 = vmatmul.mubr.f32.gmra.mrb[0].mxu0 %v4332
        %v4472 = vpop.f32.mrb[0].mxu0
        %v4473 = vadd.f32 %v4293, %v4472
        %v4474 = vpop.f32.mrb[0].mxu0
        %4475 = vmatprep.mubr.f32.mxu0 0.0
        %4476 = vmatmul.mubr.f32.gmra.mrb[0].mxu0 %v4335
        %v4477 = vpop.f32.mrb[0].mxu0
        %v4478 = vadd.f32 %v4293, %v4477
        %v4479 = vpop.f32.mrb[0].mxu0
        %4480 = vmatprep.mubr.f32.mxu0 0.0
        %4481 = vmatmul.mubr.f32.gmra.mrb[0].mxu0 %v4338
        %v4482 = vpop.f32.mrb[0].mxu0
        %v4483 = vadd.f32 %v4293, %v4482
        %v4484 = vpop.f32.mrb[0].mxu0
        %4485 = vmatprep.mubr.f32.mxu0 0.0
        %4486 = vmatmul.mubr.f32.gmra.mrb[0].mxu0 %v4341
        %v4487 = vpop.f32.mrb[0].mxu0
        %v4488 = vadd.f32 %v4293, %v4487
        %v4489 = vpop.f32.mrb[0].mxu0
        %4490 = vdwg.mxu0
        %v4491 = vadd.f32 %v4413, %v3641
        %v4492 = vadd.f32 %v4418, %v3642
        %v4493 = vadd.f32 %v4423, %v3643
        %v4494 = vadd.f32 %v4428, %v3644
        %v4495 = vadd.f32 %v4433, %v3645
        %v4496 = vadd.f32 %v4438, %v3646
        %v4497 = vadd.f32 %v4443, %v3647
        %v4498 = vadd.f32 %v4448, %v3648
        %v4499 = vadd.f32 %v4453, %v3649
        %v4500 = vadd.f32 %v4458, %v3650
        %v4501 = vadd.f32 %v4463, %v3651
        %v4502 = vadd.f32 %v4468, %v3652
        %v4503 = vadd.f32 %v4473, %v3653
        %v4504 = vadd.f32 %v4478, %v3654
        %v4505 = vadd.f32 %v4483, %v3655
        %v4506 = vadd.f32 %v4488, %v3656
        %4507 = vst.msk [vmem:[%s739] sm:$0xff] %vm785, %v4491
        %4508 = vst.msk [vmem:[%s739 + $0x8] sm:$0xff] %vm785, %v4492
        %4509 = vst.msk [vmem:[%s739 + $0x10] sm:$0xff] %vm785, %v4493
        %4510 = vst.msk [vmem:[%s739 + $0x18] sm:$0xff] %vm785, %v4494
        %4511 = vst.msk [vmem:[%s739 + $0x20] sm:$0xff] %vm785, %v4495
        %4512 = vst.msk [vmem:[%s739 + $0x28] sm:$0xff] %vm785, %v4496
        %4513 = vst.msk [vmem:[%s739 + $0x30] sm:$0xff] %vm785, %v4497
        %4514 = vst.msk [vmem:[%s739 + $0x38] sm:$0xff] %vm785, %v4498
        %4515 = vst.msk [vmem:[%s739 + $0x40] sm:$0xff] %vm785, %v4499
        %4516 = vst.msk [vmem:[%s739 + $0x48] sm:$0xff] %vm785, %v4500
        %4517 = vst.msk [vmem:[%s739 + $0x50] sm:$0xff] %vm785, %v4501
        %4518 = vst.msk [vmem:[%s739 + $0x58] sm:$0xff] %vm785, %v4502
        %4519 = vst.msk [vmem:[%s739 + $0x60] sm:$0xff] %vm785, %v4503
        %4520 = vst.msk [vmem:[%s739 + $0x68] sm:$0xff] %vm785, %v4504
        %4521 = vst.msk [vmem:[%s739 + $0x70] sm:$0xff] %vm785, %v4505
        %4522 = vst.msk [vmem:[%s739 + $0x78] sm:$0xff] %vm785, %v4506
      $region108: #{tpu_custom_call.1} parent=103 // pred_fallthru
        _
      %s4523 = scalar_lea.vmem [#allocation2], 128
      %v4524 = vld [vmem:[%s4523] sm:$0xff]
      %v4525 = vld [vmem:[%s4523 + $0x8] sm:$0xff]
      %p4526 = scmp.eq.s32.totalorder %s37, 0
      %s4527 = scalar_select %p4526, 1, 0
      %v4528 = vstv %s4527
      %vm4529 = vcmp.eq.s32.totalorder %v4528, 1
      %v4530 = vsel %vm4529, 0.0, %v4524
      %v4531 = vsel %vm4529, 0.0, %v4525
      %4532 = vst.msk [vmem:[#allocation2] sm:$0xff] %vm1239, %v4530
      %4533 = vst.msk [vmem:[#allocation2 + $0x8] sm:$0xff] %vm1239, %v4531
      %s4534 = scalar_lea.vmem [#allocation2], 16
      %4535 = vst.msk [vmem:[%s4534] sm:$0xff] %vm1239, %v1941
      %4536 = vst.msk [vmem:[%s4534 + $0x8] sm:$0xff] %vm1239, %v1942
      %4537 = vst.msk [vmem:[%s4534 + $0x10] sm:$0xff] %vm1239, %v1943
      %4538 = vst.msk [vmem:[%s4534 + $0x18] sm:$0xff] %vm1239, %v1944
      %4539 = vst.msk [vmem:[%s4534 + $0x20] sm:$0xff] %vm1239, %v1945
      %4540 = vst.msk [vmem:[%s4534 + $0x28] sm:$0xff] %vm1239, %v1946
      %4541 = vst.msk [vmem:[%s4534 + $0x30] sm:$0xff] %vm1239, %v1947
      %4542 = vst.msk [vmem:[%s4534 + $0x38] sm:$0xff] %vm1239, %v1948
      %4543 = vst.msk [vmem:[%s4534 + $0x40] sm:$0xff] %vm1239, %v1949
      %4544 = vst.msk [vmem:[%s4534 + $0x48] sm:$0xff] %vm1239, %v1950
      %4545 = vst.msk [vmem:[%s4534 + $0x50] sm:$0xff] %vm1239, %v1951
      %4546 = vst.msk [vmem:[%s4534 + $0x58] sm:$0xff] %vm1239, %v1952
      %4547 = vst.msk [vmem:[%s4534 + $0x60] sm:$0xff] %vm1239, %v1953
      %4548 = vst.msk [vmem:[%s4534 + $0x68] sm:$0xff] %vm1239, %v1954
      %4549 = vst.msk [vmem:[%s4534 + $0x70] sm:$0xff] %vm1239, %v1955
      %4550 = vst.msk [vmem:[%s4534 + $0x78] sm:$0xff] %vm1239, %v1956
      %4551 = vst.msk [vmem:[#allocation3] sm:$0xff] %vm785, %v767
      %4552 = vst.msk [vmem:[#allocation3 + $0x8] sm:$0xff] %vm785, %v768
      %4553 = vst.msk [vmem:[#allocation3 + $0x10] sm:$0xff] %vm785, %v769
      %4554 = vst.msk [vmem:[#allocation3 + $0x18] sm:$0xff] %vm785, %v770
      %4555 = vst.msk [vmem:[#allocation3 + $0x20] sm:$0xff] %vm785, %v771
      %4556 = vst.msk [vmem:[#allocation3 + $0x28] sm:$0xff] %vm785, %v772
      %4557 = vst.msk [vmem:[#allocation3 + $0x30] sm:$0xff] %vm785, %v773
      %4558 = vst.msk [vmem:[#allocation3 + $0x38] sm:$0xff] %vm785, %v774
      %4559 = vst.msk [vmem:[#allocation3 + $0x40] sm:$0xff] %vm785, %v775
      %4560 = vst.msk [vmem:[#allocation3 + $0x48] sm:$0xff] %vm785, %v776
      %4561 = vst.msk [vmem:[#allocation3 + $0x50] sm:$0xff] %vm785, %v777
      %4562 = vst.msk [vmem:[#allocation3 + $0x58] sm:$0xff] %vm785, %v778
      %4563 = vst.msk [vmem:[#allocation3 + $0x60] sm:$0xff] %vm785, %v779
      %4564 = vst.msk [vmem:[#allocation3 + $0x68] sm:$0xff] %vm785, %v780
      %4565 = vst.msk [vmem:[#allocation3 + $0x70] sm:$0xff] %vm785, %v781
      %4566 = vst.msk [vmem:[#allocation3 + $0x78] sm:$0xff] %vm785, %v782
      %s4567 = ssub.s32 %s37, 1
      %p4568 = scmp.gt.s32.totalorder %s4567, 0
      %s4569 = scalar_select %p4568, %s4567, 0
      %s4570 = smul.u32 8, %s4569
      %p4571 = scmp.lt.s32.totalorder %s36, 1
      %s4572 = scalar_select %p4571, %s36, 1
      %p4573 = scmp.lt.s32.totalorder %s4570, 15
      %s4574 = scalar_select %p4573, %s4570, 15
      %s4575 = smul.addr %s4574, 2
      %s4576 = smul.addr %s4572, 32
      %s4577 = sadd.s32 %s4575, %s4576
      %s4578 = smul.addr %s4577, 8
      %s4579 = scalar_lea.vmem %s21, %s4578
      // Predicated region
      $region109: #{tpu_custom_call.1} parent=103 // pred_check
        %p4580 = pneg %p527
      $region110: #{tpu_custom_call.1} parent=103 // pred_check_branch
        %4582 = sbr.rel (%p4580) target = $region112
      $region111: #{tpu_custom_call.1} parent=103 // pred_region
        %s4583 = ssub.s32 %s37, 1
        %p4584 = scmp.gt.s32.totalorder %s4583, 0
        %s4585 = scalar_select %p4584, %s4583, 0
        %s4586 = smul.u32 8, %s4585
      $region112: #{tpu_custom_call.1} parent=103 // pred_fallthru
        _
    $region104: #{tpu_custom_call.1} parent=5 // pred_fallthru
      _
    %p4587 = scmp.le.s32.totalorder 2, %s27
    // Predicated region
    $region113: #{tpu_custom_call.1} parent=5 // pred_check
      %p4588 = pneg %p4587
    $region114: #{tpu_custom_call.1} parent=5 // pred_check_branch
      %4590 = sbr.rel (%p4588) target = $region116
    $region115: #{tpu_custom_call.1} parent=5 // pred_region
      %s4591 = ssub.s32 %s27, 2
      // Predicated region
      $region117: #{tpu_custom_call.1} parent=115 // pred_check
        %p4592 = pneg %p533
      $region118: #{tpu_custom_call.1} parent=115 // pred_check_branch
        %4594 = sbr.rel (%p4592) target = $region120
      $region119: #{tpu_custom_call.1} parent=115 // pred_region
        %s4595 = ssub.s32 %s39, 1
        %p4596 = scmp.gt.s32.totalorder %s4595, 0
        %s4597 = scalar_select %p4596, %s4595, 0
        %s4598 = smul.u32 8, %s4597
        %p4599 = scmp.lt.s32.totalorder %s38, 1
        %s4600 = scalar_select %p4599, %s38, 1
        %p4601 = scmp.lt.s32.totalorder %s4598, 15
        %s4602 = scalar_select %p4601, %s4598, 15
        %s4603 = smul.addr %s4602, 2
        %s4604 = smul.addr %s4600, 32
        %s4605 = sadd.s32 %s4603, %s4604
        %s4606 = smul.addr %s4605, 8
        %s4607 = scalar_lea.vmem %s21, %s4606
      $region120: #{tpu_custom_call.1} parent=115 // pred_fallthru
        _
    $region116: #{tpu_custom_call.1} parent=5 // pred_fallthru
      _
  $region6: #{tpu_custom_call.1} parent=0 // loop_footer
    %s31 = sadd.s32 1, %s27
  $region7: #{tpu_custom_call.1} parent=0 // loop_footer_branch
    %26 = sbr.rel target = $region3
  $region8: #{tpu_custom_call.1} parent=0 // loop_exit
    _

</llo_original>
